<compile_context>
chip_gen: v7x
topology: tpu7x:2x2x1
jax: 0.10.0
libtpu: 0.0.40
codegen_flags: <defaults>
</compile_context>

<pallas_src>
import jax
import jax.numpy as jnp
from jax.experimental import pallas as pl
from jax.experimental.pallas import tpu as pltpu

# ---- static config (consistent with the module) ------------------------------
LATDIM = 32                       # args.latdim
NUM_CLASSES = 8                   # args.num_classes
NUM_SUB = 8                       # self.num_subfunctions
HIDDEN = 128
IN_DIM = 2 * LATDIM               # 64
WIDE = NUM_SUB * HIDDEN           # 1024
NC_PAD = 128                      # lane-dense (zero-padded) output width
CHUNK = 256                       # WIDE-axis chunk inside the kernel
N_CHUNKS = WIDE // CHUNK
BATCH = 256                       # example batch


# ---- kernel ------------------------------------------------------------------
def kan_kernel(xd_ref, xg_ref, w1d_ref, w1g_ref, b1_ref, w2f_ref, bf_ref, o_ref):
    # xd_ref : (tb, LATDIM)   f32   dEmbeds tile
    # xg_ref : (tb, LATDIM)   f32   gEmbeds tile
    # w1d_ref: (LATDIM, WIDE) bf16  first-layer weights, rows for the d half
    # w1g_ref: (LATDIM, WIDE) bf16  first-layer weights, rows for the g half
    # b1_ref : (1, WIDE)      f32
    # w2f_ref: (WIDE, NC_PAD) bf16  fused (w2[s] @ wf[s]) row-blocks, zero-padded cols
    # bf_ref : (1, NC_PAD)    f32   fused bias (b2 @ wf + bf), zero-padded cols
    # o_ref  : (tb, NC_PAD)   f32
    xd = xd_ref[...].astype(jnp.bfloat16)
    xg = xg_ref[...].astype(jnp.bfloat16)
    tb = o_ref.shape[0]

    def body(c, acc):
        col = pl.multiple_of(c * CHUNK, CHUNK)
        h = jnp.dot(xd, w1d_ref[:, pl.ds(col, CHUNK)],
                    preferred_element_type=jnp.float32)
        h = h + jnp.dot(xg, w1g_ref[:, pl.ds(col, CHUNK)],
                        preferred_element_type=jnp.float32)
        h = jnp.maximum(h + b1_ref[:, pl.ds(col, CHUNK)], 0.0)   # bias+ReLU in f32 (VPU)
        return acc + jnp.dot(h.astype(jnp.bfloat16),
                             w2f_ref[pl.ds(col, CHUNK), :],
                             preferred_element_type=jnp.float32)

    acc = jax.lax.fori_loop(0, N_CHUNKS, body,
                            jnp.zeros((tb, NC_PAD), jnp.float32), unroll=True)
    o_ref[...] = (acc + bf_ref[...]).astype(o_ref.dtype)


# ---- parameter preparation (offline fusion) ----------------------------------
def prepare_fused_params(params):
    """Fold per-subfunction params into wide matrices; split W1 by input half;
    zero-pad the fused second matmul to a lane-dense 128-wide output."""
    w1, b1, w2, b2, wf, bf = params
    # w1: (S, IN, H) -> (IN, S*H); split rows into dEmbeds / gEmbeds halves.
    w1_wide = jnp.transpose(w1, (1, 0, 2)).reshape(IN_DIM, WIDE)
    w1d = w1_wide[:LATDIM]
    w1g = w1_wide[LATDIM:]
    b1_wide = b1.reshape(1, WIDE)
    # Fused second stage: W2F row-block s = w2[s] @ wf[s]; fused bias = b2@wf + bf.
    wf_blocks = wf.reshape(NUM_SUB, NUM_CLASSES, NUM_CLASSES)
    w2f = jnp.einsum("shc,scd->shd", w2, wf_blocks).reshape(WIDE, NUM_CLASSES)
    b_fused = b2.reshape(1, NUM_SUB * NUM_CLASSES) @ wf + bf           # (1, C)
    # Zero-pad output columns to 128 so the kernel does unmasked full-vreg stores.
    w2f_p = jnp.zeros((WIDE, NC_PAD), jnp.float32).at[:, :NUM_CLASSES].set(w2f)
    bf_p = jnp.zeros((1, NC_PAD), jnp.float32).at[:, :NUM_CLASSES].set(b_fused)
    return (w1d.astype(jnp.bfloat16), w1g.astype(jnp.bfloat16),
            b1_wide.astype(jnp.float32),
            w2f_p.astype(jnp.bfloat16), bf_p.astype(jnp.float32))


# ---- batch tile selection per chip --------------------------------------------
def _pick_tb(batch):
    """One tile on single-TC chips (v5e/v6e); two even tiles on dual-TC / megacore."""
    try:
        kind = jax.devices()[0].device_kind.lower()
    except Exception:  # pragma: no cover
        kind = ""
    dual = ("v7" in kind) or ("v4" in kind) or ("v5p" in kind)
    if not dual:
        return batch
    tb = ((pl.cdiv(batch, 2) + 7) // 8) * 8
    return batch if tb >= batch else tb


# ---- wrapper -----------------------------------------------------------------
def kan_classifier_forward(d_embeds, g_embeds, fused_params, *, tb=None):
    w1d, w1g, b1_wide, w2f, b_fused = fused_params
    b = d_embeds.shape[0]
    if tb is None:
        tb = _pick_tb(b)
    n_tiles = pl.cdiv(b, tb)   # ragged last block handled by Pallas masking (no pad)

    flops = 2 * b * (IN_DIM * WIDE + WIDE * NC_PAD)
    bytes_accessed = (2 * b * LATDIM * 4            # dEmbeds + gEmbeds (f32)
                      + IN_DIM * WIDE * 2           # W1 (bf16)
                      + WIDE * 4                    # b1 (f32)
                      + WIDE * NC_PAD * 2           # W2F (bf16)
                      + NC_PAD * 4                  # fused bias (f32)
                      + b * NC_PAD * 4)             # output (f32)

    out = pl.pallas_call(
        kan_kernel,
        out_shape=jax.ShapeDtypeStruct((b, NC_PAD), jnp.float32),
        grid=(n_tiles,),
        in_specs=[
            pl.BlockSpec((tb, LATDIM), lambda i: (i, 0)),            # dEmbeds: streams
            pl.BlockSpec((tb, LATDIM), lambda i: (i, 0)),            # gEmbeds: streams
            pl.BlockSpec((LATDIM, WIDE), lambda i: (0, 0)),          # weights: resident
            pl.BlockSpec((LATDIM, WIDE), lambda i: (0, 0)),
            pl.BlockSpec((1, WIDE), lambda i: (0, 0)),
            pl.BlockSpec((WIDE, NC_PAD), lambda i: (0, 0)),
            pl.BlockSpec((1, NC_PAD), lambda i: (0, 0)),
        ],
        out_specs=pl.BlockSpec((tb, NC_PAD), lambda i: (i, 0)),
        compiler_params=pltpu.CompilerParams(
            dimension_semantics=("parallel",)),                      # both TCs on v7x
        cost_estimate=pl.CostEstimate(flops=flops, transcendentals=0,
                                      bytes_accessed=bytes_accessed),
    )(d_embeds, g_embeds, w1d, w1g, b1_wide, w2f, b_fused)
    # Single slice outside the grid to drop the zero-padded lane columns.
    return out[:, :NUM_CLASSES]


# ---- init + pure-JAX reference (original module structure, f32) --------------
def init_params(key):
    ks = jax.random.split(key, 6)
    s1 = 1.0 / jnp.sqrt(IN_DIM)
    s2 = 1.0 / jnp.sqrt(HIDDEN)
    sf = 1.0 / jnp.sqrt(NUM_SUB * NUM_CLASSES)
    w1 = jax.random.uniform(ks[0], (NUM_SUB, IN_DIM, HIDDEN), jnp.float32, -s1, s1)
    b1 = jax.random.uniform(ks[1], (NUM_SUB, HIDDEN), jnp.float32, -s1, s1)
    w2 = jax.random.uniform(ks[2], (NUM_SUB, HIDDEN, NUM_CLASSES), jnp.float32, -s2, s2)
    b2 = jax.random.uniform(ks[3], (NUM_SUB, NUM_CLASSES), jnp.float32, -s2, s2)
    # final layer weight stored pre-transposed: (S*C, C)
    wf = jax.random.uniform(ks[4], (NUM_SUB * NUM_CLASSES, NUM_CLASSES), jnp.float32, -sf, sf)
    bf = jax.random.uniform(ks[5], (1, NUM_CLASSES), jnp.float32, -sf, sf)
    return w1, b1, w2, b2, wf, bf


def reference_forward(d_embeds, g_embeds, params):
    w1, b1, w2, b2, wf, bf = params
    x = jnp.concatenate([d_embeds, g_embeds], axis=1)
    outs = []
    for s in range(NUM_SUB):
        h = jnp.maximum(x @ w1[s] + b1[s], 0.0)       # Dropout = identity (inference)
        outs.append(h @ w2[s] + b2[s])
    sub = jnp.concatenate(outs, axis=1)               # (B, S*C)
    return sub @ wf + bf                              # (B, C)


if __name__ == "__main__":
    key = jax.random.PRNGKey(0)
    k_d, k_g, k_p = jax.random.split(key, 3)
    d_embeds = jax.random.normal(k_d, (BATCH, LATDIM), jnp.float32)
    g_embeds = jax.random.normal(k_g, (BATCH, LATDIM), jnp.float32)
    params = init_params(k_p)
    fused = prepare_fused_params(params)

    out = kan_classifier_forward(d_embeds, g_embeds, fused)
    out = jax.block_until_ready(out)

    ref = reference_forward(d_embeds, g_embeds, params)   # exact f32, unfused module math
    assert out.shape == (BATCH, NUM_CLASSES)
    # bf16 MXU operands + fused reduction order => loose-but-tight-enough tolerance
    assert jnp.allclose(out, ref, atol=3e-2, rtol=3e-2), float(jnp.max(jnp.abs(out - ref)))
    print("KERNEL_OK")
</pallas_src>

<mosaic_0001>
module attributes {stable_mosaic.version = 11 : i64} {
  func.func @kan_kernel(%arg0: i32, %arg1: memref<256x32xf32, #tpu.memory_space<vmem>>, %arg2: memref<256x32xf32, #tpu.memory_space<vmem>>, %arg3: memref<32x1024xbf16, #tpu.memory_space<vmem>>, %arg4: memref<32x1024xbf16, #tpu.memory_space<vmem>>, %arg5: memref<1x1024xf32, #tpu.memory_space<vmem>>, %arg6: memref<1024x128xbf16, #tpu.memory_space<vmem>>, %arg7: memref<1x128xf32, #tpu.memory_space<vmem>>, %arg8: memref<256x128xf32, #tpu.memory_space<vmem>>) attributes {dimension_semantics = [#tpu.dimension_semantics<parallel>], iteration_bounds = array<i64: 1>, scalar_prefetch = 0 : i64, scratch_operands = 0 : i64, tpu.core_type = #tpu.core_type<tc>, window_params = [{transform_indices = @transform_0, window_bounds = array<i64: 256, 32>}, {transform_indices = @transform_1, window_bounds = array<i64: 256, 32>}, {pipeline_mode = #tpu.pipeline_mode<synchronous>, transform_indices = @transform_2, window_bounds = array<i64: 32, 1024>}, {pipeline_mode = #tpu.pipeline_mode<synchronous>, transform_indices = @transform_3, window_bounds = array<i64: 32, 1024>}, {pipeline_mode = #tpu.pipeline_mode<synchronous>, transform_indices = @transform_4, window_bounds = array<i64: 1, 1024>}, {pipeline_mode = #tpu.pipeline_mode<synchronous>, transform_indices = @transform_5, window_bounds = array<i64: 1024, 128>}, {pipeline_mode = #tpu.pipeline_mode<synchronous>, transform_indices = @transform_6, window_bounds = array<i64: 1, 128>}, {transform_indices = @transform_7, window_bounds = array<i64: 256, 128>}]} {
    %c0 = arith.constant 0 : index
    %c0_0 = arith.constant 0 : index
    %0 = vector.load %arg1[%c0, %c0_0] : memref<256x32xf32, #tpu.memory_space<vmem>>, vector<256x32xf32>
    %1 = arith.truncf %0 : vector<256x32xf32> to vector<256x32xbf16>
    %c0_1 = arith.constant 0 : index
    %c0_2 = arith.constant 0 : index
    %2 = vector.load %arg2[%c0_1, %c0_2] : memref<256x32xf32, #tpu.memory_space<vmem>>, vector<256x32xf32>
    %3 = arith.truncf %2 : vector<256x32xf32> to vector<256x32xbf16>
    %cst = arith.constant 0.000000e+00 : f32
    %4 = vector.broadcast %cst : f32 to vector<256x128xf32>
    %c0_i32 = arith.constant 0 : i32
    %c256_i32 = arith.constant 256 : i32
    %5 = arith.muli %c0_i32, %c256_i32 : i32
    %6 = tpu.assume_multiple %5, 256 : i32
    %c0_3 = arith.constant 0 : index
    %7 = arith.index_cast %6 : i32 to index
    %8 = vector.load %arg3[%c0_3, %7] : memref<32x1024xbf16, #tpu.memory_space<vmem>>, vector<32x256xbf16>
    %cst_4 = arith.constant dense<0.000000e+00> : vector<256x256xf32>
    %9 = tpu.matmul %1, %8, %cst_4 {dimension_numbers = #tpu.dot_dimension_numbers<[1], [0], [0], [1], [0, 0, 1, 1], [], []>} : vector<256x32xbf16>, vector<32x256xbf16>, vector<256x256xf32> -> vector<256x256xf32>
    %c0_5 = arith.constant 0 : index
    %10 = arith.index_cast %6 : i32 to index
    %11 = vector.load %arg4[%c0_5, %10] : memref<32x1024xbf16, #tpu.memory_space<vmem>>, vector<32x256xbf16>
    %cst_6 = arith.constant dense<0.000000e+00> : vector<256x256xf32>
    %12 = tpu.matmul %3, %11, %cst_6 {dimension_numbers = #tpu.dot_dimension_numbers<[1], [0], [0], [1], [0, 0, 1, 1], [], []>} : vector<256x32xbf16>, vector<32x256xbf16>, vector<256x256xf32> -> vector<256x256xf32>
    %13 = arith.addf %9, %12 : vector<256x256xf32>
    %c0_7 = arith.constant 0 : index
    %14 = arith.index_cast %6 : i32 to index
    %15 = vector.load %arg5[%c0_7, %14] : memref<1x1024xf32, #tpu.memory_space<vmem>>, vector<1x256xf32>
    %16 = vector.broadcast %15 : vector<1x256xf32> to vector<256x256xf32>
    %17 = arith.addf %13, %16 : vector<256x256xf32>
    %cst_8 = arith.constant 0.000000e+00 : f32
    %18 = vector.broadcast %cst_8 : f32 to vector<256x256xf32>
    %19 = arith.maximumf %17, %18 : vector<256x256xf32>
    %20 = arith.truncf %19 : vector<256x256xf32> to vector<256x256xbf16>
    %21 = arith.index_cast %6 : i32 to index
    %c0_9 = arith.constant 0 : index
    %22 = vector.load %arg6[%21, %c0_9] : memref<1024x128xbf16, #tpu.memory_space<vmem>>, vector<256x128xbf16>
    %cst_10 = arith.constant dense<0.000000e+00> : vector<256x128xf32>
    %23 = tpu.matmul %20, %22, %cst_10 {dimension_numbers = #tpu.dot_dimension_numbers<[1], [0], [0], [1], [0, 0, 1, 1], [], []>} : vector<256x256xbf16>, vector<256x128xbf16>, vector<256x128xf32> -> vector<256x128xf32>
    %24 = arith.addf %4, %23 : vector<256x128xf32>
    %c1_i32 = arith.constant 1 : i32
    %c256_i32_11 = arith.constant 256 : i32
    %25 = arith.muli %c1_i32, %c256_i32_11 : i32
    %26 = tpu.assume_multiple %25, 256 : i32
    %c0_12 = arith.constant 0 : index
    %27 = arith.index_cast %26 : i32 to index
    %28 = vector.load %arg3[%c0_12, %27] : memref<32x1024xbf16, #tpu.memory_space<vmem>>, vector<32x256xbf16>
    %cst_13 = arith.constant dense<0.000000e+00> : vector<256x256xf32>
    %29 = tpu.matmul %1, %28, %cst_13 {dimension_numbers = #tpu.dot_dimension_numbers<[1], [0], [0], [1], [0, 0, 1, 1], [], []>} : vector<256x32xbf16>, vector<32x256xbf16>, vector<256x256xf32> -> vector<256x256xf32>
    %c0_14 = arith.constant 0 : index
    %30 = arith.index_cast %26 : i32 to index
    %31 = vector.load %arg4[%c0_14, %30] : memref<32x1024xbf16, #tpu.memory_space<vmem>>, vector<32x256xbf16>
    %cst_15 = arith.constant dense<0.000000e+00> : vector<256x256xf32>
    %32 = tpu.matmul %3, %31, %cst_15 {dimension_numbers = #tpu.dot_dimension_numbers<[1], [0], [0], [1], [0, 0, 1, 1], [], []>} : vector<256x32xbf16>, vector<32x256xbf16>, vector<256x256xf32> -> vector<256x256xf32>
    %33 = arith.addf %29, %32 : vector<256x256xf32>
    %c0_16 = arith.constant 0 : index
    %34 = arith.index_cast %26 : i32 to index
    %35 = vector.load %arg5[%c0_16, %34] : memref<1x1024xf32, #tpu.memory_space<vmem>>, vector<1x256xf32>
    %36 = vector.broadcast %35 : vector<1x256xf32> to vector<256x256xf32>
    %37 = arith.addf %33, %36 : vector<256x256xf32>
    %cst_17 = arith.constant 0.000000e+00 : f32
    %38 = vector.broadcast %cst_17 : f32 to vector<256x256xf32>
    %39 = arith.maximumf %37, %38 : vector<256x256xf32>
    %40 = arith.truncf %39 : vector<256x256xf32> to vector<256x256xbf16>
    %41 = arith.index_cast %26 : i32 to index
    %c0_18 = arith.constant 0 : index
    %42 = vector.load %arg6[%41, %c0_18] : memref<1024x128xbf16, #tpu.memory_space<vmem>>, vector<256x128xbf16>
    %cst_19 = arith.constant dense<0.000000e+00> : vector<256x128xf32>
    %43 = tpu.matmul %40, %42, %cst_19 {dimension_numbers = #tpu.dot_dimension_numbers<[1], [0], [0], [1], [0, 0, 1, 1], [], []>} : vector<256x256xbf16>, vector<256x128xbf16>, vector<256x128xf32> -> vector<256x128xf32>
    %44 = arith.addf %24, %43 : vector<256x128xf32>
    %c2_i32 = arith.constant 2 : i32
    %c256_i32_20 = arith.constant 256 : i32
    %45 = arith.muli %c2_i32, %c256_i32_20 : i32
    %46 = tpu.assume_multiple %45, 256 : i32
    %c0_21 = arith.constant 0 : index
    %47 = arith.index_cast %46 : i32 to index
    %48 = vector.load %arg3[%c0_21, %47] : memref<32x1024xbf16, #tpu.memory_space<vmem>>, vector<32x256xbf16>
    %cst_22 = arith.constant dense<0.000000e+00> : vector<256x256xf32>
    %49 = tpu.matmul %1, %48, %cst_22 {dimension_numbers = #tpu.dot_dimension_numbers<[1], [0], [0], [1], [0, 0, 1, 1], [], []>} : vector<256x32xbf16>, vector<32x256xbf16>, vector<256x256xf32> -> vector<256x256xf32>
    %c0_23 = arith.constant 0 : index
    %50 = arith.index_cast %46 : i32 to index
    %51 = vector.load %arg4[%c0_23, %50] : memref<32x1024xbf16, #tpu.memory_space<vmem>>, vector<32x256xbf16>
    %cst_24 = arith.constant dense<0.000000e+00> : vector<256x256xf32>
    %52 = tpu.matmul %3, %51, %cst_24 {dimension_numbers = #tpu.dot_dimension_numbers<[1], [0], [0], [1], [0, 0, 1, 1], [], []>} : vector<256x32xbf16>, vector<32x256xbf16>, vector<256x256xf32> -> vector<256x256xf32>
    %53 = arith.addf %49, %52 : vector<256x256xf32>
    %c0_25 = arith.constant 0 : index
    %54 = arith.index_cast %46 : i32 to index
    %55 = vector.load %arg5[%c0_25, %54] : memref<1x1024xf32, #tpu.memory_space<vmem>>, vector<1x256xf32>
    %56 = vector.broadcast %55 : vector<1x256xf32> to vector<256x256xf32>
    %57 = arith.addf %53, %56 : vector<256x256xf32>
    %cst_26 = arith.constant 0.000000e+00 : f32
    %58 = vector.broadcast %cst_26 : f32 to vector<256x256xf32>
    %59 = arith.maximumf %57, %58 : vector<256x256xf32>
    %60 = arith.truncf %59 : vector<256x256xf32> to vector<256x256xbf16>
    %61 = arith.index_cast %46 : i32 to index
    %c0_27 = arith.constant 0 : index
    %62 = vector.load %arg6[%61, %c0_27] : memref<1024x128xbf16, #tpu.memory_space<vmem>>, vector<256x128xbf16>
    %cst_28 = arith.constant dense<0.000000e+00> : vector<256x128xf32>
    %63 = tpu.matmul %60, %62, %cst_28 {dimension_numbers = #tpu.dot_dimension_numbers<[1], [0], [0], [1], [0, 0, 1, 1], [], []>} : vector<256x256xbf16>, vector<256x128xbf16>, vector<256x128xf32> -> vector<256x128xf32>
    %64 = arith.addf %44, %63 : vector<256x128xf32>
    %c3_i32 = arith.constant 3 : i32
    %c256_i32_29 = arith.constant 256 : i32
    %65 = arith.muli %c3_i32, %c256_i32_29 : i32
    %66 = tpu.assume_multiple %65, 256 : i32
    %c0_30 = arith.constant 0 : index
    %67 = arith.index_cast %66 : i32 to index
    %68 = vector.load %arg3[%c0_30, %67] : memref<32x1024xbf16, #tpu.memory_space<vmem>>, vector<32x256xbf16>
    %cst_31 = arith.constant dense<0.000000e+00> : vector<256x256xf32>
    %69 = tpu.matmul %1, %68, %cst_31 {dimension_numbers = #tpu.dot_dimension_numbers<[1], [0], [0], [1], [0, 0, 1, 1], [], []>} : vector<256x32xbf16>, vector<32x256xbf16>, vector<256x256xf32> -> vector<256x256xf32>
    %c0_32 = arith.constant 0 : index
    %70 = arith.index_cast %66 : i32 to index
    %71 = vector.load %arg4[%c0_32, %70] : memref<32x1024xbf16, #tpu.memory_space<vmem>>, vector<32x256xbf16>
    %cst_33 = arith.constant dense<0.000000e+00> : vector<256x256xf32>
    %72 = tpu.matmul %3, %71, %cst_33 {dimension_numbers = #tpu.dot_dimension_numbers<[1], [0], [0], [1], [0, 0, 1, 1], [], []>} : vector<256x32xbf16>, vector<32x256xbf16>, vector<256x256xf32> -> vector<256x256xf32>
    %73 = arith.addf %69, %72 : vector<256x256xf32>
    %c0_34 = arith.constant 0 : index
    %74 = arith.index_cast %66 : i32 to index
    %75 = vector.load %arg5[%c0_34, %74] : memref<1x1024xf32, #tpu.memory_space<vmem>>, vector<1x256xf32>
    %76 = vector.broadcast %75 : vector<1x256xf32> to vector<256x256xf32>
    %77 = arith.addf %73, %76 : vector<256x256xf32>
    %cst_35 = arith.constant 0.000000e+00 : f32
    %78 = vector.broadcast %cst_35 : f32 to vector<256x256xf32>
    %79 = arith.maximumf %77, %78 : vector<256x256xf32>
    %80 = arith.truncf %79 : vector<256x256xf32> to vector<256x256xbf16>
    %81 = arith.index_cast %66 : i32 to index
    %c0_36 = arith.constant 0 : index
    %82 = vector.load %arg6[%81, %c0_36] : memref<1024x128xbf16, #tpu.memory_space<vmem>>, vector<256x128xbf16>
    %cst_37 = arith.constant dense<0.000000e+00> : vector<256x128xf32>
    %83 = tpu.matmul %80, %82, %cst_37 {dimension_numbers = #tpu.dot_dimension_numbers<[1], [0], [0], [1], [0, 0, 1, 1], [], []>} : vector<256x256xbf16>, vector<256x128xbf16>, vector<256x128xf32> -> vector<256x128xf32>
    %84 = arith.addf %64, %83 : vector<256x128xf32>
    %c4_i32 = arith.constant 4 : i32
    %c0_38 = arith.constant 0 : index
    %c0_39 = arith.constant 0 : index
    %85 = vector.load %arg7[%c0_38, %c0_39] : memref<1x128xf32, #tpu.memory_space<vmem>>, vector<1x128xf32>
    %86 = vector.broadcast %85 : vector<1x128xf32> to vector<256x128xf32>
    %87 = arith.addf %84, %86 : vector<256x128xf32>
    %c0_40 = arith.constant 0 : index
    %c0_41 = arith.constant 0 : index
    %88 = vector.load %arg8[%c0_40, %c0_41] : memref<256x128xf32, #tpu.memory_space<vmem>>, vector<256x128xf32>
    tpu.vector_store %arg8[%c0_40, %c0_41], %87 {strides = array<i32>} : memref<256x128xf32, #tpu.memory_space<vmem>>, vector<256x128xf32>,
    return
  }
  func.func @transform_0(%arg0: i32) -> (i32, i32) {
    %c0_i32 = arith.constant 0 : i32
    %c0_i32_0 = arith.constant 0 : i32
    return %arg0, %c0_i32 : i32, i32
  }
  func.func @transform_1(%arg0: i32) -> (i32, i32) {
    %c0_i32 = arith.constant 0 : i32
    %c0_i32_0 = arith.constant 0 : i32
    return %arg0, %c0_i32 : i32, i32
  }
  func.func @transform_2(%arg0: i32) -> (i32, i32) {
    %c0_i32 = arith.constant 0 : i32
    %c0_i32_0 = arith.constant 0 : i32
    %c0_i32_1 = arith.constant 0 : i32
    return %c0_i32, %c0_i32_0 : i32, i32
  }
  func.func @transform_3(%arg0: i32) -> (i32, i32) {
    %c0_i32 = arith.constant 0 : i32
    %c0_i32_0 = arith.constant 0 : i32
    %c0_i32_1 = arith.constant 0 : i32
    return %c0_i32, %c0_i32_0 : i32, i32
  }
  func.func @transform_4(%arg0: i32) -> (i32, i32) {
    %c0_i32 = arith.constant 0 : i32
    %c0_i32_0 = arith.constant 0 : i32
    %c0_i32_1 = arith.constant 0 : i32
    return %c0_i32, %c0_i32_0 : i32, i32
  }
  func.func @transform_5(%arg0: i32) -> (i32, i32) {
    %c0_i32 = arith.constant 0 : i32
    %c0_i32_0 = arith.constant 0 : i32
    %c0_i32_1 = arith.constant 0 : i32
    return %c0_i32, %c0_i32_0 : i32, i32
  }
  func.func @transform_6(%arg0: i32) -> (i32, i32) {
    %c0_i32 = arith.constant 0 : i32
    %c0_i32_0 = arith.constant 0 : i32
    %c0_i32_1 = arith.constant 0 : i32
    return %c0_i32, %c0_i32_0 : i32, i32
  }
  func.func @transform_7(%arg0: i32) -> (i32, i32) {
    %c0_i32 = arith.constant 0 : i32
    %c0_i32_0 = arith.constant 0 : i32
    return %arg0, %c0_i32 : i32, i32
  }
}

</mosaic_0001>

<llo_original>
// kernel: tpu_custom_call.1
$region0: #{tpu_custom_call.1}
  #allocation0 [shape = 'u32[]', space=smem, size = 0x4, offset = 0x4, fixed_abs, tag = 'smem constant byte address 0x4 - core index']
  #allocation1 [shape = 'u32[144,128]{1,0:T(1,128)}', space=vmem, size = 0x12000, scoped, tag = 'internal scratch']
  %s0 = inlined_call_operand.vmem [shape: f32[256,32], index: 0, kind: input, shape index: {}]
  %s1 = inlined_call_operand.vmem [shape: f32[256,32], index: 1, kind: input, shape index: {}]
  %s2 = inlined_call_operand.vmem [shape: bf16[32,1024], index: 2, kind: input, shape index: {}]
  %s3 = inlined_call_operand.hbm [shape: bf16[32,1024], index: 3, kind: input, shape index: {}]
  %s4 = inlined_call_operand.vmem [shape: f32[1,1024], index: 4, kind: input, shape index: {}]
  %s5 = inlined_call_operand.vmem [shape: bf16[1024,128], index: 5, kind: input, shape index: {}]
  %s6 = inlined_call_operand.vmem [shape: f32[1,128], index: 6, kind: input, shape index: {}]
  %s7 = inlined_call_operand.hbm [shape: f32[256,128], index: 7, kind: output, shape index: {}]
  %s8 = sld [smem:[#allocation0]]
  $region42: #{tpu_custom_call.1} parent=0
    _
  %s10 = ssub.s32 1, %s8
  %s11 = scalar_select 0, %s10, %s8
  $region1: #{tpu_custom_call.1} parent=0
    #allocation2 [shape = 'u8[65536]{0}', space=vmem, size = 0x10000, scoped, tag = 'input window, operand 3, single buffered']
    #allocation3 [shape = 's32[1]{0}', space=sflag, size = 0x4, scoped, tag = 'scoped memory for tpu_custom_call.1']
    #allocation4 [shape = 's32[1]{0}', space=sflag, size = 0x4, scoped, tag = 'scoped memory for tpu_custom_call.1']
    #allocation5 [shape = 'u8[131072]{0}', space=vmem, size = 0x20000, scoped, tag = 'output window, operand 0, single buffered']
    %12 = vsyncpa [#allocation3], 0
    %13 = vsyncpa [#allocation4], 0
    // Predicated region
    $region2: #{tpu_custom_call.1} parent=1 // pred_check
      _
    $region3: #{tpu_custom_call.1} parent=1 // pred_check_branch
      %15 = sbr.rel (0) target = $region5
    $region4: #{tpu_custom_call.1} parent=1 // pred_region
      _
    $region5: #{tpu_custom_call.1} parent=1 // pred_fallthru
      _
    // Predicated region
    $region6: #{tpu_custom_call.1} parent=1 // pred_check
      _
    $region7: #{tpu_custom_call.1} parent=1 // pred_check_branch
      %17 = sbr.rel (0) target = $region9
    $region8: #{tpu_custom_call.1} parent=1 // pred_region
      _
    $region9: #{tpu_custom_call.1} parent=1 // pred_fallthru
      _
    // Predicated region
    $region10: #{tpu_custom_call.1} parent=1 // pred_check
      _
    $region11: #{tpu_custom_call.1} parent=1 // pred_check_branch
      %19 = sbr.rel (0) target = $region13
    $region12: #{tpu_custom_call.1} parent=1 // pred_region
      _
    $region13: #{tpu_custom_call.1} parent=1 // pred_fallthru
      _
    // Predicated region
    $region14: #{tpu_custom_call.1} parent=1 // pred_check
      _
    $region15: #{tpu_custom_call.1} parent=1 // pred_check_branch
      %21 = sbr.rel (0) target = $region17
    $region16: #{tpu_custom_call.1} parent=1 // pred_region
      %s23 = ssub.s32 2048, 2048
      %24 = vsyncadd [#allocation3], %s23
      %s25 = sshll.u32 [#allocation2], 4
      %s26 = int_to_ptr.vmem [resolvable:$true] %s25
      %31 = dma.hbm_to_vmem [thread:$0]  %s3, 2048, %s26, [#allocation3], 512, 512, 32
    $region17: #{tpu_custom_call.1} parent=1 // pred_fallthru
      _
    // Predicated region
    $region18: #{tpu_custom_call.1} parent=1 // pred_check
      _
    $region19: #{tpu_custom_call.1} parent=1 // pred_check_branch
      %33 = sbr.rel (0) target = $region21
    $region20: #{tpu_custom_call.1} parent=1 // pred_region
      _
    $region21: #{tpu_custom_call.1} parent=1 // pred_fallthru
      _
    // Predicated region
    $region22: #{tpu_custom_call.1} parent=1 // pred_check
      _
    $region23: #{tpu_custom_call.1} parent=1 // pred_check_branch
      %35 = sbr.rel (0) target = $region25
    $region24: #{tpu_custom_call.1} parent=1 // pred_region
      _
    $region25: #{tpu_custom_call.1} parent=1 // pred_fallthru
      _
    // Predicated region
    $region26: #{tpu_custom_call.1} parent=1 // pred_check
      _
    $region27: #{tpu_custom_call.1} parent=1 // pred_check_branch
      %37 = sbr.rel (0) target = $region29
    $region28: #{tpu_custom_call.1} parent=1 // pred_region
      _
    $region29: #{tpu_custom_call.1} parent=1 // pred_fallthru
      _
    // Predicated region
    $region30: #{tpu_custom_call.1} parent=1 // pred_check
      _
    $region31: #{tpu_custom_call.1} parent=1 // pred_check_branch
      %39 = sbr.rel (0) target = $region33
    $region32: #{tpu_custom_call.1} parent=1 // pred_region
      %40 = dma.done [#allocation3], 2048
    $region33: #{tpu_custom_call.1} parent=1 // pred_fallthru
      _
    %v42 = vld [vmem:[%s0] sm:$0xff]
    %v43 = vld [vmem:[%s0 + $0x8] sm:$0xff]
    %v44 = vld [vmem:[%s0 + $0x10] sm:$0xff]
    %v45 = vld [vmem:[%s0 + $0x18] sm:$0xff]
    %v46 = vld [vmem:[%s0 + $0x20] sm:$0xff]
    %v47 = vld [vmem:[%s0 + $0x28] sm:$0xff]
    %v48 = vld [vmem:[%s0 + $0x30] sm:$0xff]
    %v49 = vld [vmem:[%s0 + $0x38] sm:$0xff]
    %v50 = vld [vmem:[%s0 + $0x40] sm:$0xff]
    %v51 = vld [vmem:[%s0 + $0x48] sm:$0xff]
    %v52 = vld [vmem:[%s0 + $0x50] sm:$0xff]
    %v53 = vld [vmem:[%s0 + $0x58] sm:$0xff]
    %v54 = vld [vmem:[%s0 + $0x60] sm:$0xff]
    %v55 = vld [vmem:[%s0 + $0x68] sm:$0xff]
    %v56 = vld [vmem:[%s0 + $0x70] sm:$0xff]
    %v57 = vld [vmem:[%s0 + $0x78] sm:$0xff]
    %v58 = vld [vmem:[%s0 + $0x80] sm:$0xff]
    %v59 = vld [vmem:[%s0 + $0x88] sm:$0xff]
    %v60 = vld [vmem:[%s0 + $0x90] sm:$0xff]
    %v61 = vld [vmem:[%s0 + $0x98] sm:$0xff]
    %v62 = vld [vmem:[%s0 + $0xa0] sm:$0xff]
    %v63 = vld [vmem:[%s0 + $0xa8] sm:$0xff]
    %v64 = vld [vmem:[%s0 + $0xb0] sm:$0xff]
    %v65 = vld [vmem:[%s0 + $0xb8] sm:$0xff]
    %v66 = vld [vmem:[%s0 + $0xc0] sm:$0xff]
    %v67 = vld [vmem:[%s0 + $0xc8] sm:$0xff]
    %v68 = vld [vmem:[%s0 + $0xd0] sm:$0xff]
    %v69 = vld [vmem:[%s0 + $0xd8] sm:$0xff]
    %v70 = vld [vmem:[%s0 + $0xe0] sm:$0xff]
    %v71 = vld [vmem:[%s0 + $0xe8] sm:$0xff]
    %v72 = vld [vmem:[%s0 + $0xf0] sm:$0xff]
    %v73 = vld [vmem:[%s0 + $0xf8] sm:$0xff]
    %v74 = vpack.c.bf16 %v43, %v42
    %v75 = vpack.c.bf16 %v45, %v44
    %v76 = vpack.c.bf16 %v47, %v46
    %v77 = vpack.c.bf16 %v49, %v48
    %v78 = vpack.c.bf16 %v51, %v50
    %v79 = vpack.c.bf16 %v53, %v52
    %v80 = vpack.c.bf16 %v55, %v54
    %v81 = vpack.c.bf16 %v57, %v56
    %v82 = vpack.c.bf16 %v59, %v58
    %v83 = vpack.c.bf16 %v61, %v60
    %v84 = vpack.c.bf16 %v63, %v62
    %v85 = vpack.c.bf16 %v65, %v64
    %v86 = vpack.c.bf16 %v67, %v66
    %v87 = vpack.c.bf16 %v69, %v68
    %v88 = vpack.c.bf16 %v71, %v70
    %v89 = vpack.c.bf16 %v73, %v72
    %v90 = vld [vmem:[%s1] sm:$0xff]
    %v91 = vld [vmem:[%s1 + $0x8] sm:$0xff]
    %v92 = vld [vmem:[%s1 + $0x10] sm:$0xff]
    %v93 = vld [vmem:[%s1 + $0x18] sm:$0xff]
    %v94 = vld [vmem:[%s1 + $0x20] sm:$0xff]
    %v95 = vld [vmem:[%s1 + $0x28] sm:$0xff]
    %v96 = vld [vmem:[%s1 + $0x30] sm:$0xff]
    %v97 = vld [vmem:[%s1 + $0x38] sm:$0xff]
    %v98 = vld [vmem:[%s1 + $0x40] sm:$0xff]
    %v99 = vld [vmem:[%s1 + $0x48] sm:$0xff]
    %v100 = vld [vmem:[%s1 + $0x50] sm:$0xff]
    %v101 = vld [vmem:[%s1 + $0x58] sm:$0xff]
    %v102 = vld [vmem:[%s1 + $0x60] sm:$0xff]
    %v103 = vld [vmem:[%s1 + $0x68] sm:$0xff]
    %v104 = vld [vmem:[%s1 + $0x70] sm:$0xff]
    %v105 = vld [vmem:[%s1 + $0x78] sm:$0xff]
    %v106 = vld [vmem:[%s1 + $0x80] sm:$0xff]
    %v107 = vld [vmem:[%s1 + $0x88] sm:$0xff]
    %v108 = vld [vmem:[%s1 + $0x90] sm:$0xff]
    %v109 = vld [vmem:[%s1 + $0x98] sm:$0xff]
    %v110 = vld [vmem:[%s1 + $0xa0] sm:$0xff]
    %v111 = vld [vmem:[%s1 + $0xa8] sm:$0xff]
    %v112 = vld [vmem:[%s1 + $0xb0] sm:$0xff]
    %v113 = vld [vmem:[%s1 + $0xb8] sm:$0xff]
    %v114 = vld [vmem:[%s1 + $0xc0] sm:$0xff]
    %v115 = vld [vmem:[%s1 + $0xc8] sm:$0xff]
    %v116 = vld [vmem:[%s1 + $0xd0] sm:$0xff]
    %v117 = vld [vmem:[%s1 + $0xd8] sm:$0xff]
    %v118 = vld [vmem:[%s1 + $0xe0] sm:$0xff]
    %v119 = vld [vmem:[%s1 + $0xe8] sm:$0xff]
    %v120 = vld [vmem:[%s1 + $0xf0] sm:$0xff]
    %v121 = vld [vmem:[%s1 + $0xf8] sm:$0xff]
    %v122 = vpack.c.bf16 %v91, %v90
    %v123 = vpack.c.bf16 %v93, %v92
    %v124 = vpack.c.bf16 %v95, %v94
    %v125 = vpack.c.bf16 %v97, %v96
    %v126 = vpack.c.bf16 %v99, %v98
    %v127 = vpack.c.bf16 %v101, %v100
    %v128 = vpack.c.bf16 %v103, %v102
    %v129 = vpack.c.bf16 %v105, %v104
    %v130 = vpack.c.bf16 %v107, %v106
    %v131 = vpack.c.bf16 %v109, %v108
    %v132 = vpack.c.bf16 %v111, %v110
    %v133 = vpack.c.bf16 %v113, %v112
    %v134 = vpack.c.bf16 %v115, %v114
    %v135 = vpack.c.bf16 %v117, %v116
    %v136 = vpack.c.bf16 %v119, %v118
    %v137 = vpack.c.bf16 %v121, %v120
    %v138 = vld [vmem:[%s2] sm:$0xff]
    %v139 = vld [vmem:[%s2 + $0x20] sm:$0xff]
    %v140 = vld [vmem:[%s2 + $0x40] sm:$0xff]
    %v141 = vld [vmem:[%s2 + $0x60] sm:$0xff]
    %v142 = vld [vmem:[#allocation2] sm:$0xff]
    %v143 = vld [vmem:[#allocation2 + $0x20] sm:$0xff]
    %v144 = vld [vmem:[#allocation2 + $0x40] sm:$0xff]
    %v145 = vld [vmem:[#allocation2 + $0x60] sm:$0xff]
    %v150 = vunpack.c.l.b16 %v142
    %v151 = vunpack.c.h.b16 %v142
    %v152 = vunpack.c.l.b16 %v143
    %v153 = vunpack.c.h.b16 %v143
    %v154 = vunpack.c.l.b16 %v144
    %v155 = vunpack.c.h.b16 %v144
    %v156 = vunpack.c.l.b16 %v145
    %v157 = vunpack.c.h.b16 %v145
    %v158 = vpack.c.b16 %v152, %v150
    %v159 = vpack.c.b16 %v153, %v151
    %v160 = vpack.c.b16 %v156, %v154
    %v161 = vpack.c.b16 %v157, %v155
    %vm166 = vcmask 261120
    %v168 = vsel %vm166, %v122, 0
    %v171 = vsel %vm166, %v123, 0
    %v174 = vsel %vm166, %v124, 0
    %v177 = vsel %vm166, %v125, 0
    %v180 = vsel %vm166, %v126, 0
    %v183 = vsel %vm166, %v127, 0
    %v186 = vsel %vm166, %v128, 0
    %v189 = vsel %vm166, %v129, 0
    %v192 = vsel %vm166, %v130, 0
    %v195 = vsel %vm166, %v131, 0
    %v198 = vsel %vm166, %v132, 0
    %v201 = vsel %vm166, %v133, 0
    %v204 = vsel %vm166, %v134, 0
    %v207 = vsel %vm166, %v135, 0
    %v210 = vsel %vm166, %v136, 0
    %v213 = vsel %vm166, %v137, 0
    %215 = vmatprep.subr.bf16.mxu0 %v159
    %216 = vmatpush1.bf16.msra.mxu0 %v158
    %217 = vmatprep.subr.bf16.mxu0 %v161
    %218 = vmatpush1.bf16.msra.mxu0 %v160
    %219 = vmatprep.subr.bf16.mxu0 0
    %220 = vmatpush1.bf16.msra.mxu0 0
    %221 = vmatprep.subr.bf16.mxu0 0
    %222 = vmatpush1.bf16.msra.mxu0 0
    %223 = vmatprep.subr.bf16.mxu0 0
    %224 = vmatpush1.bf16.msra.mxu0 0
    %225 = vmatprep.subr.bf16.mxu0 0
    %226 = vmatpush1.bf16.msra.mxu0 0
    %227 = vmatprep.subr.bf16.mxu0 0
    %228 = vmatpush1.bf16.msra.mxu0 0
    %229 = vmatprep.subr.bf16.mxu0 0
    %230 = vmatpush1.bf16.msra.mxu0 0
    %231 = vmatprep.subr.bf16.mxu0 0
    %232 = vmatpush1.bf16.msra.mxu0 0
    %233 = vmatprep.subr.bf16.mxu0 0
    %234 = vmatpush1.bf16.msra.mxu0 0
    %235 = vmatprep.subr.bf16.mxu0 0
    %236 = vmatpush1.bf16.msra.mxu0 0
    %237 = vmatprep.subr.bf16.mxu0 0
    %238 = vmatpush1.bf16.msra.mxu0 0
    %239 = vmatprep.subr.bf16.mxu0 0
    %240 = vmatpush1.bf16.msra.mxu0 0
    %241 = vmatprep.subr.bf16.mxu0 0
    %242 = vmatpush1.bf16.msra.mxu0 0
    %243 = vmatprep.subr.bf16.mxu0 0
    %244 = vmatpush1.bf16.msra.mxu0 0
    %245 = vmatprep.subr.bf16.mxu0 0
    %246 = vmatpush1.bf16.msra.mxu0 0
    %247 = vmatprep.mubr.bf16.mxu0 0
    %248 = vmatmul.mubr.bf16.gmra.mrb[0].mxu0 %v168
    %v249 = vpop.f32.mrb[0].mxu0
    %v250 = vadd.f32 0.0, %v249
    %v251 = vpop.f32.mrb[0].mxu0
    %v252 = vadd.f32 0.0, %v251
    %v253 = vpop.f32.mrb[0].mxu0
    %v254 = vadd.f32 0.0, %v253
    %v255 = vpop.f32.mrb[0].mxu0
    %v256 = vadd.f32 0.0, %v255
    %257 = vmatprep.mubr.bf16.mxu0 0
    %258 = vmatmul.mubr.bf16.gmra.mrb[0].mxu0 %v171
    %v259 = vpop.f32.mrb[0].mxu0
    %v260 = vadd.f32 0.0, %v259
    %v261 = vpop.f32.mrb[0].mxu0
    %v262 = vadd.f32 0.0, %v261
    %v263 = vpop.f32.mrb[0].mxu0
    %v264 = vadd.f32 0.0, %v263
    %v265 = vpop.f32.mrb[0].mxu0
    %v266 = vadd.f32 0.0, %v265
    %267 = vmatprep.mubr.bf16.mxu0 0
    %268 = vmatmul.mubr.bf16.gmra.mrb[0].mxu0 %v174
    %v269 = vpop.f32.mrb[0].mxu0
    %v270 = vadd.f32 0.0, %v269
    %v271 = vpop.f32.mrb[0].mxu0
    %v272 = vadd.f32 0.0, %v271
    %v273 = vpop.f32.mrb[0].mxu0
    %v274 = vadd.f32 0.0, %v273
    %v275 = vpop.f32.mrb[0].mxu0
    %v276 = vadd.f32 0.0, %v275
    %277 = vmatprep.mubr.bf16.mxu0 0
    %278 = vmatmul.mubr.bf16.gmra.mrb[0].mxu0 %v177
    %v279 = vpop.f32.mrb[0].mxu0
    %v280 = vadd.f32 0.0, %v279
    %v281 = vpop.f32.mrb[0].mxu0
    %v282 = vadd.f32 0.0, %v281
    %v283 = vpop.f32.mrb[0].mxu0
    %v284 = vadd.f32 0.0, %v283
    %v285 = vpop.f32.mrb[0].mxu0
    %v286 = vadd.f32 0.0, %v285
    %287 = vmatprep.mubr.bf16.mxu0 0
    %288 = vmatmul.mubr.bf16.gmra.mrb[0].mxu0 %v180
    %v289 = vpop.f32.mrb[0].mxu0
    %v290 = vadd.f32 0.0, %v289
    %v291 = vpop.f32.mrb[0].mxu0
    %v292 = vadd.f32 0.0, %v291
    %v293 = vpop.f32.mrb[0].mxu0
    %v294 = vadd.f32 0.0, %v293
    %v295 = vpop.f32.mrb[0].mxu0
    %v296 = vadd.f32 0.0, %v295
    %297 = vmatprep.mubr.bf16.mxu0 0
    %298 = vmatmul.mubr.bf16.gmra.mrb[0].mxu0 %v183
    %v299 = vpop.f32.mrb[0].mxu0
    %v300 = vadd.f32 0.0, %v299
    %v301 = vpop.f32.mrb[0].mxu0
    %v302 = vadd.f32 0.0, %v301
    %v303 = vpop.f32.mrb[0].mxu0
    %v304 = vadd.f32 0.0, %v303
    %v305 = vpop.f32.mrb[0].mxu0
    %v306 = vadd.f32 0.0, %v305
    %307 = vmatprep.mubr.bf16.mxu0 0
    %308 = vmatmul.mubr.bf16.gmra.mrb[0].mxu0 %v186
    %v309 = vpop.f32.mrb[0].mxu0
    %v310 = vadd.f32 0.0, %v309
    %v311 = vpop.f32.mrb[0].mxu0
    %v312 = vadd.f32 0.0, %v311
    %v313 = vpop.f32.mrb[0].mxu0
    %v314 = vadd.f32 0.0, %v313
    %v315 = vpop.f32.mrb[0].mxu0
    %v316 = vadd.f32 0.0, %v315
    %317 = vmatprep.mubr.bf16.mxu0 0
    %318 = vmatmul.mubr.bf16.gmra.mrb[0].mxu0 %v189
    %v319 = vpop.f32.mrb[0].mxu0
    %v320 = vadd.f32 0.0, %v319
    %v321 = vpop.f32.mrb[0].mxu0
    %v322 = vadd.f32 0.0, %v321
    %v323 = vpop.f32.mrb[0].mxu0
    %v324 = vadd.f32 0.0, %v323
    %v325 = vpop.f32.mrb[0].mxu0
    %v326 = vadd.f32 0.0, %v325
    %327 = vmatprep.mubr.bf16.mxu0 0
    %328 = vmatmul.mubr.bf16.gmra.mrb[0].mxu0 %v192
    %v329 = vpop.f32.mrb[0].mxu0
    %v330 = vadd.f32 0.0, %v329
    %v331 = vpop.f32.mrb[0].mxu0
    %v332 = vadd.f32 0.0, %v331
    %v333 = vpop.f32.mrb[0].mxu0
    %v334 = vadd.f32 0.0, %v333
    %v335 = vpop.f32.mrb[0].mxu0
    %v336 = vadd.f32 0.0, %v335
    %337 = vmatprep.mubr.bf16.mxu0 0
    %338 = vmatmul.mubr.bf16.gmra.mrb[0].mxu0 %v195
    %v339 = vpop.f32.mrb[0].mxu0
    %v340 = vadd.f32 0.0, %v339
    %v341 = vpop.f32.mrb[0].mxu0
    %v342 = vadd.f32 0.0, %v341
    %v343 = vpop.f32.mrb[0].mxu0
    %v344 = vadd.f32 0.0, %v343
    %v345 = vpop.f32.mrb[0].mxu0
    %v346 = vadd.f32 0.0, %v345
    %347 = vmatprep.mubr.bf16.mxu0 0
    %348 = vmatmul.mubr.bf16.gmra.mrb[0].mxu0 %v198
    %v349 = vpop.f32.mrb[0].mxu0
    %v350 = vadd.f32 0.0, %v349
    %v351 = vpop.f32.mrb[0].mxu0
    %v352 = vadd.f32 0.0, %v351
    %v353 = vpop.f32.mrb[0].mxu0
    %v354 = vadd.f32 0.0, %v353
    %v355 = vpop.f32.mrb[0].mxu0
    %v356 = vadd.f32 0.0, %v355
    %357 = vmatprep.mubr.bf16.mxu0 0
    %358 = vmatmul.mubr.bf16.gmra.mrb[0].mxu0 %v201
    %v359 = vpop.f32.mrb[0].mxu0
    %v360 = vadd.f32 0.0, %v359
    %v361 = vpop.f32.mrb[0].mxu0
    %v362 = vadd.f32 0.0, %v361
    %v363 = vpop.f32.mrb[0].mxu0
    %v364 = vadd.f32 0.0, %v363
    %v365 = vpop.f32.mrb[0].mxu0
    %v366 = vadd.f32 0.0, %v365
    %367 = vmatprep.mubr.bf16.mxu0 0
    %368 = vmatmul.mubr.bf16.gmra.mrb[0].mxu0 %v204
    %v369 = vpop.f32.mrb[0].mxu0
    %v370 = vadd.f32 0.0, %v369
    %v371 = vpop.f32.mrb[0].mxu0
    %v372 = vadd.f32 0.0, %v371
    %v373 = vpop.f32.mrb[0].mxu0
    %v374 = vadd.f32 0.0, %v373
    %v375 = vpop.f32.mrb[0].mxu0
    %v376 = vadd.f32 0.0, %v375
    %377 = vmatprep.mubr.bf16.mxu0 0
    %378 = vmatmul.mubr.bf16.gmra.mrb[0].mxu0 %v207
    %v379 = vpop.f32.mrb[0].mxu0
    %v380 = vadd.f32 0.0, %v379
    %v381 = vpop.f32.mrb[0].mxu0
    %v382 = vadd.f32 0.0, %v381
    %v383 = vpop.f32.mrb[0].mxu0
    %v384 = vadd.f32 0.0, %v383
    %v385 = vpop.f32.mrb[0].mxu0
    %v386 = vadd.f32 0.0, %v385
    %387 = vmatprep.mubr.bf16.mxu0 0
    %388 = vmatmul.mubr.bf16.gmra.mrb[0].mxu0 %v210
    %v389 = vpop.f32.mrb[0].mxu0
    %v390 = vadd.f32 0.0, %v389
    %v391 = vpop.f32.mrb[0].mxu0
    %v392 = vadd.f32 0.0, %v391
    %v393 = vpop.f32.mrb[0].mxu0
    %v394 = vadd.f32 0.0, %v393
    %v395 = vpop.f32.mrb[0].mxu0
    %v396 = vadd.f32 0.0, %v395
    %397 = vmatprep.mubr.bf16.mxu0 0
    %398 = vmatmul.mubr.bf16.gmra.mrb[0].mxu0 %v213
    %v399 = vpop.f32.mrb[0].mxu0
    %v400 = vadd.f32 0.0, %v399
    %v401 = vpop.f32.mrb[0].mxu0
    %v402 = vadd.f32 0.0, %v401
    %v403 = vpop.f32.mrb[0].mxu0
    %v404 = vadd.f32 0.0, %v403
    %v405 = vpop.f32.mrb[0].mxu0
    %v406 = vadd.f32 0.0, %v405
    %407 = vdwg.mxu0
    %v412 = vunpack.c.l.b16 %v138
    %v413 = vunpack.c.h.b16 %v138
    %v414 = vunpack.c.l.b16 %v139
    %v415 = vunpack.c.h.b16 %v139
    %v416 = vunpack.c.l.b16 %v140
    %v417 = vunpack.c.h.b16 %v140
    %v418 = vunpack.c.l.b16 %v141
    %v419 = vunpack.c.h.b16 %v141
    %v420 = vpack.c.b16 %v414, %v412
    %v421 = vpack.c.b16 %v415, %v413
    %v422 = vpack.c.b16 %v418, %v416
    %v423 = vpack.c.b16 %v419, %v417
    %v429 = vsel %vm166, %v74, 0
    %v432 = vsel %vm166, %v75, 0
    %v435 = vsel %vm166, %v76, 0
    %v438 = vsel %vm166, %v77, 0
    %v441 = vsel %vm166, %v78, 0
    %v444 = vsel %vm166, %v79, 0
    %v447 = vsel %vm166, %v80, 0
    %v450 = vsel %vm166, %v81, 0
    %v453 = vsel %vm166, %v82, 0
    %v456 = vsel %vm166, %v83, 0
    %v459 = vsel %vm166, %v84, 0
    %v462 = vsel %vm166, %v85, 0
    %v465 = vsel %vm166, %v86, 0
    %v468 = vsel %vm166, %v87, 0
    %v471 = vsel %vm166, %v88, 0
    %v474 = vsel %vm166, %v89, 0
    %476 = vmatprep.subr.bf16.mxu0 %v421
    %477 = vmatpush1.bf16.msra.mxu0 %v420
    %478 = vmatprep.subr.bf16.mxu0 %v423
    %479 = vmatpush1.bf16.msra.mxu0 %v422
    %480 = vmatprep.subr.bf16.mxu0 0
    %481 = vmatpush1.bf16.msra.mxu0 0
    %482 = vmatprep.subr.bf16.mxu0 0
    %483 = vmatpush1.bf16.msra.mxu0 0
    %484 = vmatprep.subr.bf16.mxu0 0
    %485 = vmatpush1.bf16.msra.mxu0 0
    %486 = vmatprep.subr.bf16.mxu0 0
    %487 = vmatpush1.bf16.msra.mxu0 0
    %488 = vmatprep.subr.bf16.mxu0 0
    %489 = vmatpush1.bf16.msra.mxu0 0
    %490 = vmatprep.subr.bf16.mxu0 0
    %491 = vmatpush1.bf16.msra.mxu0 0
    %492 = vmatprep.subr.bf16.mxu0 0
    %493 = vmatpush1.bf16.msra.mxu0 0
    %494 = vmatprep.subr.bf16.mxu0 0
    %495 = vmatpush1.bf16.msra.mxu0 0
    %496 = vmatprep.subr.bf16.mxu0 0
    %497 = vmatpush1.bf16.msra.mxu0 0
    %498 = vmatprep.subr.bf16.mxu0 0
    %499 = vmatpush1.bf16.msra.mxu0 0
    %500 = vmatprep.subr.bf16.mxu0 0
    %501 = vmatpush1.bf16.msra.mxu0 0
    %502 = vmatprep.subr.bf16.mxu0 0
    %503 = vmatpush1.bf16.msra.mxu0 0
    %504 = vmatprep.subr.bf16.mxu0 0
    %505 = vmatpush1.bf16.msra.mxu0 0
    %506 = vmatprep.subr.bf16.mxu0 0
    %507 = vmatpush1.bf16.msra.mxu0 0
    %508 = vmatprep.mubr.bf16.mxu0 0
    %509 = vmatmul.mubr.bf16.gmra.mrb[0].mxu0 %v429
    %v510 = vpop.f32.mrb[0].mxu0
    %v511 = vadd.f32 %v250, %v510
    %v512 = vpop.f32.mrb[0].mxu0
    %v513 = vadd.f32 %v252, %v512
    %v514 = vpop.f32.mrb[0].mxu0
    %v515 = vadd.f32 %v254, %v514
    %v516 = vpop.f32.mrb[0].mxu0
    %v517 = vadd.f32 %v256, %v516
    %518 = vmatprep.mubr.bf16.mxu0 0
    %519 = vmatmul.mubr.bf16.gmra.mrb[0].mxu0 %v432
    %v520 = vpop.f32.mrb[0].mxu0
    %v521 = vadd.f32 %v260, %v520
    %v522 = vpop.f32.mrb[0].mxu0
    %v523 = vadd.f32 %v262, %v522
    %v524 = vpop.f32.mrb[0].mxu0
    %v525 = vadd.f32 %v264, %v524
    %v526 = vpop.f32.mrb[0].mxu0
    %v527 = vadd.f32 %v266, %v526
    %528 = vmatprep.mubr.bf16.mxu0 0
    %529 = vmatmul.mubr.bf16.gmra.mrb[0].mxu0 %v435
    %v530 = vpop.f32.mrb[0].mxu0
    %v531 = vadd.f32 %v270, %v530
    %v532 = vpop.f32.mrb[0].mxu0
    %v533 = vadd.f32 %v272, %v532
    %v534 = vpop.f32.mrb[0].mxu0
    %v535 = vadd.f32 %v274, %v534
    %v536 = vpop.f32.mrb[0].mxu0
    %v537 = vadd.f32 %v276, %v536
    %538 = vmatprep.mubr.bf16.mxu0 0
    %539 = vmatmul.mubr.bf16.gmra.mrb[0].mxu0 %v438
    %v540 = vpop.f32.mrb[0].mxu0
    %v541 = vadd.f32 %v280, %v540
    %v542 = vpop.f32.mrb[0].mxu0
    %v543 = vadd.f32 %v282, %v542
    %v544 = vpop.f32.mrb[0].mxu0
    %v545 = vadd.f32 %v284, %v544
    %v546 = vpop.f32.mrb[0].mxu0
    %v547 = vadd.f32 %v286, %v546
    %548 = vmatprep.mubr.bf16.mxu0 0
    %549 = vmatmul.mubr.bf16.gmra.mrb[0].mxu0 %v441
    %v550 = vpop.f32.mrb[0].mxu0
    %v551 = vadd.f32 %v290, %v550
    %v552 = vpop.f32.mrb[0].mxu0
    %v553 = vadd.f32 %v292, %v552
    %v554 = vpop.f32.mrb[0].mxu0
    %v555 = vadd.f32 %v294, %v554
    %v556 = vpop.f32.mrb[0].mxu0
    %v557 = vadd.f32 %v296, %v556
    %558 = vmatprep.mubr.bf16.mxu0 0
    %559 = vmatmul.mubr.bf16.gmra.mrb[0].mxu0 %v444
    %v560 = vpop.f32.mrb[0].mxu0
    %v561 = vadd.f32 %v300, %v560
    %v562 = vpop.f32.mrb[0].mxu0
    %v563 = vadd.f32 %v302, %v562
    %v564 = vpop.f32.mrb[0].mxu0
    %v565 = vadd.f32 %v304, %v564
    %v566 = vpop.f32.mrb[0].mxu0
    %v567 = vadd.f32 %v306, %v566
    %568 = vmatprep.mubr.bf16.mxu0 0
    %569 = vmatmul.mubr.bf16.gmra.mrb[0].mxu0 %v447
    %v570 = vpop.f32.mrb[0].mxu0
    %v571 = vadd.f32 %v310, %v570
    %v572 = vpop.f32.mrb[0].mxu0
    %v573 = vadd.f32 %v312, %v572
    %v574 = vpop.f32.mrb[0].mxu0
    %v575 = vadd.f32 %v314, %v574
    %v576 = vpop.f32.mrb[0].mxu0
    %v577 = vadd.f32 %v316, %v576
    %578 = vmatprep.mubr.bf16.mxu0 0
    %579 = vmatmul.mubr.bf16.gmra.mrb[0].mxu0 %v450
    %v580 = vpop.f32.mrb[0].mxu0
    %v581 = vadd.f32 %v320, %v580
    %v582 = vpop.f32.mrb[0].mxu0
    %v583 = vadd.f32 %v322, %v582
    %v584 = vpop.f32.mrb[0].mxu0
    %v585 = vadd.f32 %v324, %v584
    %v586 = vpop.f32.mrb[0].mxu0
    %v587 = vadd.f32 %v326, %v586
    %588 = vmatprep.mubr.bf16.mxu0 0
    %589 = vmatmul.mubr.bf16.gmra.mrb[0].mxu0 %v453
    %v590 = vpop.f32.mrb[0].mxu0
    %v591 = vadd.f32 %v330, %v590
    %v592 = vpop.f32.mrb[0].mxu0
    %v593 = vadd.f32 %v332, %v592
    %v594 = vpop.f32.mrb[0].mxu0
    %v595 = vadd.f32 %v334, %v594
    %v596 = vpop.f32.mrb[0].mxu0
    %v597 = vadd.f32 %v336, %v596
    %598 = vmatprep.mubr.bf16.mxu0 0
    %599 = vmatmul.mubr.bf16.gmra.mrb[0].mxu0 %v456
    %v600 = vpop.f32.mrb[0].mxu0
    %v601 = vadd.f32 %v340, %v600
    %v602 = vpop.f32.mrb[0].mxu0
    %v603 = vadd.f32 %v342, %v602
    %v604 = vpop.f32.mrb[0].mxu0
    %v605 = vadd.f32 %v344, %v604
    %v606 = vpop.f32.mrb[0].mxu0
    %v607 = vadd.f32 %v346, %v606
    %608 = vmatprep.mubr.bf16.mxu0 0
    %609 = vmatmul.mubr.bf16.gmra.mrb[0].mxu0 %v459
    %v610 = vpop.f32.mrb[0].mxu0
    %v611 = vadd.f32 %v350, %v610
    %v612 = vpop.f32.mrb[0].mxu0
    %v613 = vadd.f32 %v352, %v612
    %v614 = vpop.f32.mrb[0].mxu0
    %v615 = vadd.f32 %v354, %v614
    %v616 = vpop.f32.mrb[0].mxu0
    %v617 = vadd.f32 %v356, %v616
    %618 = vmatprep.mubr.bf16.mxu0 0
    %619 = vmatmul.mubr.bf16.gmra.mrb[0].mxu0 %v462
    %v620 = vpop.f32.mrb[0].mxu0
    %v621 = vadd.f32 %v360, %v620
    %v622 = vpop.f32.mrb[0].mxu0
    %v623 = vadd.f32 %v362, %v622
    %v624 = vpop.f32.mrb[0].mxu0
    %v625 = vadd.f32 %v364, %v624
    %v626 = vpop.f32.mrb[0].mxu0
    %v627 = vadd.f32 %v366, %v626
    %628 = vmatprep.mubr.bf16.mxu0 0
    %629 = vmatmul.mubr.bf16.gmra.mrb[0].mxu0 %v465
    %v630 = vpop.f32.mrb[0].mxu0
    %v631 = vadd.f32 %v370, %v630
    %v632 = vpop.f32.mrb[0].mxu0
    %v633 = vadd.f32 %v372, %v632
    %v634 = vpop.f32.mrb[0].mxu0
    %v635 = vadd.f32 %v374, %v634
    %v636 = vpop.f32.mrb[0].mxu0
    %v637 = vadd.f32 %v376, %v636
    %638 = vmatprep.mubr.bf16.mxu0 0
    %639 = vmatmul.mubr.bf16.gmra.mrb[0].mxu0 %v468
    %v640 = vpop.f32.mrb[0].mxu0
    %v641 = vadd.f32 %v380, %v640
    %v642 = vpop.f32.mrb[0].mxu0
    %v643 = vadd.f32 %v382, %v642
    %v644 = vpop.f32.mrb[0].mxu0
    %v645 = vadd.f32 %v384, %v644
    %v646 = vpop.f32.mrb[0].mxu0
    %v647 = vadd.f32 %v386, %v646
    %648 = vmatprep.mubr.bf16.mxu0 0
    %649 = vmatmul.mubr.bf16.gmra.mrb[0].mxu0 %v471
    %v650 = vpop.f32.mrb[0].mxu0
    %v651 = vadd.f32 %v390, %v650
    %v652 = vpop.f32.mrb[0].mxu0
    %v653 = vadd.f32 %v392, %v652
    %v654 = vpop.f32.mrb[0].mxu0
    %v655 = vadd.f32 %v394, %v654
    %v656 = vpop.f32.mrb[0].mxu0
    %v657 = vadd.f32 %v396, %v656
    %658 = vmatprep.mubr.bf16.mxu0 0
    %659 = vmatmul.mubr.bf16.gmra.mrb[0].mxu0 %v474
    %v660 = vpop.f32.mrb[0].mxu0
    %v661 = vadd.f32 %v400, %v660
    %v662 = vpop.f32.mrb[0].mxu0
    %v663 = vadd.f32 %v402, %v662
    %v664 = vpop.f32.mrb[0].mxu0
    %v665 = vadd.f32 %v404, %v664
    %v666 = vpop.f32.mrb[0].mxu0
    %v667 = vadd.f32 %v406, %v666
    %668 = vdwg.mxu0
    %v669 = vld [vmem:[%s4] sm:$0x3]
    %v671 = vlaneseq
    %v672 = vshrl.u32 %v671, 7
    %v673 = vsub.s32 0, %v672
    %v674 = vrot.slane %v669, %v673
    %v675 = vlaneseq
    %v676 = vshrl.u32 %v675, 7
    %v677 = vsub.s32 1, %v676
    %v678 = vrot.slane %v669, %v677
    %v681 = vadd.f32 %v511, %v674
    %v682 = vadd.f32 %v513, %v678
    %v683 = vadd.f32 %v515, %v674
    %v684 = vadd.f32 %v517, %v678
    %v685 = vadd.f32 %v521, %v674
    %v686 = vadd.f32 %v523, %v678
    %v687 = vadd.f32 %v525, %v674
    %v688 = vadd.f32 %v527, %v678
    %v689 = vadd.f32 %v531, %v674
    %v690 = vadd.f32 %v533, %v678
    %v691 = vadd.f32 %v535, %v674
    %v692 = vadd.f32 %v537, %v678
    %v693 = vadd.f32 %v541, %v674
    %v694 = vadd.f32 %v543, %v678
    %v695 = vadd.f32 %v545, %v674
    %v696 = vadd.f32 %v547, %v678
    %v697 = vadd.f32 %v551, %v674
    %v698 = vadd.f32 %v553, %v678
    %v699 = vadd.f32 %v555, %v674
    %v700 = vadd.f32 %v557, %v678
    %v701 = vadd.f32 %v561, %v674
    %v702 = vadd.f32 %v563, %v678
    %v703 = vadd.f32 %v565, %v674
    %v704 = vadd.f32 %v567, %v678
    %v705 = vadd.f32 %v571, %v674
    %v706 = vadd.f32 %v573, %v678
    %v707 = vadd.f32 %v575, %v674
    %v708 = vadd.f32 %v577, %v678
    %v709 = vadd.f32 %v581, %v674
    %v710 = vadd.f32 %v583, %v678
    %v711 = vadd.f32 %v585, %v674
    %v712 = vadd.f32 %v587, %v678
    %v713 = vadd.f32 %v591, %v674
    %v714 = vadd.f32 %v593, %v678
    %v715 = vadd.f32 %v595, %v674
    %v716 = vadd.f32 %v597, %v678
    %v717 = vadd.f32 %v601, %v674
    %v718 = vadd.f32 %v603, %v678
    %v719 = vadd.f32 %v605, %v674
    %v720 = vadd.f32 %v607, %v678
    %v721 = vadd.f32 %v611, %v674
    %v722 = vadd.f32 %v613, %v678
    %v723 = vadd.f32 %v615, %v674
    %v724 = vadd.f32 %v617, %v678
    %v725 = vadd.f32 %v621, %v674
    %v726 = vadd.f32 %v623, %v678
    %v727 = vadd.f32 %v625, %v674
    %v728 = vadd.f32 %v627, %v678
    %v729 = vadd.f32 %v631, %v674
    %v730 = vadd.f32 %v633, %v678
    %v731 = vadd.f32 %v635, %v674
    %v732 = vadd.f32 %v637, %v678
    %v733 = vadd.f32 %v641, %v674
    %v734 = vadd.f32 %v643, %v678
    %v735 = vadd.f32 %v645, %v674
    %v736 = vadd.f32 %v647, %v678
    %v737 = vadd.f32 %v651, %v674
    %v738 = vadd.f32 %v653, %v678
    %v739 = vadd.f32 %v655, %v674
    %v740 = vadd.f32 %v657, %v678
    %v741 = vadd.f32 %v661, %v674
    %v742 = vadd.f32 %v663, %v678
    %v743 = vadd.f32 %v665, %v674
    %v744 = vadd.f32 %v667, %v678
    %v745 = vmax.f32 %v681, 0.0
    %v746 = vmax.f32 %v682, 0.0
    %v747 = vmax.f32 %v683, 0.0
    %v748 = vmax.f32 %v684, 0.0
    %v749 = vmax.f32 %v685, 0.0
    %v750 = vmax.f32 %v686, 0.0
    %v751 = vmax.f32 %v687, 0.0
    %v752 = vmax.f32 %v688, 0.0
    %v753 = vmax.f32 %v689, 0.0
    %v754 = vmax.f32 %v690, 0.0
    %v755 = vmax.f32 %v691, 0.0
    %v756 = vmax.f32 %v692, 0.0
    %v757 = vmax.f32 %v693, 0.0
    %v758 = vmax.f32 %v694, 0.0
    %v759 = vmax.f32 %v695, 0.0
    %v760 = vmax.f32 %v696, 0.0
    %v761 = vmax.f32 %v697, 0.0
    %v762 = vmax.f32 %v698, 0.0
    %v763 = vmax.f32 %v699, 0.0
    %v764 = vmax.f32 %v700, 0.0
    %v765 = vmax.f32 %v701, 0.0
    %v766 = vmax.f32 %v702, 0.0
    %v767 = vmax.f32 %v703, 0.0
    %v768 = vmax.f32 %v704, 0.0
    %v769 = vmax.f32 %v705, 0.0
    %v770 = vmax.f32 %v706, 0.0
    %v771 = vmax.f32 %v707, 0.0
    %v772 = vmax.f32 %v708, 0.0
    %v773 = vmax.f32 %v709, 0.0
    %v774 = vmax.f32 %v710, 0.0
    %v775 = vmax.f32 %v711, 0.0
    %v776 = vmax.f32 %v712, 0.0
    %v777 = vmax.f32 %v713, 0.0
    %v778 = vmax.f32 %v714, 0.0
    %v779 = vmax.f32 %v715, 0.0
    %v780 = vmax.f32 %v716, 0.0
    %v781 = vmax.f32 %v717, 0.0
    %v782 = vmax.f32 %v718, 0.0
    %v783 = vmax.f32 %v719, 0.0
    %v784 = vmax.f32 %v720, 0.0
    %v785 = vmax.f32 %v721, 0.0
    %v786 = vmax.f32 %v722, 0.0
    %v787 = vmax.f32 %v723, 0.0
    %v788 = vmax.f32 %v724, 0.0
    %v789 = vmax.f32 %v725, 0.0
    %v790 = vmax.f32 %v726, 0.0
    %v791 = vmax.f32 %v727, 0.0
    %v792 = vmax.f32 %v728, 0.0
    %v793 = vmax.f32 %v729, 0.0
    %v794 = vmax.f32 %v730, 0.0
    %v795 = vmax.f32 %v731, 0.0
    %v796 = vmax.f32 %v732, 0.0
    %v797 = vmax.f32 %v733, 0.0
    %v798 = vmax.f32 %v734, 0.0
    %v799 = vmax.f32 %v735, 0.0
    %v800 = vmax.f32 %v736, 0.0
    %v801 = vmax.f32 %v737, 0.0
    %v802 = vmax.f32 %v738, 0.0
    %v803 = vmax.f32 %v739, 0.0
    %v804 = vmax.f32 %v740, 0.0
    %v805 = vmax.f32 %v741, 0.0
    %v806 = vmax.f32 %v742, 0.0
    %v807 = vmax.f32 %v743, 0.0
    %v808 = vmax.f32 %v744, 0.0
    %v809 = vpack.c.bf16 %v747, %v745
    %v810 = vpack.c.bf16 %v748, %v746
    %v811 = vpack.c.bf16 %v751, %v749
    %v812 = vpack.c.bf16 %v752, %v750
    %v813 = vpack.c.bf16 %v755, %v753
    %v814 = vpack.c.bf16 %v756, %v754
    %v815 = vpack.c.bf16 %v759, %v757
    %v816 = vpack.c.bf16 %v760, %v758
    %v817 = vpack.c.bf16 %v763, %v761
    %v818 = vpack.c.bf16 %v764, %v762
    %v819 = vpack.c.bf16 %v767, %v765
    %v820 = vpack.c.bf16 %v768, %v766
    %v821 = vpack.c.bf16 %v771, %v769
    %v822 = vpack.c.bf16 %v772, %v770
    %v823 = vpack.c.bf16 %v775, %v773
    %v824 = vpack.c.bf16 %v776, %v774
    %v825 = vpack.c.bf16 %v779, %v777
    %v826 = vpack.c.bf16 %v780, %v778
    %v827 = vpack.c.bf16 %v783, %v781
    %v828 = vpack.c.bf16 %v784, %v782
    %v829 = vpack.c.bf16 %v787, %v785
    %v830 = vpack.c.bf16 %v788, %v786
    %v831 = vpack.c.bf16 %v791, %v789
    %v832 = vpack.c.bf16 %v792, %v790
    %v833 = vpack.c.bf16 %v795, %v793
    %v834 = vpack.c.bf16 %v796, %v794
    %v835 = vpack.c.bf16 %v799, %v797
    %v836 = vpack.c.bf16 %v800, %v798
    %v837 = vpack.c.bf16 %v803, %v801
    %v838 = vpack.c.bf16 %v804, %v802
    %v839 = vpack.c.bf16 %v807, %v805
    %v840 = vpack.c.bf16 %v808, %v806
    %v841 = vld [vmem:[%s5] sm:$0xf]
    %v842 = vld [vmem:[%s5 + $0x4] sm:$0xf]
    %v843 = vld [vmem:[%s5 + $0x8] sm:$0xf]
    %v844 = vld [vmem:[%s5 + $0xc] sm:$0xf]
    %v845 = vld [vmem:[%s5 + $0x10] sm:$0xf]
    %v846 = vld [vmem:[%s5 + $0x14] sm:$0xf]
    %v847 = vld [vmem:[%s5 + $0x18] sm:$0xf]
    %v848 = vld [vmem:[%s5 + $0x1c] sm:$0xf]
    %v849 = vld [vmem:[%s5 + $0x20] sm:$0xf]
    %v850 = vld [vmem:[%s5 + $0x24] sm:$0xf]
    %v851 = vld [vmem:[%s5 + $0x28] sm:$0xf]
    %v852 = vld [vmem:[%s5 + $0x2c] sm:$0xf]
    %v853 = vld [vmem:[%s5 + $0x30] sm:$0xf]
    %v854 = vld [vmem:[%s5 + $0x34] sm:$0xf]
    %v855 = vld [vmem:[%s5 + $0x38] sm:$0xf]
    %v856 = vld [vmem:[%s5 + $0x3c] sm:$0xf]
    %v857 = vld [vmem:[%s5 + $0x40] sm:$0xf]
    %v858 = vld [vmem:[%s5 + $0x44] sm:$0xf]
    %v859 = vld [vmem:[%s5 + $0x48] sm:$0xf]
    %v860 = vld [vmem:[%s5 + $0x4c] sm:$0xf]
    %v861 = vld [vmem:[%s5 + $0x50] sm:$0xf]
    %v862 = vld [vmem:[%s5 + $0x54] sm:$0xf]
    %v863 = vld [vmem:[%s5 + $0x58] sm:$0xf]
    %v864 = vld [vmem:[%s5 + $0x5c] sm:$0xf]
    %v865 = vld [vmem:[%s5 + $0x60] sm:$0xf]
    %v866 = vld [vmem:[%s5 + $0x64] sm:$0xf]
    %v867 = vld [vmem:[%s5 + $0x68] sm:$0xf]
    %v868 = vld [vmem:[%s5 + $0x6c] sm:$0xf]
    %v869 = vld [vmem:[%s5 + $0x70] sm:$0xf]
    %v870 = vld [vmem:[%s5 + $0x74] sm:$0xf]
    %v871 = vld [vmem:[%s5 + $0x78] sm:$0xf]
    %v872 = vld [vmem:[%s5 + $0x7c] sm:$0xf]
    %s873 = scalar_lea.vmem %s2, 8
    %v874 = vld [vmem:[%s873] sm:$0xff]
    %v875 = vld [vmem:[%s873 + $0x20] sm:$0xff]
    %v876 = vld [vmem:[%s873 + $0x40] sm:$0xff]
    %v877 = vld [vmem:[%s873 + $0x60] sm:$0xff]
    %s878 = scalar_lea.vmem [#allocation2], 8
    %v879 = vld [vmem:[%s878] sm:$0xff]
    %v880 = vld [vmem:[%s878 + $0x20] sm:$0xff]
    %v881 = vld [vmem:[%s878 + $0x40] sm:$0xff]
    %v882 = vld [vmem:[%s878 + $0x60] sm:$0xff]
    %v887 = vunpack.c.l.b16 %v879
    %v888 = vunpack.c.h.b16 %v879
    %v889 = vunpack.c.l.b16 %v880
    %v890 = vunpack.c.h.b16 %v880
    %v891 = vunpack.c.l.b16 %v881
    %v892 = vunpack.c.h.b16 %v881
    %v893 = vunpack.c.l.b16 %v882
    %v894 = vunpack.c.h.b16 %v882
    %v895 = vpack.c.b16 %v889, %v887
    %v896 = vpack.c.b16 %v890, %v888
    %v897 = vpack.c.b16 %v893, %v891
    %v898 = vpack.c.b16 %v894, %v892
    %903 = vmatprep.subr.bf16.mxu0 %v896
    %904 = vmatpush1.bf16.msra.mxu0 %v895
    %905 = vmatprep.subr.bf16.mxu0 %v898
    %906 = vmatpush1.bf16.msra.mxu0 %v897
    %907 = vmatprep.subr.bf16.mxu0 0
    %908 = vmatpush1.bf16.msra.mxu0 0
    %909 = vmatprep.subr.bf16.mxu0 0
    %910 = vmatpush1.bf16.msra.mxu0 0
    %911 = vmatprep.subr.bf16.mxu0 0
    %912 = vmatpush1.bf16.msra.mxu0 0
    %913 = vmatprep.subr.bf16.mxu0 0
    %914 = vmatpush1.bf16.msra.mxu0 0
    %915 = vmatprep.subr.bf16.mxu0 0
    %916 = vmatpush1.bf16.msra.mxu0 0
    %917 = vmatprep.subr.bf16.mxu0 0
    %918 = vmatpush1.bf16.msra.mxu0 0
    %919 = vmatprep.subr.bf16.mxu0 0
    %920 = vmatpush1.bf16.msra.mxu0 0
    %921 = vmatprep.subr.bf16.mxu0 0
    %922 = vmatpush1.bf16.msra.mxu0 0
    %923 = vmatprep.subr.bf16.mxu0 0
    %924 = vmatpush1.bf16.msra.mxu0 0
    %925 = vmatprep.subr.bf16.mxu0 0
    %926 = vmatpush1.bf16.msra.mxu0 0
    %927 = vmatprep.subr.bf16.mxu0 0
    %928 = vmatpush1.bf16.msra.mxu0 0
    %929 = vmatprep.subr.bf16.mxu0 0
    %930 = vmatpush1.bf16.msra.mxu0 0
    %931 = vmatprep.subr.bf16.mxu0 0
    %932 = vmatpush1.bf16.msra.mxu0 0
    %933 = vmatprep.subr.bf16.mxu0 0
    %934 = vmatpush1.bf16.msra.mxu0 0
    %935 = vmatprep.mubr.bf16.mxu0 0
    %936 = vmatmul.mubr.bf16.gmra.mrb[0].mxu0 %v168
    %v937 = vpop.f32.mrb[0].mxu0
    %v938 = vadd.f32 0.0, %v937
    %v939 = vpop.f32.mrb[0].mxu0
    %v940 = vadd.f32 0.0, %v939
    %v941 = vpop.f32.mrb[0].mxu0
    %v942 = vadd.f32 0.0, %v941
    %v943 = vpop.f32.mrb[0].mxu0
    %v944 = vadd.f32 0.0, %v943
    %945 = vmatprep.mubr.bf16.mxu0 0
    %946 = vmatmul.mubr.bf16.gmra.mrb[0].mxu0 %v171
    %v947 = vpop.f32.mrb[0].mxu0
    %v948 = vadd.f32 0.0, %v947
    %v949 = vpop.f32.mrb[0].mxu0
    %v950 = vadd.f32 0.0, %v949
    %v951 = vpop.f32.mrb[0].mxu0
    %v952 = vadd.f32 0.0, %v951
    %v953 = vpop.f32.mrb[0].mxu0
    %v954 = vadd.f32 0.0, %v953
    %955 = vmatprep.mubr.bf16.mxu0 0
    %956 = vmatmul.mubr.bf16.gmra.mrb[0].mxu0 %v174
    %v957 = vpop.f32.mrb[0].mxu0
    %v958 = vadd.f32 0.0, %v957
    %v959 = vpop.f32.mrb[0].mxu0
    %v960 = vadd.f32 0.0, %v959
    %v961 = vpop.f32.mrb[0].mxu0
    %v962 = vadd.f32 0.0, %v961
    %v963 = vpop.f32.mrb[0].mxu0
    %v964 = vadd.f32 0.0, %v963
    %965 = vmatprep.mubr.bf16.mxu0 0
    %966 = vmatmul.mubr.bf16.gmra.mrb[0].mxu0 %v177
    %v967 = vpop.f32.mrb[0].mxu0
    %v968 = vadd.f32 0.0, %v967
    %v969 = vpop.f32.mrb[0].mxu0
    %v970 = vadd.f32 0.0, %v969
    %v971 = vpop.f32.mrb[0].mxu0
    %v972 = vadd.f32 0.0, %v971
    %v973 = vpop.f32.mrb[0].mxu0
    %v974 = vadd.f32 0.0, %v973
    %975 = vmatprep.mubr.bf16.mxu0 0
    %976 = vmatmul.mubr.bf16.gmra.mrb[0].mxu0 %v180
    %v977 = vpop.f32.mrb[0].mxu0
    %v978 = vadd.f32 0.0, %v977
    %v979 = vpop.f32.mrb[0].mxu0
    %v980 = vadd.f32 0.0, %v979
    %v981 = vpop.f32.mrb[0].mxu0
    %v982 = vadd.f32 0.0, %v981
    %v983 = vpop.f32.mrb[0].mxu0
    %v984 = vadd.f32 0.0, %v983
    %985 = vmatprep.mubr.bf16.mxu0 0
    %986 = vmatmul.mubr.bf16.gmra.mrb[0].mxu0 %v183
    %v987 = vpop.f32.mrb[0].mxu0
    %v988 = vadd.f32 0.0, %v987
    %v989 = vpop.f32.mrb[0].mxu0
    %v990 = vadd.f32 0.0, %v989
    %v991 = vpop.f32.mrb[0].mxu0
    %v992 = vadd.f32 0.0, %v991
    %v993 = vpop.f32.mrb[0].mxu0
    %v994 = vadd.f32 0.0, %v993
    %995 = vmatprep.mubr.bf16.mxu0 0
    %996 = vmatmul.mubr.bf16.gmra.mrb[0].mxu0 %v186
    %v997 = vpop.f32.mrb[0].mxu0
    %v998 = vadd.f32 0.0, %v997
    %v999 = vpop.f32.mrb[0].mxu0
    %v1000 = vadd.f32 0.0, %v999
    %v1001 = vpop.f32.mrb[0].mxu0
    %v1002 = vadd.f32 0.0, %v1001
    %v1003 = vpop.f32.mrb[0].mxu0
    %v1004 = vadd.f32 0.0, %v1003
    %1005 = vmatprep.mubr.bf16.mxu0 0
    %1006 = vmatmul.mubr.bf16.gmra.mrb[0].mxu0 %v189
    %v1007 = vpop.f32.mrb[0].mxu0
    %v1008 = vadd.f32 0.0, %v1007
    %v1009 = vpop.f32.mrb[0].mxu0
    %v1010 = vadd.f32 0.0, %v1009
    %v1011 = vpop.f32.mrb[0].mxu0
    %v1012 = vadd.f32 0.0, %v1011
    %v1013 = vpop.f32.mrb[0].mxu0
    %v1014 = vadd.f32 0.0, %v1013
    %1015 = vmatprep.mubr.bf16.mxu0 0
    %1016 = vmatmul.mubr.bf16.gmra.mrb[0].mxu0 %v192
    %v1017 = vpop.f32.mrb[0].mxu0
    %v1018 = vadd.f32 0.0, %v1017
    %v1019 = vpop.f32.mrb[0].mxu0
    %v1020 = vadd.f32 0.0, %v1019
    %v1021 = vpop.f32.mrb[0].mxu0
    %v1022 = vadd.f32 0.0, %v1021
    %v1023 = vpop.f32.mrb[0].mxu0
    %v1024 = vadd.f32 0.0, %v1023
    %1025 = vmatprep.mubr.bf16.mxu0 0
    %1026 = vmatmul.mubr.bf16.gmra.mrb[0].mxu0 %v195
    %v1027 = vpop.f32.mrb[0].mxu0
    %v1028 = vadd.f32 0.0, %v1027
    %v1029 = vpop.f32.mrb[0].mxu0
    %v1030 = vadd.f32 0.0, %v1029
    %v1031 = vpop.f32.mrb[0].mxu0
    %v1032 = vadd.f32 0.0, %v1031
    %v1033 = vpop.f32.mrb[0].mxu0
    %v1034 = vadd.f32 0.0, %v1033
    %1035 = vmatprep.mubr.bf16.mxu0 0
    %1036 = vmatmul.mubr.bf16.gmra.mrb[0].mxu0 %v198
    %v1037 = vpop.f32.mrb[0].mxu0
    %v1038 = vadd.f32 0.0, %v1037
    %v1039 = vpop.f32.mrb[0].mxu0
    %v1040 = vadd.f32 0.0, %v1039
    %v1041 = vpop.f32.mrb[0].mxu0
    %v1042 = vadd.f32 0.0, %v1041
    %v1043 = vpop.f32.mrb[0].mxu0
    %v1044 = vadd.f32 0.0, %v1043
    %1045 = vmatprep.mubr.bf16.mxu0 0
    %1046 = vmatmul.mubr.bf16.gmra.mrb[0].mxu0 %v201
    %v1047 = vpop.f32.mrb[0].mxu0
    %v1048 = vadd.f32 0.0, %v1047
    %v1049 = vpop.f32.mrb[0].mxu0
    %v1050 = vadd.f32 0.0, %v1049
    %v1051 = vpop.f32.mrb[0].mxu0
    %v1052 = vadd.f32 0.0, %v1051
    %v1053 = vpop.f32.mrb[0].mxu0
    %v1054 = vadd.f32 0.0, %v1053
    %1055 = vmatprep.mubr.bf16.mxu0 0
    %1056 = vmatmul.mubr.bf16.gmra.mrb[0].mxu0 %v204
    %v1057 = vpop.f32.mrb[0].mxu0
    %v1058 = vadd.f32 0.0, %v1057
    %v1059 = vpop.f32.mrb[0].mxu0
    %v1060 = vadd.f32 0.0, %v1059
    %v1061 = vpop.f32.mrb[0].mxu0
    %v1062 = vadd.f32 0.0, %v1061
    %v1063 = vpop.f32.mrb[0].mxu0
    %v1064 = vadd.f32 0.0, %v1063
    %1065 = vmatprep.mubr.bf16.mxu0 0
    %1066 = vmatmul.mubr.bf16.gmra.mrb[0].mxu0 %v207
    %v1067 = vpop.f32.mrb[0].mxu0
    %v1068 = vadd.f32 0.0, %v1067
    %v1069 = vpop.f32.mrb[0].mxu0
    %v1070 = vadd.f32 0.0, %v1069
    %v1071 = vpop.f32.mrb[0].mxu0
    %v1072 = vadd.f32 0.0, %v1071
    %v1073 = vpop.f32.mrb[0].mxu0
    %v1074 = vadd.f32 0.0, %v1073
    %1075 = vmatprep.mubr.bf16.mxu0 0
    %1076 = vmatmul.mubr.bf16.gmra.mrb[0].mxu0 %v210
    %v1077 = vpop.f32.mrb[0].mxu0
    %v1078 = vadd.f32 0.0, %v1077
    %v1079 = vpop.f32.mrb[0].mxu0
    %v1080 = vadd.f32 0.0, %v1079
    %v1081 = vpop.f32.mrb[0].mxu0
    %v1082 = vadd.f32 0.0, %v1081
    %v1083 = vpop.f32.mrb[0].mxu0
    %v1084 = vadd.f32 0.0, %v1083
    %1085 = vmatprep.mubr.bf16.mxu0 0
    %1086 = vmatmul.mubr.bf16.gmra.mrb[0].mxu0 %v213
    %v1087 = vpop.f32.mrb[0].mxu0
    %v1088 = vadd.f32 0.0, %v1087
    %v1089 = vpop.f32.mrb[0].mxu0
    %v1090 = vadd.f32 0.0, %v1089
    %v1091 = vpop.f32.mrb[0].mxu0
    %v1092 = vadd.f32 0.0, %v1091
    %v1093 = vpop.f32.mrb[0].mxu0
    %v1094 = vadd.f32 0.0, %v1093
    %1095 = vdwg.mxu0
    %v1100 = vunpack.c.l.b16 %v874
    %v1101 = vunpack.c.h.b16 %v874
    %v1102 = vunpack.c.l.b16 %v875
    %v1103 = vunpack.c.h.b16 %v875
    %v1104 = vunpack.c.l.b16 %v876
    %v1105 = vunpack.c.h.b16 %v876
    %v1106 = vunpack.c.l.b16 %v877
    %v1107 = vunpack.c.h.b16 %v877
    %v1108 = vpack.c.b16 %v1102, %v1100
    %v1109 = vpack.c.b16 %v1103, %v1101
    %v1110 = vpack.c.b16 %v1106, %v1104
    %v1111 = vpack.c.b16 %v1107, %v1105
    %1116 = vmatprep.subr.bf16.mxu0 %v1109
    %1117 = vmatpush1.bf16.msra.mxu0 %v1108
    %1118 = vmatprep.subr.bf16.mxu0 %v1111
    %1119 = vmatpush1.bf16.msra.mxu0 %v1110
    %1120 = vmatprep.subr.bf16.mxu0 0
    %1121 = vmatpush1.bf16.msra.mxu0 0
    %1122 = vmatprep.subr.bf16.mxu0 0
    %1123 = vmatpush1.bf16.msra.mxu0 0
    %1124 = vmatprep.subr.bf16.mxu0 0
    %1125 = vmatpush1.bf16.msra.mxu0 0
    %1126 = vmatprep.subr.bf16.mxu0 0
    %1127 = vmatpush1.bf16.msra.mxu0 0
    %1128 = vmatprep.subr.bf16.mxu0 0
    %1129 = vmatpush1.bf16.msra.mxu0 0
    %1130 = vmatprep.subr.bf16.mxu0 0
    %1131 = vmatpush1.bf16.msra.mxu0 0
    %1132 = vmatprep.subr.bf16.mxu0 0
    %1133 = vmatpush1.bf16.msra.mxu0 0
    %1134 = vmatprep.subr.bf16.mxu0 0
    %1135 = vmatpush1.bf16.msra.mxu0 0
    %1136 = vmatprep.subr.bf16.mxu0 0
    %1137 = vmatpush1.bf16.msra.mxu0 0
    %1138 = vmatprep.subr.bf16.mxu0 0
    %1139 = vmatpush1.bf16.msra.mxu0 0
    %1140 = vmatprep.subr.bf16.mxu0 0
    %1141 = vmatpush1.bf16.msra.mxu0 0
    %1142 = vmatprep.subr.bf16.mxu0 0
    %1143 = vmatpush1.bf16.msra.mxu0 0
    %1144 = vmatprep.subr.bf16.mxu0 0
    %1145 = vmatpush1.bf16.msra.mxu0 0
    %1146 = vmatprep.subr.bf16.mxu0 0
    %1147 = vmatpush1.bf16.msra.mxu0 0
    %1148 = vmatprep.mubr.bf16.mxu0 0
    %1149 = vmatmul.mubr.bf16.gmra.mrb[0].mxu0 %v429
    %v1150 = vpop.f32.mrb[0].mxu0
    %v1151 = vadd.f32 %v938, %v1150
    %v1152 = vpop.f32.mrb[0].mxu0
    %v1153 = vadd.f32 %v940, %v1152
    %v1154 = vpop.f32.mrb[0].mxu0
    %v1155 = vadd.f32 %v942, %v1154
    %v1156 = vpop.f32.mrb[0].mxu0
    %v1157 = vadd.f32 %v944, %v1156
    %1158 = vmatprep.mubr.bf16.mxu0 0
    %1159 = vmatmul.mubr.bf16.gmra.mrb[0].mxu0 %v432
    %v1160 = vpop.f32.mrb[0].mxu0
    %v1161 = vadd.f32 %v948, %v1160
    %v1162 = vpop.f32.mrb[0].mxu0
    %v1163 = vadd.f32 %v950, %v1162
    %v1164 = vpop.f32.mrb[0].mxu0
    %v1165 = vadd.f32 %v952, %v1164
    %v1166 = vpop.f32.mrb[0].mxu0
    %v1167 = vadd.f32 %v954, %v1166
    %1168 = vmatprep.mubr.bf16.mxu0 0
    %1169 = vmatmul.mubr.bf16.gmra.mrb[0].mxu0 %v435
    %v1170 = vpop.f32.mrb[0].mxu0
    %v1171 = vadd.f32 %v958, %v1170
    %v1172 = vpop.f32.mrb[0].mxu0
    %v1173 = vadd.f32 %v960, %v1172
    %v1174 = vpop.f32.mrb[0].mxu0
    %v1175 = vadd.f32 %v962, %v1174
    %v1176 = vpop.f32.mrb[0].mxu0
    %v1177 = vadd.f32 %v964, %v1176
    %1178 = vmatprep.mubr.bf16.mxu0 0
    %1179 = vmatmul.mubr.bf16.gmra.mrb[0].mxu0 %v438
    %v1180 = vpop.f32.mrb[0].mxu0
    %v1181 = vadd.f32 %v968, %v1180
    %v1182 = vpop.f32.mrb[0].mxu0
    %v1183 = vadd.f32 %v970, %v1182
    %v1184 = vpop.f32.mrb[0].mxu0
    %v1185 = vadd.f32 %v972, %v1184
    %v1186 = vpop.f32.mrb[0].mxu0
    %v1187 = vadd.f32 %v974, %v1186
    %1188 = vmatprep.mubr.bf16.mxu0 0
    %1189 = vmatmul.mubr.bf16.gmra.mrb[0].mxu0 %v441
    %v1190 = vpop.f32.mrb[0].mxu0
    %v1191 = vadd.f32 %v978, %v1190
    %v1192 = vpop.f32.mrb[0].mxu0
    %v1193 = vadd.f32 %v980, %v1192
    %v1194 = vpop.f32.mrb[0].mxu0
    %v1195 = vadd.f32 %v982, %v1194
    %v1196 = vpop.f32.mrb[0].mxu0
    %v1197 = vadd.f32 %v984, %v1196
    %1198 = vmatprep.mubr.bf16.mxu0 0
    %1199 = vmatmul.mubr.bf16.gmra.mrb[0].mxu0 %v444
    %v1200 = vpop.f32.mrb[0].mxu0
    %v1201 = vadd.f32 %v988, %v1200
    %v1202 = vpop.f32.mrb[0].mxu0
    %v1203 = vadd.f32 %v990, %v1202
    %v1204 = vpop.f32.mrb[0].mxu0
    %v1205 = vadd.f32 %v992, %v1204
    %v1206 = vpop.f32.mrb[0].mxu0
    %v1207 = vadd.f32 %v994, %v1206
    %1208 = vmatprep.mubr.bf16.mxu0 0
    %1209 = vmatmul.mubr.bf16.gmra.mrb[0].mxu0 %v447
    %v1210 = vpop.f32.mrb[0].mxu0
    %v1211 = vadd.f32 %v998, %v1210
    %v1212 = vpop.f32.mrb[0].mxu0
    %v1213 = vadd.f32 %v1000, %v1212
    %v1214 = vpop.f32.mrb[0].mxu0
    %v1215 = vadd.f32 %v1002, %v1214
    %v1216 = vpop.f32.mrb[0].mxu0
    %v1217 = vadd.f32 %v1004, %v1216
    %1218 = vmatprep.mubr.bf16.mxu0 0
    %1219 = vmatmul.mubr.bf16.gmra.mrb[0].mxu0 %v450
    %v1220 = vpop.f32.mrb[0].mxu0
    %v1221 = vadd.f32 %v1008, %v1220
    %v1222 = vpop.f32.mrb[0].mxu0
    %v1223 = vadd.f32 %v1010, %v1222
    %v1224 = vpop.f32.mrb[0].mxu0
    %v1225 = vadd.f32 %v1012, %v1224
    %v1226 = vpop.f32.mrb[0].mxu0
    %v1227 = vadd.f32 %v1014, %v1226
    %1228 = vmatprep.mubr.bf16.mxu0 0
    %1229 = vmatmul.mubr.bf16.gmra.mrb[0].mxu0 %v453
    %v1230 = vpop.f32.mrb[0].mxu0
    %v1231 = vadd.f32 %v1018, %v1230
    %v1232 = vpop.f32.mrb[0].mxu0
    %v1233 = vadd.f32 %v1020, %v1232
    %v1234 = vpop.f32.mrb[0].mxu0
    %v1235 = vadd.f32 %v1022, %v1234
    %v1236 = vpop.f32.mrb[0].mxu0
    %v1237 = vadd.f32 %v1024, %v1236
    %1238 = vmatprep.mubr.bf16.mxu0 0
    %1239 = vmatmul.mubr.bf16.gmra.mrb[0].mxu0 %v456
    %v1240 = vpop.f32.mrb[0].mxu0
    %v1241 = vadd.f32 %v1028, %v1240
    %v1242 = vpop.f32.mrb[0].mxu0
    %v1243 = vadd.f32 %v1030, %v1242
    %v1244 = vpop.f32.mrb[0].mxu0
    %v1245 = vadd.f32 %v1032, %v1244
    %v1246 = vpop.f32.mrb[0].mxu0
    %v1247 = vadd.f32 %v1034, %v1246
    %1248 = vmatprep.mubr.bf16.mxu0 0
    %1249 = vmatmul.mubr.bf16.gmra.mrb[0].mxu0 %v459
    %v1250 = vpop.f32.mrb[0].mxu0
    %v1251 = vadd.f32 %v1038, %v1250
    %v1252 = vpop.f32.mrb[0].mxu0
    %v1253 = vadd.f32 %v1040, %v1252
    %v1254 = vpop.f32.mrb[0].mxu0
    %v1255 = vadd.f32 %v1042, %v1254
    %v1256 = vpop.f32.mrb[0].mxu0
    %v1257 = vadd.f32 %v1044, %v1256
    %1258 = vmatprep.mubr.bf16.mxu0 0
    %1259 = vmatmul.mubr.bf16.gmra.mrb[0].mxu0 %v462
    %v1260 = vpop.f32.mrb[0].mxu0
    %v1261 = vadd.f32 %v1048, %v1260
    %v1262 = vpop.f32.mrb[0].mxu0
    %v1263 = vadd.f32 %v1050, %v1262
    %v1264 = vpop.f32.mrb[0].mxu0
    %v1265 = vadd.f32 %v1052, %v1264
    %v1266 = vpop.f32.mrb[0].mxu0
    %v1267 = vadd.f32 %v1054, %v1266
    %1268 = vmatprep.mubr.bf16.mxu0 0
    %1269 = vmatmul.mubr.bf16.gmra.mrb[0].mxu0 %v465
    %v1270 = vpop.f32.mrb[0].mxu0
    %v1271 = vadd.f32 %v1058, %v1270
    %v1272 = vpop.f32.mrb[0].mxu0
    %v1273 = vadd.f32 %v1060, %v1272
    %v1274 = vpop.f32.mrb[0].mxu0
    %v1275 = vadd.f32 %v1062, %v1274
    %v1276 = vpop.f32.mrb[0].mxu0
    %v1277 = vadd.f32 %v1064, %v1276
    %1278 = vmatprep.mubr.bf16.mxu0 0
    %1279 = vmatmul.mubr.bf16.gmra.mrb[0].mxu0 %v468
    %v1280 = vpop.f32.mrb[0].mxu0
    %v1281 = vadd.f32 %v1068, %v1280
    %v1282 = vpop.f32.mrb[0].mxu0
    %v1283 = vadd.f32 %v1070, %v1282
    %v1284 = vpop.f32.mrb[0].mxu0
    %v1285 = vadd.f32 %v1072, %v1284
    %v1286 = vpop.f32.mrb[0].mxu0
    %v1287 = vadd.f32 %v1074, %v1286
    %1288 = vmatprep.mubr.bf16.mxu0 0
    %1289 = vmatmul.mubr.bf16.gmra.mrb[0].mxu0 %v471
    %v1290 = vpop.f32.mrb[0].mxu0
    %v1291 = vadd.f32 %v1078, %v1290
    %v1292 = vpop.f32.mrb[0].mxu0
    %v1293 = vadd.f32 %v1080, %v1292
    %v1294 = vpop.f32.mrb[0].mxu0
    %v1295 = vadd.f32 %v1082, %v1294
    %v1296 = vpop.f32.mrb[0].mxu0
    %v1297 = vadd.f32 %v1084, %v1296
    %1298 = vmatprep.mubr.bf16.mxu0 0
    %1299 = vmatmul.mubr.bf16.gmra.mrb[0].mxu0 %v474
    %v1300 = vpop.f32.mrb[0].mxu0
    %v1301 = vadd.f32 %v1088, %v1300
    %v1302 = vpop.f32.mrb[0].mxu0
    %v1303 = vadd.f32 %v1090, %v1302
    %v1304 = vpop.f32.mrb[0].mxu0
    %v1305 = vadd.f32 %v1092, %v1304
    %v1306 = vpop.f32.mrb[0].mxu0
    %v1307 = vadd.f32 %v1094, %v1306
    %1308 = vdwg.mxu0
    %s1309 = scalar_lea.vmem %s4, 2
    %v1310 = vld [vmem:[%s1309] sm:$0x3]
    %v1312 = vlaneseq
    %v1313 = vshrl.u32 %v1312, 7
    %v1314 = vsub.s32 0, %v1313
    %v1315 = vrot.slane %v1310, %v1314
    %v1316 = vlaneseq
    %v1317 = vshrl.u32 %v1316, 7
    %v1318 = vsub.s32 1, %v1317
    %v1319 = vrot.slane %v1310, %v1318
    %v1322 = vadd.f32 %v1151, %v1315
    %v1323 = vadd.f32 %v1153, %v1319
    %v1324 = vadd.f32 %v1155, %v1315
    %v1325 = vadd.f32 %v1157, %v1319
    %v1326 = vadd.f32 %v1161, %v1315
    %v1327 = vadd.f32 %v1163, %v1319
    %v1328 = vadd.f32 %v1165, %v1315
    %v1329 = vadd.f32 %v1167, %v1319
    %v1330 = vadd.f32 %v1171, %v1315
    %v1331 = vadd.f32 %v1173, %v1319
    %v1332 = vadd.f32 %v1175, %v1315
    %v1333 = vadd.f32 %v1177, %v1319
    %v1334 = vadd.f32 %v1181, %v1315
    %v1335 = vadd.f32 %v1183, %v1319
    %v1336 = vadd.f32 %v1185, %v1315
    %v1337 = vadd.f32 %v1187, %v1319
    %v1338 = vadd.f32 %v1191, %v1315
    %v1339 = vadd.f32 %v1193, %v1319
    %v1340 = vadd.f32 %v1195, %v1315
    %v1341 = vadd.f32 %v1197, %v1319
    %v1342 = vadd.f32 %v1201, %v1315
    %v1343 = vadd.f32 %v1203, %v1319
    %v1344 = vadd.f32 %v1205, %v1315
    %v1345 = vadd.f32 %v1207, %v1319
    %v1346 = vadd.f32 %v1211, %v1315
    %v1347 = vadd.f32 %v1213, %v1319
    %v1348 = vadd.f32 %v1215, %v1315
    %v1349 = vadd.f32 %v1217, %v1319
    %v1350 = vadd.f32 %v1221, %v1315
    %v1351 = vadd.f32 %v1223, %v1319
    %v1352 = vadd.f32 %v1225, %v1315
    %v1353 = vadd.f32 %v1227, %v1319
    %v1354 = vadd.f32 %v1231, %v1315
    %v1355 = vadd.f32 %v1233, %v1319
    %v1356 = vadd.f32 %v1235, %v1315
    %v1357 = vadd.f32 %v1237, %v1319
    %v1358 = vadd.f32 %v1241, %v1315
    %v1359 = vadd.f32 %v1243, %v1319
    %v1360 = vadd.f32 %v1245, %v1315
    %v1361 = vadd.f32 %v1247, %v1319
    %v1362 = vadd.f32 %v1251, %v1315
    %v1363 = vadd.f32 %v1253, %v1319
    %v1364 = vadd.f32 %v1255, %v1315
    %v1365 = vadd.f32 %v1257, %v1319
    %v1366 = vadd.f32 %v1261, %v1315
    %v1367 = vadd.f32 %v1263, %v1319
    %v1368 = vadd.f32 %v1265, %v1315
    %v1369 = vadd.f32 %v1267, %v1319
    %v1370 = vadd.f32 %v1271, %v1315
    %v1371 = vadd.f32 %v1273, %v1319
    %v1372 = vadd.f32 %v1275, %v1315
    %v1373 = vadd.f32 %v1277, %v1319
    %v1374 = vadd.f32 %v1281, %v1315
    %v1375 = vadd.f32 %v1283, %v1319
    %v1376 = vadd.f32 %v1285, %v1315
    %v1377 = vadd.f32 %v1287, %v1319
    %v1378 = vadd.f32 %v1291, %v1315
    %v1379 = vadd.f32 %v1293, %v1319
    %v1380 = vadd.f32 %v1295, %v1315
    %v1381 = vadd.f32 %v1297, %v1319
    %v1382 = vadd.f32 %v1301, %v1315
    %v1383 = vadd.f32 %v1303, %v1319
    %v1384 = vadd.f32 %v1305, %v1315
    %v1385 = vadd.f32 %v1307, %v1319
    %v1386 = vmax.f32 %v1322, 0.0
    %v1387 = vmax.f32 %v1323, 0.0
    %v1388 = vmax.f32 %v1324, 0.0
    %v1389 = vmax.f32 %v1325, 0.0
    %v1390 = vmax.f32 %v1326, 0.0
    %v1391 = vmax.f32 %v1327, 0.0
    %v1392 = vmax.f32 %v1328, 0.0
    %v1393 = vmax.f32 %v1329, 0.0
    %v1394 = vmax.f32 %v1330, 0.0
    %v1395 = vmax.f32 %v1331, 0.0
    %v1396 = vmax.f32 %v1332, 0.0
    %v1397 = vmax.f32 %v1333, 0.0
    %v1398 = vmax.f32 %v1334, 0.0
    %v1399 = vmax.f32 %v1335, 0.0
    %v1400 = vmax.f32 %v1336, 0.0
    %v1401 = vmax.f32 %v1337, 0.0
    %v1402 = vmax.f32 %v1338, 0.0
    %v1403 = vmax.f32 %v1339, 0.0
    %v1404 = vmax.f32 %v1340, 0.0
    %v1405 = vmax.f32 %v1341, 0.0
    %v1406 = vmax.f32 %v1342, 0.0
    %v1407 = vmax.f32 %v1343, 0.0
    %v1408 = vmax.f32 %v1344, 0.0
    %v1409 = vmax.f32 %v1345, 0.0
    %v1410 = vmax.f32 %v1346, 0.0
    %v1411 = vmax.f32 %v1347, 0.0
    %v1412 = vmax.f32 %v1348, 0.0
    %v1413 = vmax.f32 %v1349, 0.0
    %v1414 = vmax.f32 %v1350, 0.0
    %v1415 = vmax.f32 %v1351, 0.0
    %v1416 = vmax.f32 %v1352, 0.0
    %v1417 = vmax.f32 %v1353, 0.0
    %v1418 = vmax.f32 %v1354, 0.0
    %v1419 = vmax.f32 %v1355, 0.0
    %v1420 = vmax.f32 %v1356, 0.0
    %v1421 = vmax.f32 %v1357, 0.0
    %v1422 = vmax.f32 %v1358, 0.0
    %v1423 = vmax.f32 %v1359, 0.0
    %v1424 = vmax.f32 %v1360, 0.0
    %v1425 = vmax.f32 %v1361, 0.0
    %v1426 = vmax.f32 %v1362, 0.0
    %v1427 = vmax.f32 %v1363, 0.0
    %v1428 = vmax.f32 %v1364, 0.0
    %v1429 = vmax.f32 %v1365, 0.0
    %v1430 = vmax.f32 %v1366, 0.0
    %v1431 = vmax.f32 %v1367, 0.0
    %v1432 = vmax.f32 %v1368, 0.0
    %v1433 = vmax.f32 %v1369, 0.0
    %v1434 = vmax.f32 %v1370, 0.0
    %v1435 = vmax.f32 %v1371, 0.0
    %v1436 = vmax.f32 %v1372, 0.0
    %v1437 = vmax.f32 %v1373, 0.0
    %v1438 = vmax.f32 %v1374, 0.0
    %v1439 = vmax.f32 %v1375, 0.0
    %v1440 = vmax.f32 %v1376, 0.0
    %v1441 = vmax.f32 %v1377, 0.0
    %v1442 = vmax.f32 %v1378, 0.0
    %v1443 = vmax.f32 %v1379, 0.0
    %v1444 = vmax.f32 %v1380, 0.0
    %v1445 = vmax.f32 %v1381, 0.0
    %v1446 = vmax.f32 %v1382, 0.0
    %v1447 = vmax.f32 %v1383, 0.0
    %v1448 = vmax.f32 %v1384, 0.0
    %v1449 = vmax.f32 %v1385, 0.0
    %v1450 = vpack.c.bf16 %v1388, %v1386
    %v1451 = vpack.c.bf16 %v1389, %v1387
    %v1452 = vpack.c.bf16 %v1392, %v1390
    %v1453 = vpack.c.bf16 %v1393, %v1391
    %v1454 = vpack.c.bf16 %v1396, %v1394
    %v1455 = vpack.c.bf16 %v1397, %v1395
    %v1456 = vpack.c.bf16 %v1400, %v1398
    %v1457 = vpack.c.bf16 %v1401, %v1399
    %v1458 = vpack.c.bf16 %v1404, %v1402
    %v1459 = vpack.c.bf16 %v1405, %v1403
    %v1460 = vpack.c.bf16 %v1408, %v1406
    %v1461 = vpack.c.bf16 %v1409, %v1407
    %v1462 = vpack.c.bf16 %v1412, %v1410
    %v1463 = vpack.c.bf16 %v1413, %v1411
    %v1464 = vpack.c.bf16 %v1416, %v1414
    %v1465 = vpack.c.bf16 %v1417, %v1415
    %v1466 = vpack.c.bf16 %v1420, %v1418
    %v1467 = vpack.c.bf16 %v1421, %v1419
    %v1468 = vpack.c.bf16 %v1424, %v1422
    %v1469 = vpack.c.bf16 %v1425, %v1423
    %v1470 = vpack.c.bf16 %v1428, %v1426
    %v1471 = vpack.c.bf16 %v1429, %v1427
    %v1472 = vpack.c.bf16 %v1432, %v1430
    %v1473 = vpack.c.bf16 %v1433, %v1431
    %v1474 = vpack.c.bf16 %v1436, %v1434
    %v1475 = vpack.c.bf16 %v1437, %v1435
    %v1476 = vpack.c.bf16 %v1440, %v1438
    %v1477 = vpack.c.bf16 %v1441, %v1439
    %v1478 = vpack.c.bf16 %v1444, %v1442
    %v1479 = vpack.c.bf16 %v1445, %v1443
    %v1480 = vpack.c.bf16 %v1448, %v1446
    %v1481 = vpack.c.bf16 %v1449, %v1447
    %s1482 = scalar_lea.vmem %s5, 128
    %v1483 = vld [vmem:[%s1482] sm:$0xf]
    %v1484 = vld [vmem:[%s1482 + $0x4] sm:$0xf]
    %v1485 = vld [vmem:[%s1482 + $0x8] sm:$0xf]
    %v1486 = vld [vmem:[%s1482 + $0xc] sm:$0xf]
    %v1487 = vld [vmem:[%s1482 + $0x10] sm:$0xf]
    %v1488 = vld [vmem:[%s1482 + $0x14] sm:$0xf]
    %v1489 = vld [vmem:[%s1482 + $0x18] sm:$0xf]
    %v1490 = vld [vmem:[%s1482 + $0x1c] sm:$0xf]
    %v1491 = vld [vmem:[%s1482 + $0x20] sm:$0xf]
    %v1492 = vld [vmem:[%s1482 + $0x24] sm:$0xf]
    %v1493 = vld [vmem:[%s1482 + $0x28] sm:$0xf]
    %v1494 = vld [vmem:[%s1482 + $0x2c] sm:$0xf]
    %v1495 = vld [vmem:[%s1482 + $0x30] sm:$0xf]
    %v1496 = vld [vmem:[%s1482 + $0x34] sm:$0xf]
    %v1497 = vld [vmem:[%s1482 + $0x38] sm:$0xf]
    %v1498 = vld [vmem:[%s1482 + $0x3c] sm:$0xf]
    %v1499 = vld [vmem:[%s1482 + $0x40] sm:$0xf]
    %v1500 = vld [vmem:[%s1482 + $0x44] sm:$0xf]
    %v1501 = vld [vmem:[%s1482 + $0x48] sm:$0xf]
    %v1502 = vld [vmem:[%s1482 + $0x4c] sm:$0xf]
    %v1503 = vld [vmem:[%s1482 + $0x50] sm:$0xf]
    %v1504 = vld [vmem:[%s1482 + $0x54] sm:$0xf]
    %v1505 = vld [vmem:[%s1482 + $0x58] sm:$0xf]
    %v1506 = vld [vmem:[%s1482 + $0x5c] sm:$0xf]
    %v1507 = vld [vmem:[%s1482 + $0x60] sm:$0xf]
    %v1508 = vld [vmem:[%s1482 + $0x64] sm:$0xf]
    %v1509 = vld [vmem:[%s1482 + $0x68] sm:$0xf]
    %v1510 = vld [vmem:[%s1482 + $0x6c] sm:$0xf]
    %v1511 = vld [vmem:[%s1482 + $0x70] sm:$0xf]
    %v1512 = vld [vmem:[%s1482 + $0x74] sm:$0xf]
    %v1513 = vld [vmem:[%s1482 + $0x78] sm:$0xf]
    %v1514 = vld [vmem:[%s1482 + $0x7c] sm:$0xf]
    %v1547 = vunpack.c.l.b16 %v1483
    %v1548 = vunpack.c.l.b16 %v1484
    %v1549 = vunpack.c.l.b16 %v1485
    %v1550 = vunpack.c.l.b16 %v1486
    %v1551 = vunpack.c.l.b16 %v1487
    %v1552 = vunpack.c.l.b16 %v1488
    %v1553 = vunpack.c.l.b16 %v1489
    %v1554 = vunpack.c.l.b16 %v1490
    %v1555 = vunpack.c.l.b16 %v1491
    %v1556 = vunpack.c.l.b16 %v1492
    %v1557 = vunpack.c.l.b16 %v1493
    %v1558 = vunpack.c.l.b16 %v1494
    %v1559 = vunpack.c.l.b16 %v1495
    %v1560 = vunpack.c.l.b16 %v1496
    %v1561 = vunpack.c.l.b16 %v1497
    %v1562 = vunpack.c.l.b16 %v1498
    %v1563 = vunpack.c.l.b16 %v1499
    %v1564 = vunpack.c.l.b16 %v1500
    %v1565 = vunpack.c.l.b16 %v1501
    %v1566 = vunpack.c.l.b16 %v1502
    %v1567 = vunpack.c.l.b16 %v1503
    %v1568 = vunpack.c.l.b16 %v1504
    %v1569 = vunpack.c.l.b16 %v1505
    %v1570 = vunpack.c.l.b16 %v1506
    %v1571 = vunpack.c.l.b16 %v1507
    %v1572 = vunpack.c.l.b16 %v1508
    %v1573 = vunpack.c.l.b16 %v1509
    %v1574 = vunpack.c.l.b16 %v1510
    %v1575 = vunpack.c.l.b16 %v1511
    %v1576 = vunpack.c.l.b16 %v1512
    %v1577 = vunpack.c.l.b16 %v1513
    %v1578 = vunpack.c.l.b16 %v1514
    %v1579 = vpack.c.b16 %v1548, %v1547
    %v1580 = vpack.c.b16 %v1550, %v1549
    %v1581 = vpack.c.b16 %v1552, %v1551
    %v1582 = vpack.c.b16 %v1554, %v1553
    %v1583 = vpack.c.b16 %v1556, %v1555
    %v1584 = vpack.c.b16 %v1558, %v1557
    %v1585 = vpack.c.b16 %v1560, %v1559
    %v1586 = vpack.c.b16 %v1562, %v1561
    %v1587 = vpack.c.b16 %v1564, %v1563
    %v1588 = vpack.c.b16 %v1566, %v1565
    %v1589 = vpack.c.b16 %v1568, %v1567
    %v1590 = vpack.c.b16 %v1570, %v1569
    %v1591 = vpack.c.b16 %v1572, %v1571
    %v1592 = vpack.c.b16 %v1574, %v1573
    %v1593 = vpack.c.b16 %v1576, %v1575
    %v1594 = vpack.c.b16 %v1578, %v1577
    %1611 = vmatprep.subr.bf16.mxu0 0
    %1612 = vmatpush1.bf16.msra.mxu0 %v1579
    %1613 = vmatprep.subr.bf16.mxu0 0
    %1614 = vmatpush1.bf16.msra.mxu0 %v1580
    %1615 = vmatprep.subr.bf16.mxu0 0
    %1616 = vmatpush1.bf16.msra.mxu0 %v1581
    %1617 = vmatprep.subr.bf16.mxu0 0
    %1618 = vmatpush1.bf16.msra.mxu0 %v1582
    %1619 = vmatprep.subr.bf16.mxu0 0
    %1620 = vmatpush1.bf16.msra.mxu0 %v1583
    %1621 = vmatprep.subr.bf16.mxu0 0
    %1622 = vmatpush1.bf16.msra.mxu0 %v1584
    %1623 = vmatprep.subr.bf16.mxu0 0
    %1624 = vmatpush1.bf16.msra.mxu0 %v1585
    %1625 = vmatprep.subr.bf16.mxu0 0
    %1626 = vmatpush1.bf16.msra.mxu0 %v1586
    %1627 = vmatprep.subr.bf16.mxu0 0
    %1628 = vmatpush1.bf16.msra.mxu0 %v1587
    %1629 = vmatprep.subr.bf16.mxu0 0
    %1630 = vmatpush1.bf16.msra.mxu0 %v1588
    %1631 = vmatprep.subr.bf16.mxu0 0
    %1632 = vmatpush1.bf16.msra.mxu0 %v1589
    %1633 = vmatprep.subr.bf16.mxu0 0
    %1634 = vmatpush1.bf16.msra.mxu0 %v1590
    %1635 = vmatprep.subr.bf16.mxu0 0
    %1636 = vmatpush1.bf16.msra.mxu0 %v1591
    %1637 = vmatprep.subr.bf16.mxu0 0
    %1638 = vmatpush1.bf16.msra.mxu0 %v1592
    %1639 = vmatprep.subr.bf16.mxu0 0
    %1640 = vmatpush1.bf16.msra.mxu0 %v1593
    %1641 = vmatprep.subr.bf16.mxu0 0
    %1642 = vmatpush1.bf16.msra.mxu0 %v1594
    %1643 = vmatprep.mubr.bf16.mxu0 %v1451
    %1644 = vmatmul.mubr.bf16.gmra.mrb[0].mxu0 %v1450
    %v1645 = vpop.f32.mrb[0].mxu0
    %v1646 = vadd.f32 0.0, %v1645
    %v1647 = vpop.f32.mrb[0].mxu0
    %v1648 = vpop.f32.mrb[0].mxu0
    %v1649 = vadd.f32 0.0, %v1648
    %v1650 = vpop.f32.mrb[0].mxu0
    %1651 = vmatprep.mubr.bf16.mxu0 %v1453
    %1652 = vmatmul.mubr.bf16.gmra.mrb[0].mxu0 %v1452
    %v1653 = vpop.f32.mrb[0].mxu0
    %v1654 = vadd.f32 0.0, %v1653
    %v1655 = vpop.f32.mrb[0].mxu0
    %v1656 = vpop.f32.mrb[0].mxu0
    %v1657 = vadd.f32 0.0, %v1656
    %v1658 = vpop.f32.mrb[0].mxu0
    %1659 = vmatprep.mubr.bf16.mxu0 %v1455
    %1660 = vmatmul.mubr.bf16.gmra.mrb[0].mxu0 %v1454
    %v1661 = vpop.f32.mrb[0].mxu0
    %v1662 = vadd.f32 0.0, %v1661
    %v1663 = vpop.f32.mrb[0].mxu0
    %v1664 = vpop.f32.mrb[0].mxu0
    %v1665 = vadd.f32 0.0, %v1664
    %v1666 = vpop.f32.mrb[0].mxu0
    %1667 = vmatprep.mubr.bf16.mxu0 %v1457
    %1668 = vmatmul.mubr.bf16.gmra.mrb[0].mxu0 %v1456
    %v1669 = vpop.f32.mrb[0].mxu0
    %v1670 = vadd.f32 0.0, %v1669
    %v1671 = vpop.f32.mrb[0].mxu0
    %v1672 = vpop.f32.mrb[0].mxu0
    %v1673 = vadd.f32 0.0, %v1672
    %v1674 = vpop.f32.mrb[0].mxu0
    %1675 = vmatprep.mubr.bf16.mxu0 %v1459
    %1676 = vmatmul.mubr.bf16.gmra.mrb[0].mxu0 %v1458
    %v1677 = vpop.f32.mrb[0].mxu0
    %v1678 = vadd.f32 0.0, %v1677
    %v1679 = vpop.f32.mrb[0].mxu0
    %v1680 = vpop.f32.mrb[0].mxu0
    %v1681 = vadd.f32 0.0, %v1680
    %v1682 = vpop.f32.mrb[0].mxu0
    %1683 = vmatprep.mubr.bf16.mxu0 %v1461
    %1684 = vmatmul.mubr.bf16.gmra.mrb[0].mxu0 %v1460
    %v1685 = vpop.f32.mrb[0].mxu0
    %v1686 = vadd.f32 0.0, %v1685
    %v1687 = vpop.f32.mrb[0].mxu0
    %v1688 = vpop.f32.mrb[0].mxu0
    %v1689 = vadd.f32 0.0, %v1688
    %v1690 = vpop.f32.mrb[0].mxu0
    %1691 = vmatprep.mubr.bf16.mxu0 %v1463
    %1692 = vmatmul.mubr.bf16.gmra.mrb[0].mxu0 %v1462
    %v1693 = vpop.f32.mrb[0].mxu0
    %v1694 = vadd.f32 0.0, %v1693
    %v1695 = vpop.f32.mrb[0].mxu0
    %v1696 = vpop.f32.mrb[0].mxu0
    %v1697 = vadd.f32 0.0, %v1696
    %v1698 = vpop.f32.mrb[0].mxu0
    %1699 = vmatprep.mubr.bf16.mxu0 %v1465
    %1700 = vmatmul.mubr.bf16.gmra.mrb[0].mxu0 %v1464
    %v1701 = vpop.f32.mrb[0].mxu0
    %v1702 = vadd.f32 0.0, %v1701
    %v1703 = vpop.f32.mrb[0].mxu0
    %v1704 = vpop.f32.mrb[0].mxu0
    %v1705 = vadd.f32 0.0, %v1704
    %v1706 = vpop.f32.mrb[0].mxu0
    %1707 = vmatprep.mubr.bf16.mxu0 %v1467
    %1708 = vmatmul.mubr.bf16.gmra.mrb[0].mxu0 %v1466
    %v1709 = vpop.f32.mrb[0].mxu0
    %v1710 = vadd.f32 0.0, %v1709
    %v1711 = vpop.f32.mrb[0].mxu0
    %v1712 = vpop.f32.mrb[0].mxu0
    %v1713 = vadd.f32 0.0, %v1712
    %v1714 = vpop.f32.mrb[0].mxu0
    %1715 = vmatprep.mubr.bf16.mxu0 %v1469
    %1716 = vmatmul.mubr.bf16.gmra.mrb[0].mxu0 %v1468
    %v1717 = vpop.f32.mrb[0].mxu0
    %v1718 = vadd.f32 0.0, %v1717
    %v1719 = vpop.f32.mrb[0].mxu0
    %v1720 = vpop.f32.mrb[0].mxu0
    %v1721 = vadd.f32 0.0, %v1720
    %v1722 = vpop.f32.mrb[0].mxu0
    %1723 = vmatprep.mubr.bf16.mxu0 %v1471
    %1724 = vmatmul.mubr.bf16.gmra.mrb[0].mxu0 %v1470
    %v1725 = vpop.f32.mrb[0].mxu0
    %v1726 = vadd.f32 0.0, %v1725
    %v1727 = vpop.f32.mrb[0].mxu0
    %v1728 = vpop.f32.mrb[0].mxu0
    %v1729 = vadd.f32 0.0, %v1728
    %v1730 = vpop.f32.mrb[0].mxu0
    %1731 = vmatprep.mubr.bf16.mxu0 %v1473
    %1732 = vmatmul.mubr.bf16.gmra.mrb[0].mxu0 %v1472
    %v1733 = vpop.f32.mrb[0].mxu0
    %v1734 = vadd.f32 0.0, %v1733
    %v1735 = vpop.f32.mrb[0].mxu0
    %v1736 = vpop.f32.mrb[0].mxu0
    %v1737 = vadd.f32 0.0, %v1736
    %v1738 = vpop.f32.mrb[0].mxu0
    %1739 = vmatprep.mubr.bf16.mxu0 %v1475
    %1740 = vmatmul.mubr.bf16.gmra.mrb[0].mxu0 %v1474
    %v1741 = vpop.f32.mrb[0].mxu0
    %v1742 = vadd.f32 0.0, %v1741
    %v1743 = vpop.f32.mrb[0].mxu0
    %v1744 = vpop.f32.mrb[0].mxu0
    %v1745 = vadd.f32 0.0, %v1744
    %v1746 = vpop.f32.mrb[0].mxu0
    %1747 = vmatprep.mubr.bf16.mxu0 %v1477
    %1748 = vmatmul.mubr.bf16.gmra.mrb[0].mxu0 %v1476
    %v1749 = vpop.f32.mrb[0].mxu0
    %v1750 = vadd.f32 0.0, %v1749
    %v1751 = vpop.f32.mrb[0].mxu0
    %v1752 = vpop.f32.mrb[0].mxu0
    %v1753 = vadd.f32 0.0, %v1752
    %v1754 = vpop.f32.mrb[0].mxu0
    %1755 = vmatprep.mubr.bf16.mxu0 %v1479
    %1756 = vmatmul.mubr.bf16.gmra.mrb[0].mxu0 %v1478
    %v1757 = vpop.f32.mrb[0].mxu0
    %v1758 = vadd.f32 0.0, %v1757
    %v1759 = vpop.f32.mrb[0].mxu0
    %v1760 = vpop.f32.mrb[0].mxu0
    %v1761 = vadd.f32 0.0, %v1760
    %v1762 = vpop.f32.mrb[0].mxu0
    %1763 = vmatprep.mubr.bf16.mxu0 %v1481
    %1764 = vmatmul.mubr.bf16.gmra.mrb[0].mxu0 %v1480
    %v1765 = vpop.f32.mrb[0].mxu0
    %v1766 = vadd.f32 0.0, %v1765
    %v1767 = vpop.f32.mrb[0].mxu0
    %v1768 = vpop.f32.mrb[0].mxu0
    %v1769 = vadd.f32 0.0, %v1768
    %v1770 = vpop.f32.mrb[0].mxu0
    %1771 = vdwg.mxu0
    %v1804 = vunpack.c.l.b16 %v841
    %v1805 = vunpack.c.l.b16 %v842
    %v1806 = vunpack.c.l.b16 %v843
    %v1807 = vunpack.c.l.b16 %v844
    %v1808 = vunpack.c.l.b16 %v845
    %v1809 = vunpack.c.l.b16 %v846
    %v1810 = vunpack.c.l.b16 %v847
    %v1811 = vunpack.c.l.b16 %v848
    %v1812 = vunpack.c.l.b16 %v849
    %v1813 = vunpack.c.l.b16 %v850
    %v1814 = vunpack.c.l.b16 %v851
    %v1815 = vunpack.c.l.b16 %v852
    %v1816 = vunpack.c.l.b16 %v853
    %v1817 = vunpack.c.l.b16 %v854
    %v1818 = vunpack.c.l.b16 %v855
    %v1819 = vunpack.c.l.b16 %v856
    %v1820 = vunpack.c.l.b16 %v857
    %v1821 = vunpack.c.l.b16 %v858
    %v1822 = vunpack.c.l.b16 %v859
    %v1823 = vunpack.c.l.b16 %v860
    %v1824 = vunpack.c.l.b16 %v861
    %v1825 = vunpack.c.l.b16 %v862
    %v1826 = vunpack.c.l.b16 %v863
    %v1827 = vunpack.c.l.b16 %v864
    %v1828 = vunpack.c.l.b16 %v865
    %v1829 = vunpack.c.l.b16 %v866
    %v1830 = vunpack.c.l.b16 %v867
    %v1831 = vunpack.c.l.b16 %v868
    %v1832 = vunpack.c.l.b16 %v869
    %v1833 = vunpack.c.l.b16 %v870
    %v1834 = vunpack.c.l.b16 %v871
    %v1835 = vunpack.c.l.b16 %v872
    %v1836 = vpack.c.b16 %v1805, %v1804
    %v1837 = vpack.c.b16 %v1807, %v1806
    %v1838 = vpack.c.b16 %v1809, %v1808
    %v1839 = vpack.c.b16 %v1811, %v1810
    %v1840 = vpack.c.b16 %v1813, %v1812
    %v1841 = vpack.c.b16 %v1815, %v1814
    %v1842 = vpack.c.b16 %v1817, %v1816
    %v1843 = vpack.c.b16 %v1819, %v1818
    %v1844 = vpack.c.b16 %v1821, %v1820
    %v1845 = vpack.c.b16 %v1823, %v1822
    %v1846 = vpack.c.b16 %v1825, %v1824
    %v1847 = vpack.c.b16 %v1827, %v1826
    %v1848 = vpack.c.b16 %v1829, %v1828
    %v1849 = vpack.c.b16 %v1831, %v1830
    %v1850 = vpack.c.b16 %v1833, %v1832
    %v1851 = vpack.c.b16 %v1835, %v1834
    %1868 = vmatprep.subr.bf16.mxu0 0
    %1869 = vmatpush1.bf16.msra.mxu0 %v1836
    %1870 = vmatprep.subr.bf16.mxu0 0
    %1871 = vmatpush1.bf16.msra.mxu0 %v1837
    %1872 = vmatprep.subr.bf16.mxu0 0
    %1873 = vmatpush1.bf16.msra.mxu0 %v1838
    %1874 = vmatprep.subr.bf16.mxu0 0
    %1875 = vmatpush1.bf16.msra.mxu0 %v1839
    %1876 = vmatprep.subr.bf16.mxu0 0
    %1877 = vmatpush1.bf16.msra.mxu0 %v1840
    %1878 = vmatprep.subr.bf16.mxu0 0
    %1879 = vmatpush1.bf16.msra.mxu0 %v1841
    %1880 = vmatprep.subr.bf16.mxu0 0
    %1881 = vmatpush1.bf16.msra.mxu0 %v1842
    %1882 = vmatprep.subr.bf16.mxu0 0
    %1883 = vmatpush1.bf16.msra.mxu0 %v1843
    %1884 = vmatprep.subr.bf16.mxu0 0
    %1885 = vmatpush1.bf16.msra.mxu0 %v1844
    %1886 = vmatprep.subr.bf16.mxu0 0
    %1887 = vmatpush1.bf16.msra.mxu0 %v1845
    %1888 = vmatprep.subr.bf16.mxu0 0
    %1889 = vmatpush1.bf16.msra.mxu0 %v1846
    %1890 = vmatprep.subr.bf16.mxu0 0
    %1891 = vmatpush1.bf16.msra.mxu0 %v1847
    %1892 = vmatprep.subr.bf16.mxu0 0
    %1893 = vmatpush1.bf16.msra.mxu0 %v1848
    %1894 = vmatprep.subr.bf16.mxu0 0
    %1895 = vmatpush1.bf16.msra.mxu0 %v1849
    %1896 = vmatprep.subr.bf16.mxu0 0
    %1897 = vmatpush1.bf16.msra.mxu0 %v1850
    %1898 = vmatprep.subr.bf16.mxu0 0
    %1899 = vmatpush1.bf16.msra.mxu0 %v1851
    %1900 = vmatprep.mubr.bf16.mxu0 %v810
    %1901 = vmatmul.mubr.bf16.gmra.mrb[0].mxu0 %v809
    %v1902 = vpop.f32.mrb[0].mxu0
    %v1903 = vadd.f32 %v1646, %v1902
    %v1904 = vpop.f32.mrb[0].mxu0
    %v1905 = vpop.f32.mrb[0].mxu0
    %v1906 = vadd.f32 %v1649, %v1905
    %v1907 = vpop.f32.mrb[0].mxu0
    %1908 = vmatprep.mubr.bf16.mxu0 %v812
    %1909 = vmatmul.mubr.bf16.gmra.mrb[0].mxu0 %v811
    %v1910 = vpop.f32.mrb[0].mxu0
    %v1911 = vadd.f32 %v1654, %v1910
    %v1912 = vpop.f32.mrb[0].mxu0
    %v1913 = vpop.f32.mrb[0].mxu0
    %v1914 = vadd.f32 %v1657, %v1913
    %v1915 = vpop.f32.mrb[0].mxu0
    %1916 = vmatprep.mubr.bf16.mxu0 %v814
    %1917 = vmatmul.mubr.bf16.gmra.mrb[0].mxu0 %v813
    %v1918 = vpop.f32.mrb[0].mxu0
    %v1919 = vadd.f32 %v1662, %v1918
    %v1920 = vpop.f32.mrb[0].mxu0
    %v1921 = vpop.f32.mrb[0].mxu0
    %v1922 = vadd.f32 %v1665, %v1921
    %v1923 = vpop.f32.mrb[0].mxu0
    %1924 = vmatprep.mubr.bf16.mxu0 %v816
    %1925 = vmatmul.mubr.bf16.gmra.mrb[0].mxu0 %v815
    %v1926 = vpop.f32.mrb[0].mxu0
    %v1927 = vadd.f32 %v1670, %v1926
    %v1928 = vpop.f32.mrb[0].mxu0
    %v1929 = vpop.f32.mrb[0].mxu0
    %v1930 = vadd.f32 %v1673, %v1929
    %v1931 = vpop.f32.mrb[0].mxu0
    %1932 = vmatprep.mubr.bf16.mxu0 %v818
    %1933 = vmatmul.mubr.bf16.gmra.mrb[0].mxu0 %v817
    %v1934 = vpop.f32.mrb[0].mxu0
    %v1935 = vadd.f32 %v1678, %v1934
    %v1936 = vpop.f32.mrb[0].mxu0
    %v1937 = vpop.f32.mrb[0].mxu0
    %v1938 = vadd.f32 %v1681, %v1937
    %v1939 = vpop.f32.mrb[0].mxu0
    %1940 = vmatprep.mubr.bf16.mxu0 %v820
    %1941 = vmatmul.mubr.bf16.gmra.mrb[0].mxu0 %v819
    %v1942 = vpop.f32.mrb[0].mxu0
    %v1943 = vadd.f32 %v1686, %v1942
    %v1944 = vpop.f32.mrb[0].mxu0
    %v1945 = vpop.f32.mrb[0].mxu0
    %v1946 = vadd.f32 %v1689, %v1945
    %v1947 = vpop.f32.mrb[0].mxu0
    %1948 = vmatprep.mubr.bf16.mxu0 %v822
    %1949 = vmatmul.mubr.bf16.gmra.mrb[0].mxu0 %v821
    %v1950 = vpop.f32.mrb[0].mxu0
    %v1951 = vadd.f32 %v1694, %v1950
    %v1952 = vpop.f32.mrb[0].mxu0
    %v1953 = vpop.f32.mrb[0].mxu0
    %v1954 = vadd.f32 %v1697, %v1953
    %v1955 = vpop.f32.mrb[0].mxu0
    %1956 = vmatprep.mubr.bf16.mxu0 %v824
    %1957 = vmatmul.mubr.bf16.gmra.mrb[0].mxu0 %v823
    %v1958 = vpop.f32.mrb[0].mxu0
    %v1959 = vadd.f32 %v1702, %v1958
    %v1960 = vpop.f32.mrb[0].mxu0
    %v1961 = vpop.f32.mrb[0].mxu0
    %v1962 = vadd.f32 %v1705, %v1961
    %v1963 = vpop.f32.mrb[0].mxu0
    %1964 = vmatprep.mubr.bf16.mxu0 %v826
    %1965 = vmatmul.mubr.bf16.gmra.mrb[0].mxu0 %v825
    %v1966 = vpop.f32.mrb[0].mxu0
    %v1967 = vadd.f32 %v1710, %v1966
    %v1968 = vpop.f32.mrb[0].mxu0
    %v1969 = vpop.f32.mrb[0].mxu0
    %v1970 = vadd.f32 %v1713, %v1969
    %v1971 = vpop.f32.mrb[0].mxu0
    %1972 = vmatprep.mubr.bf16.mxu0 %v828
    %1973 = vmatmul.mubr.bf16.gmra.mrb[0].mxu0 %v827
    %v1974 = vpop.f32.mrb[0].mxu0
    %v1975 = vadd.f32 %v1718, %v1974
    %v1976 = vpop.f32.mrb[0].mxu0
    %v1977 = vpop.f32.mrb[0].mxu0
    %v1978 = vadd.f32 %v1721, %v1977
    %v1979 = vpop.f32.mrb[0].mxu0
    %1980 = vmatprep.mubr.bf16.mxu0 %v830
    %1981 = vmatmul.mubr.bf16.gmra.mrb[0].mxu0 %v829
    %v1982 = vpop.f32.mrb[0].mxu0
    %v1983 = vadd.f32 %v1726, %v1982
    %v1984 = vpop.f32.mrb[0].mxu0
    %v1985 = vpop.f32.mrb[0].mxu0
    %v1986 = vadd.f32 %v1729, %v1985
    %v1987 = vpop.f32.mrb[0].mxu0
    %1988 = vmatprep.mubr.bf16.mxu0 %v832
    %1989 = vmatmul.mubr.bf16.gmra.mrb[0].mxu0 %v831
    %v1990 = vpop.f32.mrb[0].mxu0
    %v1991 = vadd.f32 %v1734, %v1990
    %v1992 = vpop.f32.mrb[0].mxu0
    %v1993 = vpop.f32.mrb[0].mxu0
    %v1994 = vadd.f32 %v1737, %v1993
    %v1995 = vpop.f32.mrb[0].mxu0
    %1996 = vmatprep.mubr.bf16.mxu0 %v834
    %1997 = vmatmul.mubr.bf16.gmra.mrb[0].mxu0 %v833
    %v1998 = vpop.f32.mrb[0].mxu0
    %v1999 = vadd.f32 %v1742, %v1998
    %v2000 = vpop.f32.mrb[0].mxu0
    %v2001 = vpop.f32.mrb[0].mxu0
    %v2002 = vadd.f32 %v1745, %v2001
    %v2003 = vpop.f32.mrb[0].mxu0
    %2004 = vmatprep.mubr.bf16.mxu0 %v836
    %2005 = vmatmul.mubr.bf16.gmra.mrb[0].mxu0 %v835
    %v2006 = vpop.f32.mrb[0].mxu0
    %v2007 = vadd.f32 %v1750, %v2006
    %v2008 = vpop.f32.mrb[0].mxu0
    %v2009 = vpop.f32.mrb[0].mxu0
    %v2010 = vadd.f32 %v1753, %v2009
    %v2011 = vpop.f32.mrb[0].mxu0
    %2012 = vmatprep.mubr.bf16.mxu0 %v838
    %2013 = vmatmul.mubr.bf16.gmra.mrb[0].mxu0 %v837
    %v2014 = vpop.f32.mrb[0].mxu0
    %v2015 = vadd.f32 %v1758, %v2014
    %v2016 = vpop.f32.mrb[0].mxu0
    %v2017 = vpop.f32.mrb[0].mxu0
    %v2018 = vadd.f32 %v1761, %v2017
    %v2019 = vpop.f32.mrb[0].mxu0
    %2020 = vmatprep.mubr.bf16.mxu0 %v840
    %2021 = vmatmul.mubr.bf16.gmra.mrb[0].mxu0 %v839
    %v2022 = vpop.f32.mrb[0].mxu0
    %v2023 = vadd.f32 %v1766, %v2022
    %v2024 = vpop.f32.mrb[0].mxu0
    %v2025 = vpop.f32.mrb[0].mxu0
    %v2026 = vadd.f32 %v1769, %v2025
    %v2027 = vpop.f32.mrb[0].mxu0
    %2028 = vdwg.mxu0
    %s2029 = scalar_lea.vmem %s2, 16
    %v2030 = vld [vmem:[%s2029] sm:$0xff]
    %v2031 = vld [vmem:[%s2029 + $0x20] sm:$0xff]
    %v2032 = vld [vmem:[%s2029 + $0x40] sm:$0xff]
    %v2033 = vld [vmem:[%s2029 + $0x60] sm:$0xff]
    %s2034 = scalar_lea.vmem [#allocation2], 16
    %v2035 = vld [vmem:[%s2034] sm:$0xff]
    %v2036 = vld [vmem:[%s2034 + $0x20] sm:$0xff]
    %v2037 = vld [vmem:[%s2034 + $0x40] sm:$0xff]
    %v2038 = vld [vmem:[%s2034 + $0x60] sm:$0xff]
    %v2043 = vunpack.c.l.b16 %v2035
    %v2044 = vunpack.c.h.b16 %v2035
    %v2045 = vunpack.c.l.b16 %v2036
    %v2046 = vunpack.c.h.b16 %v2036
    %v2047 = vunpack.c.l.b16 %v2037
    %v2048 = vunpack.c.h.b16 %v2037
    %v2049 = vunpack.c.l.b16 %v2038
    %v2050 = vunpack.c.h.b16 %v2038
    %v2051 = vpack.c.b16 %v2045, %v2043
    %v2052 = vpack.c.b16 %v2046, %v2044
    %v2053 = vpack.c.b16 %v2049, %v2047
    %v2054 = vpack.c.b16 %v2050, %v2048
    %2059 = vmatprep.subr.bf16.mxu0 %v2052
    %2060 = vmatpush1.bf16.msra.mxu0 %v2051
    %2061 = vmatprep.subr.bf16.mxu0 %v2054
    %2062 = vmatpush1.bf16.msra.mxu0 %v2053
    %2063 = vmatprep.subr.bf16.mxu0 0
    %2064 = vmatpush1.bf16.msra.mxu0 0
    %2065 = vmatprep.subr.bf16.mxu0 0
    %2066 = vmatpush1.bf16.msra.mxu0 0
    %2067 = vmatprep.subr.bf16.mxu0 0
    %2068 = vmatpush1.bf16.msra.mxu0 0
    %2069 = vmatprep.subr.bf16.mxu0 0
    %2070 = vmatpush1.bf16.msra.mxu0 0
    %2071 = vmatprep.subr.bf16.mxu0 0
    %2072 = vmatpush1.bf16.msra.mxu0 0
    %2073 = vmatprep.subr.bf16.mxu0 0
    %2074 = vmatpush1.bf16.msra.mxu0 0
    %2075 = vmatprep.subr.bf16.mxu0 0
    %2076 = vmatpush1.bf16.msra.mxu0 0
    %2077 = vmatprep.subr.bf16.mxu0 0
    %2078 = vmatpush1.bf16.msra.mxu0 0
    %2079 = vmatprep.subr.bf16.mxu0 0
    %2080 = vmatpush1.bf16.msra.mxu0 0
    %2081 = vmatprep.subr.bf16.mxu0 0
    %2082 = vmatpush1.bf16.msra.mxu0 0
    %2083 = vmatprep.subr.bf16.mxu0 0
    %2084 = vmatpush1.bf16.msra.mxu0 0
    %2085 = vmatprep.subr.bf16.mxu0 0
    %2086 = vmatpush1.bf16.msra.mxu0 0
    %2087 = vmatprep.subr.bf16.mxu0 0
    %2088 = vmatpush1.bf16.msra.mxu0 0
    %2089 = vmatprep.subr.bf16.mxu0 0
    %2090 = vmatpush1.bf16.msra.mxu0 0
    %2091 = vmatprep.mubr.bf16.mxu0 0
    %2092 = vmatmul.mubr.bf16.gmra.mrb[0].mxu0 %v168
    %v2093 = vpop.f32.mrb[0].mxu0
    %v2094 = vadd.f32 0.0, %v2093
    %v2095 = vpop.f32.mrb[0].mxu0
    %v2096 = vadd.f32 0.0, %v2095
    %v2097 = vpop.f32.mrb[0].mxu0
    %v2098 = vadd.f32 0.0, %v2097
    %v2099 = vpop.f32.mrb[0].mxu0
    %v2100 = vadd.f32 0.0, %v2099
    %2101 = vmatprep.mubr.bf16.mxu0 0
    %2102 = vmatmul.mubr.bf16.gmra.mrb[0].mxu0 %v171
    %v2103 = vpop.f32.mrb[0].mxu0
    %v2104 = vadd.f32 0.0, %v2103
    %v2105 = vpop.f32.mrb[0].mxu0
    %v2106 = vadd.f32 0.0, %v2105
    %v2107 = vpop.f32.mrb[0].mxu0
    %v2108 = vadd.f32 0.0, %v2107
    %v2109 = vpop.f32.mrb[0].mxu0
    %v2110 = vadd.f32 0.0, %v2109
    %2111 = vmatprep.mubr.bf16.mxu0 0
    %2112 = vmatmul.mubr.bf16.gmra.mrb[0].mxu0 %v174
    %v2113 = vpop.f32.mrb[0].mxu0
    %v2114 = vadd.f32 0.0, %v2113
    %v2115 = vpop.f32.mrb[0].mxu0
    %v2116 = vadd.f32 0.0, %v2115
    %v2117 = vpop.f32.mrb[0].mxu0
    %v2118 = vadd.f32 0.0, %v2117
    %v2119 = vpop.f32.mrb[0].mxu0
    %v2120 = vadd.f32 0.0, %v2119
    %2121 = vmatprep.mubr.bf16.mxu0 0
    %2122 = vmatmul.mubr.bf16.gmra.mrb[0].mxu0 %v177
    %v2123 = vpop.f32.mrb[0].mxu0
    %v2124 = vadd.f32 0.0, %v2123
    %v2125 = vpop.f32.mrb[0].mxu0
    %v2126 = vadd.f32 0.0, %v2125
    %v2127 = vpop.f32.mrb[0].mxu0
    %v2128 = vadd.f32 0.0, %v2127
    %v2129 = vpop.f32.mrb[0].mxu0
    %v2130 = vadd.f32 0.0, %v2129
    %2131 = vmatprep.mubr.bf16.mxu0 0
    %2132 = vmatmul.mubr.bf16.gmra.mrb[0].mxu0 %v180
    %v2133 = vpop.f32.mrb[0].mxu0
    %v2134 = vadd.f32 0.0, %v2133
    %v2135 = vpop.f32.mrb[0].mxu0
    %v2136 = vadd.f32 0.0, %v2135
    %v2137 = vpop.f32.mrb[0].mxu0
    %v2138 = vadd.f32 0.0, %v2137
    %v2139 = vpop.f32.mrb[0].mxu0
    %v2140 = vadd.f32 0.0, %v2139
    %2141 = vmatprep.mubr.bf16.mxu0 0
    %2142 = vmatmul.mubr.bf16.gmra.mrb[0].mxu0 %v183
    %v2143 = vpop.f32.mrb[0].mxu0
    %v2144 = vadd.f32 0.0, %v2143
    %v2145 = vpop.f32.mrb[0].mxu0
    %v2146 = vadd.f32 0.0, %v2145
    %v2147 = vpop.f32.mrb[0].mxu0
    %v2148 = vadd.f32 0.0, %v2147
    %v2149 = vpop.f32.mrb[0].mxu0
    %v2150 = vadd.f32 0.0, %v2149
    %2151 = vmatprep.mubr.bf16.mxu0 0
    %2152 = vmatmul.mubr.bf16.gmra.mrb[0].mxu0 %v186
    %v2153 = vpop.f32.mrb[0].mxu0
    %v2154 = vadd.f32 0.0, %v2153
    %v2155 = vpop.f32.mrb[0].mxu0
    %v2156 = vadd.f32 0.0, %v2155
    %v2157 = vpop.f32.mrb[0].mxu0
    %v2158 = vadd.f32 0.0, %v2157
    %v2159 = vpop.f32.mrb[0].mxu0
    %v2160 = vadd.f32 0.0, %v2159
    %2161 = vmatprep.mubr.bf16.mxu0 0
    %2162 = vmatmul.mubr.bf16.gmra.mrb[0].mxu0 %v189
    %v2163 = vpop.f32.mrb[0].mxu0
    %v2164 = vadd.f32 0.0, %v2163
    %v2165 = vpop.f32.mrb[0].mxu0
    %v2166 = vadd.f32 0.0, %v2165
    %v2167 = vpop.f32.mrb[0].mxu0
    %v2168 = vadd.f32 0.0, %v2167
    %v2169 = vpop.f32.mrb[0].mxu0
    %v2170 = vadd.f32 0.0, %v2169
    %2171 = vmatprep.mubr.bf16.mxu0 0
    %2172 = vmatmul.mubr.bf16.gmra.mrb[0].mxu0 %v192
    %v2173 = vpop.f32.mrb[0].mxu0
    %v2174 = vadd.f32 0.0, %v2173
    %v2175 = vpop.f32.mrb[0].mxu0
    %v2176 = vadd.f32 0.0, %v2175
    %v2177 = vpop.f32.mrb[0].mxu0
    %v2178 = vadd.f32 0.0, %v2177
    %v2179 = vpop.f32.mrb[0].mxu0
    %v2180 = vadd.f32 0.0, %v2179
    %2181 = vmatprep.mubr.bf16.mxu0 0
    %2182 = vmatmul.mubr.bf16.gmra.mrb[0].mxu0 %v195
    %v2183 = vpop.f32.mrb[0].mxu0
    %v2184 = vadd.f32 0.0, %v2183
    %v2185 = vpop.f32.mrb[0].mxu0
    %v2186 = vadd.f32 0.0, %v2185
    %v2187 = vpop.f32.mrb[0].mxu0
    %v2188 = vadd.f32 0.0, %v2187
    %v2189 = vpop.f32.mrb[0].mxu0
    %v2190 = vadd.f32 0.0, %v2189
    %2191 = vmatprep.mubr.bf16.mxu0 0
    %2192 = vmatmul.mubr.bf16.gmra.mrb[0].mxu0 %v198
    %v2193 = vpop.f32.mrb[0].mxu0
    %v2194 = vadd.f32 0.0, %v2193
    %v2195 = vpop.f32.mrb[0].mxu0
    %v2196 = vadd.f32 0.0, %v2195
    %v2197 = vpop.f32.mrb[0].mxu0
    %v2198 = vadd.f32 0.0, %v2197
    %v2199 = vpop.f32.mrb[0].mxu0
    %v2200 = vadd.f32 0.0, %v2199
    %2201 = vmatprep.mubr.bf16.mxu0 0
    %2202 = vmatmul.mubr.bf16.gmra.mrb[0].mxu0 %v201
    %v2203 = vpop.f32.mrb[0].mxu0
    %v2204 = vadd.f32 0.0, %v2203
    %v2205 = vpop.f32.mrb[0].mxu0
    %v2206 = vadd.f32 0.0, %v2205
    %v2207 = vpop.f32.mrb[0].mxu0
    %v2208 = vadd.f32 0.0, %v2207
    %v2209 = vpop.f32.mrb[0].mxu0
    %v2210 = vadd.f32 0.0, %v2209
    %2211 = vmatprep.mubr.bf16.mxu0 0
    %2212 = vmatmul.mubr.bf16.gmra.mrb[0].mxu0 %v204
    %v2213 = vpop.f32.mrb[0].mxu0
    %v2214 = vadd.f32 0.0, %v2213
    %v2215 = vpop.f32.mrb[0].mxu0
    %v2216 = vadd.f32 0.0, %v2215
    %v2217 = vpop.f32.mrb[0].mxu0
    %v2218 = vadd.f32 0.0, %v2217
    %v2219 = vpop.f32.mrb[0].mxu0
    %v2220 = vadd.f32 0.0, %v2219
    %2221 = vmatprep.mubr.bf16.mxu0 0
    %2222 = vmatmul.mubr.bf16.gmra.mrb[0].mxu0 %v207
    %v2223 = vpop.f32.mrb[0].mxu0
    %v2224 = vadd.f32 0.0, %v2223
    %v2225 = vpop.f32.mrb[0].mxu0
    %v2226 = vadd.f32 0.0, %v2225
    %v2227 = vpop.f32.mrb[0].mxu0
    %v2228 = vadd.f32 0.0, %v2227
    %v2229 = vpop.f32.mrb[0].mxu0
    %v2230 = vadd.f32 0.0, %v2229
    %2231 = vmatprep.mubr.bf16.mxu0 0
    %2232 = vmatmul.mubr.bf16.gmra.mrb[0].mxu0 %v210
    %v2233 = vpop.f32.mrb[0].mxu0
    %v2234 = vadd.f32 0.0, %v2233
    %v2235 = vpop.f32.mrb[0].mxu0
    %v2236 = vadd.f32 0.0, %v2235
    %v2237 = vpop.f32.mrb[0].mxu0
    %v2238 = vadd.f32 0.0, %v2237
    %v2239 = vpop.f32.mrb[0].mxu0
    %v2240 = vadd.f32 0.0, %v2239
    %2241 = vmatprep.mubr.bf16.mxu0 0
    %2242 = vmatmul.mubr.bf16.gmra.mrb[0].mxu0 %v213
    %v2243 = vpop.f32.mrb[0].mxu0
    %v2244 = vadd.f32 0.0, %v2243
    %v2245 = vpop.f32.mrb[0].mxu0
    %v2246 = vadd.f32 0.0, %v2245
    %v2247 = vpop.f32.mrb[0].mxu0
    %v2248 = vadd.f32 0.0, %v2247
    %v2249 = vpop.f32.mrb[0].mxu0
    %v2250 = vadd.f32 0.0, %v2249
    %2251 = vdwg.mxu0
    %v2256 = vunpack.c.l.b16 %v2030
    %v2257 = vunpack.c.h.b16 %v2030
    %v2258 = vunpack.c.l.b16 %v2031
    %v2259 = vunpack.c.h.b16 %v2031
    %v2260 = vunpack.c.l.b16 %v2032
    %v2261 = vunpack.c.h.b16 %v2032
    %v2262 = vunpack.c.l.b16 %v2033
    %v2263 = vunpack.c.h.b16 %v2033
    %v2264 = vpack.c.b16 %v2258, %v2256
    %v2265 = vpack.c.b16 %v2259, %v2257
    %v2266 = vpack.c.b16 %v2262, %v2260
    %v2267 = vpack.c.b16 %v2263, %v2261
    %2272 = vmatprep.subr.bf16.mxu0 %v2265
    %2273 = vmatpush1.bf16.msra.mxu0 %v2264
    %2274 = vmatprep.subr.bf16.mxu0 %v2267
    %2275 = vmatpush1.bf16.msra.mxu0 %v2266
    %2276 = vmatprep.subr.bf16.mxu0 0
    %2277 = vmatpush1.bf16.msra.mxu0 0
    %2278 = vmatprep.subr.bf16.mxu0 0
    %2279 = vmatpush1.bf16.msra.mxu0 0
    %2280 = vmatprep.subr.bf16.mxu0 0
    %2281 = vmatpush1.bf16.msra.mxu0 0
    %2282 = vmatprep.subr.bf16.mxu0 0
    %2283 = vmatpush1.bf16.msra.mxu0 0
    %2284 = vmatprep.subr.bf16.mxu0 0
    %2285 = vmatpush1.bf16.msra.mxu0 0
    %2286 = vmatprep.subr.bf16.mxu0 0
    %2287 = vmatpush1.bf16.msra.mxu0 0
    %2288 = vmatprep.subr.bf16.mxu0 0
    %2289 = vmatpush1.bf16.msra.mxu0 0
    %2290 = vmatprep.subr.bf16.mxu0 0
    %2291 = vmatpush1.bf16.msra.mxu0 0
    %2292 = vmatprep.subr.bf16.mxu0 0
    %2293 = vmatpush1.bf16.msra.mxu0 0
    %2294 = vmatprep.subr.bf16.mxu0 0
    %2295 = vmatpush1.bf16.msra.mxu0 0
    %2296 = vmatprep.subr.bf16.mxu0 0
    %2297 = vmatpush1.bf16.msra.mxu0 0
    %2298 = vmatprep.subr.bf16.mxu0 0
    %2299 = vmatpush1.bf16.msra.mxu0 0
    %2300 = vmatprep.subr.bf16.mxu0 0
    %2301 = vmatpush1.bf16.msra.mxu0 0
    %2302 = vmatprep.subr.bf16.mxu0 0
    %2303 = vmatpush1.bf16.msra.mxu0 0
    %2304 = vmatprep.mubr.bf16.mxu0 0
    %2305 = vmatmul.mubr.bf16.gmra.mrb[0].mxu0 %v429
    %v2306 = vpop.f32.mrb[0].mxu0
    %v2307 = vadd.f32 %v2094, %v2306
    %v2308 = vpop.f32.mrb[0].mxu0
    %v2309 = vadd.f32 %v2096, %v2308
    %v2310 = vpop.f32.mrb[0].mxu0
    %v2311 = vadd.f32 %v2098, %v2310
    %v2312 = vpop.f32.mrb[0].mxu0
    %v2313 = vadd.f32 %v2100, %v2312
    %2314 = vmatprep.mubr.bf16.mxu0 0
    %2315 = vmatmul.mubr.bf16.gmra.mrb[0].mxu0 %v432
    %v2316 = vpop.f32.mrb[0].mxu0
    %v2317 = vadd.f32 %v2104, %v2316
    %v2318 = vpop.f32.mrb[0].mxu0
    %v2319 = vadd.f32 %v2106, %v2318
    %v2320 = vpop.f32.mrb[0].mxu0
    %v2321 = vadd.f32 %v2108, %v2320
    %v2322 = vpop.f32.mrb[0].mxu0
    %v2323 = vadd.f32 %v2110, %v2322
    %2324 = vmatprep.mubr.bf16.mxu0 0
    %2325 = vmatmul.mubr.bf16.gmra.mrb[0].mxu0 %v435
    %v2326 = vpop.f32.mrb[0].mxu0
    %v2327 = vadd.f32 %v2114, %v2326
    %v2328 = vpop.f32.mrb[0].mxu0
    %v2329 = vadd.f32 %v2116, %v2328
    %v2330 = vpop.f32.mrb[0].mxu0
    %v2331 = vadd.f32 %v2118, %v2330
    %v2332 = vpop.f32.mrb[0].mxu0
    %v2333 = vadd.f32 %v2120, %v2332
    %2334 = vmatprep.mubr.bf16.mxu0 0
    %2335 = vmatmul.mubr.bf16.gmra.mrb[0].mxu0 %v438
    %v2336 = vpop.f32.mrb[0].mxu0
    %v2337 = vadd.f32 %v2124, %v2336
    %v2338 = vpop.f32.mrb[0].mxu0
    %v2339 = vadd.f32 %v2126, %v2338
    %v2340 = vpop.f32.mrb[0].mxu0
    %v2341 = vadd.f32 %v2128, %v2340
    %v2342 = vpop.f32.mrb[0].mxu0
    %v2343 = vadd.f32 %v2130, %v2342
    %2344 = vmatprep.mubr.bf16.mxu0 0
    %2345 = vmatmul.mubr.bf16.gmra.mrb[0].mxu0 %v441
    %v2346 = vpop.f32.mrb[0].mxu0
    %v2347 = vadd.f32 %v2134, %v2346
    %v2348 = vpop.f32.mrb[0].mxu0
    %v2349 = vadd.f32 %v2136, %v2348
    %v2350 = vpop.f32.mrb[0].mxu0
    %v2351 = vadd.f32 %v2138, %v2350
    %v2352 = vpop.f32.mrb[0].mxu0
    %v2353 = vadd.f32 %v2140, %v2352
    %2354 = vmatprep.mubr.bf16.mxu0 0
    %2355 = vmatmul.mubr.bf16.gmra.mrb[0].mxu0 %v444
    %v2356 = vpop.f32.mrb[0].mxu0
    %v2357 = vadd.f32 %v2144, %v2356
    %v2358 = vpop.f32.mrb[0].mxu0
    %v2359 = vadd.f32 %v2146, %v2358
    %v2360 = vpop.f32.mrb[0].mxu0
    %v2361 = vadd.f32 %v2148, %v2360
    %v2362 = vpop.f32.mrb[0].mxu0
    %v2363 = vadd.f32 %v2150, %v2362
    %2364 = vmatprep.mubr.bf16.mxu0 0
    %2365 = vmatmul.mubr.bf16.gmra.mrb[0].mxu0 %v447
    %v2366 = vpop.f32.mrb[0].mxu0
    %v2367 = vadd.f32 %v2154, %v2366
    %v2368 = vpop.f32.mrb[0].mxu0
    %v2369 = vadd.f32 %v2156, %v2368
    %v2370 = vpop.f32.mrb[0].mxu0
    %v2371 = vadd.f32 %v2158, %v2370
    %v2372 = vpop.f32.mrb[0].mxu0
    %v2373 = vadd.f32 %v2160, %v2372
    %2374 = vmatprep.mubr.bf16.mxu0 0
    %2375 = vmatmul.mubr.bf16.gmra.mrb[0].mxu0 %v450
    %v2376 = vpop.f32.mrb[0].mxu0
    %v2377 = vadd.f32 %v2164, %v2376
    %v2378 = vpop.f32.mrb[0].mxu0
    %v2379 = vadd.f32 %v2166, %v2378
    %v2380 = vpop.f32.mrb[0].mxu0
    %v2381 = vadd.f32 %v2168, %v2380
    %v2382 = vpop.f32.mrb[0].mxu0
    %v2383 = vadd.f32 %v2170, %v2382
    %2384 = vmatprep.mubr.bf16.mxu0 0
    %2385 = vmatmul.mubr.bf16.gmra.mrb[0].mxu0 %v453
    %v2386 = vpop.f32.mrb[0].mxu0
    %v2387 = vadd.f32 %v2174, %v2386
    %v2388 = vpop.f32.mrb[0].mxu0
    %v2389 = vadd.f32 %v2176, %v2388
    %v2390 = vpop.f32.mrb[0].mxu0
    %v2391 = vadd.f32 %v2178, %v2390
    %v2392 = vpop.f32.mrb[0].mxu0
    %v2393 = vadd.f32 %v2180, %v2392
    %2394 = vmatprep.mubr.bf16.mxu0 0
    %2395 = vmatmul.mubr.bf16.gmra.mrb[0].mxu0 %v456
    %v2396 = vpop.f32.mrb[0].mxu0
    %v2397 = vadd.f32 %v2184, %v2396
    %v2398 = vpop.f32.mrb[0].mxu0
    %v2399 = vadd.f32 %v2186, %v2398
    %v2400 = vpop.f32.mrb[0].mxu0
    %v2401 = vadd.f32 %v2188, %v2400
    %v2402 = vpop.f32.mrb[0].mxu0
    %v2403 = vadd.f32 %v2190, %v2402
    %2404 = vmatprep.mubr.bf16.mxu0 0
    %2405 = vmatmul.mubr.bf16.gmra.mrb[0].mxu0 %v459
    %v2406 = vpop.f32.mrb[0].mxu0
    %v2407 = vadd.f32 %v2194, %v2406
    %v2408 = vpop.f32.mrb[0].mxu0
    %v2409 = vadd.f32 %v2196, %v2408
    %v2410 = vpop.f32.mrb[0].mxu0
    %v2411 = vadd.f32 %v2198, %v2410
    %v2412 = vpop.f32.mrb[0].mxu0
    %v2413 = vadd.f32 %v2200, %v2412
    %2414 = vmatprep.mubr.bf16.mxu0 0
    %2415 = vmatmul.mubr.bf16.gmra.mrb[0].mxu0 %v462
    %v2416 = vpop.f32.mrb[0].mxu0
    %v2417 = vadd.f32 %v2204, %v2416
    %v2418 = vpop.f32.mrb[0].mxu0
    %v2419 = vadd.f32 %v2206, %v2418
    %v2420 = vpop.f32.mrb[0].mxu0
    %v2421 = vadd.f32 %v2208, %v2420
    %v2422 = vpop.f32.mrb[0].mxu0
    %v2423 = vadd.f32 %v2210, %v2422
    %2424 = vmatprep.mubr.bf16.mxu0 0
    %2425 = vmatmul.mubr.bf16.gmra.mrb[0].mxu0 %v465
    %v2426 = vpop.f32.mrb[0].mxu0
    %v2427 = vadd.f32 %v2214, %v2426
    %v2428 = vpop.f32.mrb[0].mxu0
    %v2429 = vadd.f32 %v2216, %v2428
    %v2430 = vpop.f32.mrb[0].mxu0
    %v2431 = vadd.f32 %v2218, %v2430
    %v2432 = vpop.f32.mrb[0].mxu0
    %v2433 = vadd.f32 %v2220, %v2432
    %2434 = vmatprep.mubr.bf16.mxu0 0
    %2435 = vmatmul.mubr.bf16.gmra.mrb[0].mxu0 %v468
    %v2436 = vpop.f32.mrb[0].mxu0
    %v2437 = vadd.f32 %v2224, %v2436
    %v2438 = vpop.f32.mrb[0].mxu0
    %v2439 = vadd.f32 %v2226, %v2438
    %v2440 = vpop.f32.mrb[0].mxu0
    %v2441 = vadd.f32 %v2228, %v2440
    %v2442 = vpop.f32.mrb[0].mxu0
    %v2443 = vadd.f32 %v2230, %v2442
    %2444 = vmatprep.mubr.bf16.mxu0 0
    %2445 = vmatmul.mubr.bf16.gmra.mrb[0].mxu0 %v471
    %v2446 = vpop.f32.mrb[0].mxu0
    %v2447 = vadd.f32 %v2234, %v2446
    %v2448 = vpop.f32.mrb[0].mxu0
    %v2449 = vadd.f32 %v2236, %v2448
    %v2450 = vpop.f32.mrb[0].mxu0
    %v2451 = vadd.f32 %v2238, %v2450
    %v2452 = vpop.f32.mrb[0].mxu0
    %v2453 = vadd.f32 %v2240, %v2452
    %2454 = vmatprep.mubr.bf16.mxu0 0
    %2455 = vmatmul.mubr.bf16.gmra.mrb[0].mxu0 %v474
    %v2456 = vpop.f32.mrb[0].mxu0
    %v2457 = vadd.f32 %v2244, %v2456
    %v2458 = vpop.f32.mrb[0].mxu0
    %v2459 = vadd.f32 %v2246, %v2458
    %v2460 = vpop.f32.mrb[0].mxu0
    %v2461 = vadd.f32 %v2248, %v2460
    %v2462 = vpop.f32.mrb[0].mxu0
    %v2463 = vadd.f32 %v2250, %v2462
    %2464 = vdwg.mxu0
    %s2465 = scalar_lea.vmem %s4, 4
    %v2466 = vld [vmem:[%s2465] sm:$0x3]
    %v2468 = vlaneseq
    %v2469 = vshrl.u32 %v2468, 7
    %v2470 = vsub.s32 0, %v2469
    %v2471 = vrot.slane %v2466, %v2470
    %v2472 = vlaneseq
    %v2473 = vshrl.u32 %v2472, 7
    %v2474 = vsub.s32 1, %v2473
    %v2475 = vrot.slane %v2466, %v2474
    %v2478 = vadd.f32 %v2307, %v2471
    %v2479 = vadd.f32 %v2309, %v2475
    %v2480 = vadd.f32 %v2311, %v2471
    %v2481 = vadd.f32 %v2313, %v2475
    %v2482 = vadd.f32 %v2317, %v2471
    %v2483 = vadd.f32 %v2319, %v2475
    %v2484 = vadd.f32 %v2321, %v2471
    %v2485 = vadd.f32 %v2323, %v2475
    %v2486 = vadd.f32 %v2327, %v2471
    %v2487 = vadd.f32 %v2329, %v2475
    %v2488 = vadd.f32 %v2331, %v2471
    %v2489 = vadd.f32 %v2333, %v2475
    %v2490 = vadd.f32 %v2337, %v2471
    %v2491 = vadd.f32 %v2339, %v2475
    %v2492 = vadd.f32 %v2341, %v2471
    %v2493 = vadd.f32 %v2343, %v2475
    %v2494 = vadd.f32 %v2347, %v2471
    %v2495 = vadd.f32 %v2349, %v2475
    %v2496 = vadd.f32 %v2351, %v2471
    %v2497 = vadd.f32 %v2353, %v2475
    %v2498 = vadd.f32 %v2357, %v2471
    %v2499 = vadd.f32 %v2359, %v2475
    %v2500 = vadd.f32 %v2361, %v2471
    %v2501 = vadd.f32 %v2363, %v2475
    %v2502 = vadd.f32 %v2367, %v2471
    %v2503 = vadd.f32 %v2369, %v2475
    %v2504 = vadd.f32 %v2371, %v2471
    %v2505 = vadd.f32 %v2373, %v2475
    %v2506 = vadd.f32 %v2377, %v2471
    %v2507 = vadd.f32 %v2379, %v2475
    %v2508 = vadd.f32 %v2381, %v2471
    %v2509 = vadd.f32 %v2383, %v2475
    %v2510 = vadd.f32 %v2387, %v2471
    %v2511 = vadd.f32 %v2389, %v2475
    %v2512 = vadd.f32 %v2391, %v2471
    %v2513 = vadd.f32 %v2393, %v2475
    %v2514 = vadd.f32 %v2397, %v2471
    %v2515 = vadd.f32 %v2399, %v2475
    %v2516 = vadd.f32 %v2401, %v2471
    %v2517 = vadd.f32 %v2403, %v2475
    %v2518 = vadd.f32 %v2407, %v2471
    %v2519 = vadd.f32 %v2409, %v2475
    %v2520 = vadd.f32 %v2411, %v2471
    %v2521 = vadd.f32 %v2413, %v2475
    %v2522 = vadd.f32 %v2417, %v2471
    %v2523 = vadd.f32 %v2419, %v2475
    %v2524 = vadd.f32 %v2421, %v2471
    %v2525 = vadd.f32 %v2423, %v2475
    %v2526 = vadd.f32 %v2427, %v2471
    %v2527 = vadd.f32 %v2429, %v2475
    %v2528 = vadd.f32 %v2431, %v2471
    %v2529 = vadd.f32 %v2433, %v2475
    %v2530 = vadd.f32 %v2437, %v2471
    %v2531 = vadd.f32 %v2439, %v2475
    %v2532 = vadd.f32 %v2441, %v2471
    %v2533 = vadd.f32 %v2443, %v2475
    %v2534 = vadd.f32 %v2447, %v2471
    %v2535 = vadd.f32 %v2449, %v2475
    %v2536 = vadd.f32 %v2451, %v2471
    %v2537 = vadd.f32 %v2453, %v2475
    %v2538 = vadd.f32 %v2457, %v2471
    %v2539 = vadd.f32 %v2459, %v2475
    %v2540 = vadd.f32 %v2461, %v2471
    %v2541 = vadd.f32 %v2463, %v2475
    %v2542 = vmax.f32 %v2478, 0.0
    %v2543 = vmax.f32 %v2479, 0.0
    %v2544 = vmax.f32 %v2480, 0.0
    %v2545 = vmax.f32 %v2481, 0.0
    %v2546 = vmax.f32 %v2482, 0.0
    %v2547 = vmax.f32 %v2483, 0.0
    %v2548 = vmax.f32 %v2484, 0.0
    %v2549 = vmax.f32 %v2485, 0.0
    %v2550 = vmax.f32 %v2486, 0.0
    %v2551 = vmax.f32 %v2487, 0.0
    %v2552 = vmax.f32 %v2488, 0.0
    %v2553 = vmax.f32 %v2489, 0.0
    %v2554 = vmax.f32 %v2490, 0.0
    %v2555 = vmax.f32 %v2491, 0.0
    %v2556 = vmax.f32 %v2492, 0.0
    %v2557 = vmax.f32 %v2493, 0.0
    %v2558 = vmax.f32 %v2494, 0.0
    %v2559 = vmax.f32 %v2495, 0.0
    %v2560 = vmax.f32 %v2496, 0.0
    %v2561 = vmax.f32 %v2497, 0.0
    %v2562 = vmax.f32 %v2498, 0.0
    %v2563 = vmax.f32 %v2499, 0.0
    %v2564 = vmax.f32 %v2500, 0.0
    %v2565 = vmax.f32 %v2501, 0.0
    %v2566 = vmax.f32 %v2502, 0.0
    %v2567 = vmax.f32 %v2503, 0.0
    %v2568 = vmax.f32 %v2504, 0.0
    %v2569 = vmax.f32 %v2505, 0.0
    %v2570 = vmax.f32 %v2506, 0.0
    %v2571 = vmax.f32 %v2507, 0.0
    %v2572 = vmax.f32 %v2508, 0.0
    %v2573 = vmax.f32 %v2509, 0.0
    %v2574 = vmax.f32 %v2510, 0.0
    %v2575 = vmax.f32 %v2511, 0.0
    %v2576 = vmax.f32 %v2512, 0.0
    %v2577 = vmax.f32 %v2513, 0.0
    %v2578 = vmax.f32 %v2514, 0.0
    %v2579 = vmax.f32 %v2515, 0.0
    %v2580 = vmax.f32 %v2516, 0.0
    %v2581 = vmax.f32 %v2517, 0.0
    %v2582 = vmax.f32 %v2518, 0.0
    %v2583 = vmax.f32 %v2519, 0.0
    %v2584 = vmax.f32 %v2520, 0.0
    %v2585 = vmax.f32 %v2521, 0.0
    %v2586 = vmax.f32 %v2522, 0.0
    %v2587 = vmax.f32 %v2523, 0.0
    %v2588 = vmax.f32 %v2524, 0.0
    %v2589 = vmax.f32 %v2525, 0.0
    %v2590 = vmax.f32 %v2526, 0.0
    %v2591 = vmax.f32 %v2527, 0.0
    %v2592 = vmax.f32 %v2528, 0.0
    %v2593 = vmax.f32 %v2529, 0.0
    %v2594 = vmax.f32 %v2530, 0.0
    %v2595 = vmax.f32 %v2531, 0.0
    %v2596 = vmax.f32 %v2532, 0.0
    %v2597 = vmax.f32 %v2533, 0.0
    %v2598 = vmax.f32 %v2534, 0.0
    %v2599 = vmax.f32 %v2535, 0.0
    %v2600 = vmax.f32 %v2536, 0.0
    %v2601 = vmax.f32 %v2537, 0.0
    %v2602 = vmax.f32 %v2538, 0.0
    %v2603 = vmax.f32 %v2539, 0.0
    %v2604 = vmax.f32 %v2540, 0.0
    %v2605 = vmax.f32 %v2541, 0.0
    %v2606 = vpack.c.bf16 %v2544, %v2542
    %v2607 = vpack.c.bf16 %v2545, %v2543
    %v2608 = vpack.c.bf16 %v2548, %v2546
    %v2609 = vpack.c.bf16 %v2549, %v2547
    %v2610 = vpack.c.bf16 %v2552, %v2550
    %v2611 = vpack.c.bf16 %v2553, %v2551
    %v2612 = vpack.c.bf16 %v2556, %v2554
    %v2613 = vpack.c.bf16 %v2557, %v2555
    %v2614 = vpack.c.bf16 %v2560, %v2558
    %v2615 = vpack.c.bf16 %v2561, %v2559
    %v2616 = vpack.c.bf16 %v2564, %v2562
    %v2617 = vpack.c.bf16 %v2565, %v2563
    %v2618 = vpack.c.bf16 %v2568, %v2566
    %v2619 = vpack.c.bf16 %v2569, %v2567
    %v2620 = vpack.c.bf16 %v2572, %v2570
    %v2621 = vpack.c.bf16 %v2573, %v2571
    %v2622 = vpack.c.bf16 %v2576, %v2574
    %v2623 = vpack.c.bf16 %v2577, %v2575
    %v2624 = vpack.c.bf16 %v2580, %v2578
    %v2625 = vpack.c.bf16 %v2581, %v2579
    %v2626 = vpack.c.bf16 %v2584, %v2582
    %v2627 = vpack.c.bf16 %v2585, %v2583
    %v2628 = vpack.c.bf16 %v2588, %v2586
    %v2629 = vpack.c.bf16 %v2589, %v2587
    %v2630 = vpack.c.bf16 %v2592, %v2590
    %v2631 = vpack.c.bf16 %v2593, %v2591
    %v2632 = vpack.c.bf16 %v2596, %v2594
    %v2633 = vpack.c.bf16 %v2597, %v2595
    %v2634 = vpack.c.bf16 %v2600, %v2598
    %v2635 = vpack.c.bf16 %v2601, %v2599
    %v2636 = vpack.c.bf16 %v2604, %v2602
    %v2637 = vpack.c.bf16 %v2605, %v2603
    %s2638 = scalar_lea.vmem %s5, 256
    %v2639 = vld [vmem:[%s2638] sm:$0xf]
    %v2640 = vld [vmem:[%s2638 + $0x4] sm:$0xf]
    %v2641 = vld [vmem:[%s2638 + $0x8] sm:$0xf]
    %v2642 = vld [vmem:[%s2638 + $0xc] sm:$0xf]
    %v2643 = vld [vmem:[%s2638 + $0x10] sm:$0xf]
    %v2644 = vld [vmem:[%s2638 + $0x14] sm:$0xf]
    %v2645 = vld [vmem:[%s2638 + $0x18] sm:$0xf]
    %v2646 = vld [vmem:[%s2638 + $0x1c] sm:$0xf]
    %v2647 = vld [vmem:[%s2638 + $0x20] sm:$0xf]
    %v2648 = vld [vmem:[%s2638 + $0x24] sm:$0xf]
    %v2649 = vld [vmem:[%s2638 + $0x28] sm:$0xf]
    %v2650 = vld [vmem:[%s2638 + $0x2c] sm:$0xf]
    %v2651 = vld [vmem:[%s2638 + $0x30] sm:$0xf]
    %v2652 = vld [vmem:[%s2638 + $0x34] sm:$0xf]
    %v2653 = vld [vmem:[%s2638 + $0x38] sm:$0xf]
    %v2654 = vld [vmem:[%s2638 + $0x3c] sm:$0xf]
    %v2655 = vld [vmem:[%s2638 + $0x40] sm:$0xf]
    %v2656 = vld [vmem:[%s2638 + $0x44] sm:$0xf]
    %v2657 = vld [vmem:[%s2638 + $0x48] sm:$0xf]
    %v2658 = vld [vmem:[%s2638 + $0x4c] sm:$0xf]
    %v2659 = vld [vmem:[%s2638 + $0x50] sm:$0xf]
    %v2660 = vld [vmem:[%s2638 + $0x54] sm:$0xf]
    %v2661 = vld [vmem:[%s2638 + $0x58] sm:$0xf]
    %v2662 = vld [vmem:[%s2638 + $0x5c] sm:$0xf]
    %v2663 = vld [vmem:[%s2638 + $0x60] sm:$0xf]
    %v2664 = vld [vmem:[%s2638 + $0x64] sm:$0xf]
    %v2665 = vld [vmem:[%s2638 + $0x68] sm:$0xf]
    %v2666 = vld [vmem:[%s2638 + $0x6c] sm:$0xf]
    %v2667 = vld [vmem:[%s2638 + $0x70] sm:$0xf]
    %v2668 = vld [vmem:[%s2638 + $0x74] sm:$0xf]
    %v2669 = vld [vmem:[%s2638 + $0x78] sm:$0xf]
    %v2670 = vld [vmem:[%s2638 + $0x7c] sm:$0xf]
    %v2703 = vunpack.c.l.b16 %v2639
    %v2704 = vunpack.c.l.b16 %v2640
    %v2705 = vunpack.c.l.b16 %v2641
    %v2706 = vunpack.c.l.b16 %v2642
    %v2707 = vunpack.c.l.b16 %v2643
    %v2708 = vunpack.c.l.b16 %v2644
    %v2709 = vunpack.c.l.b16 %v2645
    %v2710 = vunpack.c.l.b16 %v2646
    %v2711 = vunpack.c.l.b16 %v2647
    %v2712 = vunpack.c.l.b16 %v2648
    %v2713 = vunpack.c.l.b16 %v2649
    %v2714 = vunpack.c.l.b16 %v2650
    %v2715 = vunpack.c.l.b16 %v2651
    %v2716 = vunpack.c.l.b16 %v2652
    %v2717 = vunpack.c.l.b16 %v2653
    %v2718 = vunpack.c.l.b16 %v2654
    %v2719 = vunpack.c.l.b16 %v2655
    %v2720 = vunpack.c.l.b16 %v2656
    %v2721 = vunpack.c.l.b16 %v2657
    %v2722 = vunpack.c.l.b16 %v2658
    %v2723 = vunpack.c.l.b16 %v2659
    %v2724 = vunpack.c.l.b16 %v2660
    %v2725 = vunpack.c.l.b16 %v2661
    %v2726 = vunpack.c.l.b16 %v2662
    %v2727 = vunpack.c.l.b16 %v2663
    %v2728 = vunpack.c.l.b16 %v2664
    %v2729 = vunpack.c.l.b16 %v2665
    %v2730 = vunpack.c.l.b16 %v2666
    %v2731 = vunpack.c.l.b16 %v2667
    %v2732 = vunpack.c.l.b16 %v2668
    %v2733 = vunpack.c.l.b16 %v2669
    %v2734 = vunpack.c.l.b16 %v2670
    %v2735 = vpack.c.b16 %v2704, %v2703
    %v2736 = vpack.c.b16 %v2706, %v2705
    %v2737 = vpack.c.b16 %v2708, %v2707
    %v2738 = vpack.c.b16 %v2710, %v2709
    %v2739 = vpack.c.b16 %v2712, %v2711
    %v2740 = vpack.c.b16 %v2714, %v2713
    %v2741 = vpack.c.b16 %v2716, %v2715
    %v2742 = vpack.c.b16 %v2718, %v2717
    %v2743 = vpack.c.b16 %v2720, %v2719
    %v2744 = vpack.c.b16 %v2722, %v2721
    %v2745 = vpack.c.b16 %v2724, %v2723
    %v2746 = vpack.c.b16 %v2726, %v2725
    %v2747 = vpack.c.b16 %v2728, %v2727
    %v2748 = vpack.c.b16 %v2730, %v2729
    %v2749 = vpack.c.b16 %v2732, %v2731
    %v2750 = vpack.c.b16 %v2734, %v2733
    %2767 = vmatprep.subr.bf16.mxu0 0
    %2768 = vmatpush1.bf16.msra.mxu0 %v2735
    %2769 = vmatprep.subr.bf16.mxu0 0
    %2770 = vmatpush1.bf16.msra.mxu0 %v2736
    %2771 = vmatprep.subr.bf16.mxu0 0
    %2772 = vmatpush1.bf16.msra.mxu0 %v2737
    %2773 = vmatprep.subr.bf16.mxu0 0
    %2774 = vmatpush1.bf16.msra.mxu0 %v2738
    %2775 = vmatprep.subr.bf16.mxu0 0
    %2776 = vmatpush1.bf16.msra.mxu0 %v2739
    %2777 = vmatprep.subr.bf16.mxu0 0
    %2778 = vmatpush1.bf16.msra.mxu0 %v2740
    %2779 = vmatprep.subr.bf16.mxu0 0
    %2780 = vmatpush1.bf16.msra.mxu0 %v2741
    %2781 = vmatprep.subr.bf16.mxu0 0
    %2782 = vmatpush1.bf16.msra.mxu0 %v2742
    %2783 = vmatprep.subr.bf16.mxu0 0
    %2784 = vmatpush1.bf16.msra.mxu0 %v2743
    %2785 = vmatprep.subr.bf16.mxu0 0
    %2786 = vmatpush1.bf16.msra.mxu0 %v2744
    %2787 = vmatprep.subr.bf16.mxu0 0
    %2788 = vmatpush1.bf16.msra.mxu0 %v2745
    %2789 = vmatprep.subr.bf16.mxu0 0
    %2790 = vmatpush1.bf16.msra.mxu0 %v2746
    %2791 = vmatprep.subr.bf16.mxu0 0
    %2792 = vmatpush1.bf16.msra.mxu0 %v2747
    %2793 = vmatprep.subr.bf16.mxu0 0
    %2794 = vmatpush1.bf16.msra.mxu0 %v2748
    %2795 = vmatprep.subr.bf16.mxu0 0
    %2796 = vmatpush1.bf16.msra.mxu0 %v2749
    %2797 = vmatprep.subr.bf16.mxu0 0
    %2798 = vmatpush1.bf16.msra.mxu0 %v2750
    %2799 = vmatprep.mubr.bf16.mxu0 %v2607
    %2800 = vmatmul.mubr.bf16.gmra.mrb[0].mxu0 %v2606
    %v2801 = vpop.f32.mrb[0].mxu0
    %v2802 = vadd.f32 0.0, %v2801
    %v2803 = vpop.f32.mrb[0].mxu0
    %v2804 = vpop.f32.mrb[0].mxu0
    %v2805 = vadd.f32 0.0, %v2804
    %v2806 = vpop.f32.mrb[0].mxu0
    %2807 = vmatprep.mubr.bf16.mxu0 %v2609
    %2808 = vmatmul.mubr.bf16.gmra.mrb[0].mxu0 %v2608
    %v2809 = vpop.f32.mrb[0].mxu0
    %v2810 = vadd.f32 0.0, %v2809
    %v2811 = vpop.f32.mrb[0].mxu0
    %v2812 = vpop.f32.mrb[0].mxu0
    %v2813 = vadd.f32 0.0, %v2812
    %v2814 = vpop.f32.mrb[0].mxu0
    %2815 = vmatprep.mubr.bf16.mxu0 %v2611
    %2816 = vmatmul.mubr.bf16.gmra.mrb[0].mxu0 %v2610
    %v2817 = vpop.f32.mrb[0].mxu0
    %v2818 = vadd.f32 0.0, %v2817
    %v2819 = vpop.f32.mrb[0].mxu0
    %v2820 = vpop.f32.mrb[0].mxu0
    %v2821 = vadd.f32 0.0, %v2820
    %v2822 = vpop.f32.mrb[0].mxu0
    %2823 = vmatprep.mubr.bf16.mxu0 %v2613
    %2824 = vmatmul.mubr.bf16.gmra.mrb[0].mxu0 %v2612
    %v2825 = vpop.f32.mrb[0].mxu0
    %v2826 = vadd.f32 0.0, %v2825
    %v2827 = vpop.f32.mrb[0].mxu0
    %v2828 = vpop.f32.mrb[0].mxu0
    %v2829 = vadd.f32 0.0, %v2828
    %v2830 = vpop.f32.mrb[0].mxu0
    %2831 = vmatprep.mubr.bf16.mxu0 %v2615
    %2832 = vmatmul.mubr.bf16.gmra.mrb[0].mxu0 %v2614
    %v2833 = vpop.f32.mrb[0].mxu0
    %v2834 = vadd.f32 0.0, %v2833
    %v2835 = vpop.f32.mrb[0].mxu0
    %v2836 = vpop.f32.mrb[0].mxu0
    %v2837 = vadd.f32 0.0, %v2836
    %v2838 = vpop.f32.mrb[0].mxu0
    %2839 = vmatprep.mubr.bf16.mxu0 %v2617
    %2840 = vmatmul.mubr.bf16.gmra.mrb[0].mxu0 %v2616
    %v2841 = vpop.f32.mrb[0].mxu0
    %v2842 = vadd.f32 0.0, %v2841
    %v2843 = vpop.f32.mrb[0].mxu0
    %v2844 = vpop.f32.mrb[0].mxu0
    %v2845 = vadd.f32 0.0, %v2844
    %v2846 = vpop.f32.mrb[0].mxu0
    %2847 = vmatprep.mubr.bf16.mxu0 %v2619
    %2848 = vmatmul.mubr.bf16.gmra.mrb[0].mxu0 %v2618
    %v2849 = vpop.f32.mrb[0].mxu0
    %v2850 = vadd.f32 0.0, %v2849
    %v2851 = vpop.f32.mrb[0].mxu0
    %v2852 = vpop.f32.mrb[0].mxu0
    %v2853 = vadd.f32 0.0, %v2852
    %v2854 = vpop.f32.mrb[0].mxu0
    %2855 = vmatprep.mubr.bf16.mxu0 %v2621
    %2856 = vmatmul.mubr.bf16.gmra.mrb[0].mxu0 %v2620
    %v2857 = vpop.f32.mrb[0].mxu0
    %v2858 = vadd.f32 0.0, %v2857
    %v2859 = vpop.f32.mrb[0].mxu0
    %v2860 = vpop.f32.mrb[0].mxu0
    %v2861 = vadd.f32 0.0, %v2860
    %v2862 = vpop.f32.mrb[0].mxu0
    %2863 = vmatprep.mubr.bf16.mxu0 %v2623
    %2864 = vmatmul.mubr.bf16.gmra.mrb[0].mxu0 %v2622
    %v2865 = vpop.f32.mrb[0].mxu0
    %v2866 = vadd.f32 0.0, %v2865
    %v2867 = vpop.f32.mrb[0].mxu0
    %v2868 = vpop.f32.mrb[0].mxu0
    %v2869 = vadd.f32 0.0, %v2868
    %v2870 = vpop.f32.mrb[0].mxu0
    %2871 = vmatprep.mubr.bf16.mxu0 %v2625
    %2872 = vmatmul.mubr.bf16.gmra.mrb[0].mxu0 %v2624
    %v2873 = vpop.f32.mrb[0].mxu0
    %v2874 = vadd.f32 0.0, %v2873
    %v2875 = vpop.f32.mrb[0].mxu0
    %v2876 = vpop.f32.mrb[0].mxu0
    %v2877 = vadd.f32 0.0, %v2876
    %v2878 = vpop.f32.mrb[0].mxu0
    %2879 = vmatprep.mubr.bf16.mxu0 %v2627
    %2880 = vmatmul.mubr.bf16.gmra.mrb[0].mxu0 %v2626
    %v2881 = vpop.f32.mrb[0].mxu0
    %v2882 = vadd.f32 0.0, %v2881
    %v2883 = vpop.f32.mrb[0].mxu0
    %v2884 = vpop.f32.mrb[0].mxu0
    %v2885 = vadd.f32 0.0, %v2884
    %v2886 = vpop.f32.mrb[0].mxu0
    %2887 = vmatprep.mubr.bf16.mxu0 %v2629
    %2888 = vmatmul.mubr.bf16.gmra.mrb[0].mxu0 %v2628
    %v2889 = vpop.f32.mrb[0].mxu0
    %v2890 = vadd.f32 0.0, %v2889
    %v2891 = vpop.f32.mrb[0].mxu0
    %v2892 = vpop.f32.mrb[0].mxu0
    %v2893 = vadd.f32 0.0, %v2892
    %v2894 = vpop.f32.mrb[0].mxu0
    %2895 = vmatprep.mubr.bf16.mxu0 %v2631
    %2896 = vmatmul.mubr.bf16.gmra.mrb[0].mxu0 %v2630
    %v2897 = vpop.f32.mrb[0].mxu0
    %v2898 = vadd.f32 0.0, %v2897
    %v2899 = vpop.f32.mrb[0].mxu0
    %v2900 = vpop.f32.mrb[0].mxu0
    %v2901 = vadd.f32 0.0, %v2900
    %v2902 = vpop.f32.mrb[0].mxu0
    %2903 = vmatprep.mubr.bf16.mxu0 %v2633
    %2904 = vmatmul.mubr.bf16.gmra.mrb[0].mxu0 %v2632
    %v2905 = vpop.f32.mrb[0].mxu0
    %v2906 = vadd.f32 0.0, %v2905
    %v2907 = vpop.f32.mrb[0].mxu0
    %v2908 = vpop.f32.mrb[0].mxu0
    %v2909 = vadd.f32 0.0, %v2908
    %v2910 = vpop.f32.mrb[0].mxu0
    %2911 = vmatprep.mubr.bf16.mxu0 %v2635
    %2912 = vmatmul.mubr.bf16.gmra.mrb[0].mxu0 %v2634
    %v2913 = vpop.f32.mrb[0].mxu0
    %v2914 = vadd.f32 0.0, %v2913
    %v2915 = vpop.f32.mrb[0].mxu0
    %v2916 = vpop.f32.mrb[0].mxu0
    %v2917 = vadd.f32 0.0, %v2916
    %v2918 = vpop.f32.mrb[0].mxu0
    %2919 = vmatprep.mubr.bf16.mxu0 %v2637
    %2920 = vmatmul.mubr.bf16.gmra.mrb[0].mxu0 %v2636
    %v2921 = vpop.f32.mrb[0].mxu0
    %v2922 = vadd.f32 0.0, %v2921
    %v2923 = vpop.f32.mrb[0].mxu0
    %v2924 = vpop.f32.mrb[0].mxu0
    %v2925 = vadd.f32 0.0, %v2924
    %v2926 = vpop.f32.mrb[0].mxu0
    %2927 = vdwg.mxu0
    %v2928 = vadd.f32 %v1903, %v2802
    %v2929 = vadd.f32 %v1906, %v2805
    %v2930 = vadd.f32 %v1911, %v2810
    %v2931 = vadd.f32 %v1914, %v2813
    %v2932 = vadd.f32 %v1919, %v2818
    %v2933 = vadd.f32 %v1922, %v2821
    %v2934 = vadd.f32 %v1927, %v2826
    %v2935 = vadd.f32 %v1930, %v2829
    %v2936 = vadd.f32 %v1935, %v2834
    %v2937 = vadd.f32 %v1938, %v2837
    %v2938 = vadd.f32 %v1943, %v2842
    %v2939 = vadd.f32 %v1946, %v2845
    %v2940 = vadd.f32 %v1951, %v2850
    %v2941 = vadd.f32 %v1954, %v2853
    %v2942 = vadd.f32 %v1959, %v2858
    %v2943 = vadd.f32 %v1962, %v2861
    %v2944 = vadd.f32 %v1967, %v2866
    %v2945 = vadd.f32 %v1970, %v2869
    %v2946 = vadd.f32 %v1975, %v2874
    %v2947 = vadd.f32 %v1978, %v2877
    %v2948 = vadd.f32 %v1983, %v2882
    %v2949 = vadd.f32 %v1986, %v2885
    %v2950 = vadd.f32 %v1991, %v2890
    %v2951 = vadd.f32 %v1994, %v2893
    %v2952 = vadd.f32 %v1999, %v2898
    %v2953 = vadd.f32 %v2002, %v2901
    %v2954 = vadd.f32 %v2007, %v2906
    %v2955 = vadd.f32 %v2010, %v2909
    %v2956 = vadd.f32 %v2015, %v2914
    %v2957 = vadd.f32 %v2018, %v2917
    %v2958 = vadd.f32 %v2023, %v2922
    %v2959 = vadd.f32 %v2026, %v2925
    %s2960 = scalar_lea.vmem %s2, 24
    %v2961 = vld [vmem:[%s2960] sm:$0xff]
    %v2962 = vld [vmem:[%s2960 + $0x20] sm:$0xff]
    %v2963 = vld [vmem:[%s2960 + $0x40] sm:$0xff]
    %v2964 = vld [vmem:[%s2960 + $0x60] sm:$0xff]
    %s2965 = scalar_lea.vmem [#allocation2], 24
    %v2966 = vld [vmem:[%s2965] sm:$0xff]
    %v2967 = vld [vmem:[%s2965 + $0x20] sm:$0xff]
    %v2968 = vld [vmem:[%s2965 + $0x40] sm:$0xff]
    %v2969 = vld [vmem:[%s2965 + $0x60] sm:$0xff]
    %v2974 = vunpack.c.l.b16 %v2966
    %v2975 = vunpack.c.h.b16 %v2966
    %v2976 = vunpack.c.l.b16 %v2967
    %v2977 = vunpack.c.h.b16 %v2967
    %v2978 = vunpack.c.l.b16 %v2968
    %v2979 = vunpack.c.h.b16 %v2968
    %v2980 = vunpack.c.l.b16 %v2969
    %v2981 = vunpack.c.h.b16 %v2969
    %v2982 = vpack.c.b16 %v2976, %v2974
    %v2983 = vpack.c.b16 %v2977, %v2975
    %v2984 = vpack.c.b16 %v2980, %v2978
    %v2985 = vpack.c.b16 %v2981, %v2979
    %2990 = vmatprep.subr.bf16.mxu0 %v2983
    %2991 = vmatpush1.bf16.msra.mxu0 %v2982
    %2992 = vmatprep.subr.bf16.mxu0 %v2985
    %2993 = vmatpush1.bf16.msra.mxu0 %v2984
    %2994 = vmatprep.subr.bf16.mxu0 0
    %2995 = vmatpush1.bf16.msra.mxu0 0
    %2996 = vmatprep.subr.bf16.mxu0 0
    %2997 = vmatpush1.bf16.msra.mxu0 0
    %2998 = vmatprep.subr.bf16.mxu0 0
    %2999 = vmatpush1.bf16.msra.mxu0 0
    %3000 = vmatprep.subr.bf16.mxu0 0
    %3001 = vmatpush1.bf16.msra.mxu0 0
    %3002 = vmatprep.subr.bf16.mxu0 0
    %3003 = vmatpush1.bf16.msra.mxu0 0
    %3004 = vmatprep.subr.bf16.mxu0 0
    %3005 = vmatpush1.bf16.msra.mxu0 0
    %3006 = vmatprep.subr.bf16.mxu0 0
    %3007 = vmatpush1.bf16.msra.mxu0 0
    %3008 = vmatprep.subr.bf16.mxu0 0
    %3009 = vmatpush1.bf16.msra.mxu0 0
    %3010 = vmatprep.subr.bf16.mxu0 0
    %3011 = vmatpush1.bf16.msra.mxu0 0
    %3012 = vmatprep.subr.bf16.mxu0 0
    %3013 = vmatpush1.bf16.msra.mxu0 0
    %3014 = vmatprep.subr.bf16.mxu0 0
    %3015 = vmatpush1.bf16.msra.mxu0 0
    %3016 = vmatprep.subr.bf16.mxu0 0
    %3017 = vmatpush1.bf16.msra.mxu0 0
    %3018 = vmatprep.subr.bf16.mxu0 0
    %3019 = vmatpush1.bf16.msra.mxu0 0
    %3020 = vmatprep.subr.bf16.mxu0 0
    %3021 = vmatpush1.bf16.msra.mxu0 0
    %3022 = vmatprep.mubr.bf16.mxu0 0
    %3023 = vmatmul.mubr.bf16.gmra.mrb[0].mxu0 %v168
    %v3024 = vpop.f32.mrb[0].mxu0
    %v3025 = vadd.f32 0.0, %v3024
    %v3026 = vpop.f32.mrb[0].mxu0
    %v3027 = vadd.f32 0.0, %v3026
    %v3028 = vpop.f32.mrb[0].mxu0
    %v3029 = vadd.f32 0.0, %v3028
    %v3030 = vpop.f32.mrb[0].mxu0
    %v3031 = vadd.f32 0.0, %v3030
    %3032 = vmatprep.mubr.bf16.mxu0 0
    %3033 = vmatmul.mubr.bf16.gmra.mrb[0].mxu0 %v171
    %v3034 = vpop.f32.mrb[0].mxu0
    %v3035 = vadd.f32 0.0, %v3034
    %v3036 = vpop.f32.mrb[0].mxu0
    %v3037 = vadd.f32 0.0, %v3036
    %v3038 = vpop.f32.mrb[0].mxu0
    %v3039 = vadd.f32 0.0, %v3038
    %v3040 = vpop.f32.mrb[0].mxu0
    %v3041 = vadd.f32 0.0, %v3040
    %3042 = vmatprep.mubr.bf16.mxu0 0
    %3043 = vmatmul.mubr.bf16.gmra.mrb[0].mxu0 %v174
    %v3044 = vpop.f32.mrb[0].mxu0
    %v3045 = vadd.f32 0.0, %v3044
    %v3046 = vpop.f32.mrb[0].mxu0
    %v3047 = vadd.f32 0.0, %v3046
    %v3048 = vpop.f32.mrb[0].mxu0
    %v3049 = vadd.f32 0.0, %v3048
    %v3050 = vpop.f32.mrb[0].mxu0
    %v3051 = vadd.f32 0.0, %v3050
    %3052 = vmatprep.mubr.bf16.mxu0 0
    %3053 = vmatmul.mubr.bf16.gmra.mrb[0].mxu0 %v177
    %v3054 = vpop.f32.mrb[0].mxu0
    %v3055 = vadd.f32 0.0, %v3054
    %v3056 = vpop.f32.mrb[0].mxu0
    %v3057 = vadd.f32 0.0, %v3056
    %v3058 = vpop.f32.mrb[0].mxu0
    %v3059 = vadd.f32 0.0, %v3058
    %v3060 = vpop.f32.mrb[0].mxu0
    %v3061 = vadd.f32 0.0, %v3060
    %3062 = vmatprep.mubr.bf16.mxu0 0
    %3063 = vmatmul.mubr.bf16.gmra.mrb[0].mxu0 %v180
    %v3064 = vpop.f32.mrb[0].mxu0
    %v3065 = vadd.f32 0.0, %v3064
    %v3066 = vpop.f32.mrb[0].mxu0
    %v3067 = vadd.f32 0.0, %v3066
    %v3068 = vpop.f32.mrb[0].mxu0
    %v3069 = vadd.f32 0.0, %v3068
    %v3070 = vpop.f32.mrb[0].mxu0
    %v3071 = vadd.f32 0.0, %v3070
    %3072 = vmatprep.mubr.bf16.mxu0 0
    %3073 = vmatmul.mubr.bf16.gmra.mrb[0].mxu0 %v183
    %v3074 = vpop.f32.mrb[0].mxu0
    %v3075 = vadd.f32 0.0, %v3074
    %v3076 = vpop.f32.mrb[0].mxu0
    %v3077 = vadd.f32 0.0, %v3076
    %v3078 = vpop.f32.mrb[0].mxu0
    %v3079 = vadd.f32 0.0, %v3078
    %v3080 = vpop.f32.mrb[0].mxu0
    %v3081 = vadd.f32 0.0, %v3080
    %3082 = vmatprep.mubr.bf16.mxu0 0
    %3083 = vmatmul.mubr.bf16.gmra.mrb[0].mxu0 %v186
    %v3084 = vpop.f32.mrb[0].mxu0
    %v3085 = vadd.f32 0.0, %v3084
    %v3086 = vpop.f32.mrb[0].mxu0
    %v3087 = vadd.f32 0.0, %v3086
    %v3088 = vpop.f32.mrb[0].mxu0
    %v3089 = vadd.f32 0.0, %v3088
    %v3090 = vpop.f32.mrb[0].mxu0
    %v3091 = vadd.f32 0.0, %v3090
    %3092 = vmatprep.mubr.bf16.mxu0 0
    %3093 = vmatmul.mubr.bf16.gmra.mrb[0].mxu0 %v189
    %v3094 = vpop.f32.mrb[0].mxu0
    %v3095 = vadd.f32 0.0, %v3094
    %v3096 = vpop.f32.mrb[0].mxu0
    %v3097 = vadd.f32 0.0, %v3096
    %v3098 = vpop.f32.mrb[0].mxu0
    %v3099 = vadd.f32 0.0, %v3098
    %v3100 = vpop.f32.mrb[0].mxu0
    %v3101 = vadd.f32 0.0, %v3100
    %3102 = vmatprep.mubr.bf16.mxu0 0
    %3103 = vmatmul.mubr.bf16.gmra.mrb[0].mxu0 %v192
    %v3104 = vpop.f32.mrb[0].mxu0
    %v3105 = vadd.f32 0.0, %v3104
    %v3106 = vpop.f32.mrb[0].mxu0
    %v3107 = vadd.f32 0.0, %v3106
    %v3108 = vpop.f32.mrb[0].mxu0
    %v3109 = vadd.f32 0.0, %v3108
    %v3110 = vpop.f32.mrb[0].mxu0
    %v3111 = vadd.f32 0.0, %v3110
    %3112 = vmatprep.mubr.bf16.mxu0 0
    %3113 = vmatmul.mubr.bf16.gmra.mrb[0].mxu0 %v195
    %v3114 = vpop.f32.mrb[0].mxu0
    %v3115 = vadd.f32 0.0, %v3114
    %v3116 = vpop.f32.mrb[0].mxu0
    %v3117 = vadd.f32 0.0, %v3116
    %v3118 = vpop.f32.mrb[0].mxu0
    %v3119 = vadd.f32 0.0, %v3118
    %v3120 = vpop.f32.mrb[0].mxu0
    %v3121 = vadd.f32 0.0, %v3120
    %3122 = vmatprep.mubr.bf16.mxu0 0
    %3123 = vmatmul.mubr.bf16.gmra.mrb[0].mxu0 %v198
    %v3124 = vpop.f32.mrb[0].mxu0
    %v3125 = vadd.f32 0.0, %v3124
    %v3126 = vpop.f32.mrb[0].mxu0
    %v3127 = vadd.f32 0.0, %v3126
    %v3128 = vpop.f32.mrb[0].mxu0
    %v3129 = vadd.f32 0.0, %v3128
    %v3130 = vpop.f32.mrb[0].mxu0
    %v3131 = vadd.f32 0.0, %v3130
    %3132 = vmatprep.mubr.bf16.mxu0 0
    %3133 = vmatmul.mubr.bf16.gmra.mrb[0].mxu0 %v201
    %v3134 = vpop.f32.mrb[0].mxu0
    %v3135 = vadd.f32 0.0, %v3134
    %v3136 = vpop.f32.mrb[0].mxu0
    %v3137 = vadd.f32 0.0, %v3136
    %v3138 = vpop.f32.mrb[0].mxu0
    %v3139 = vadd.f32 0.0, %v3138
    %v3140 = vpop.f32.mrb[0].mxu0
    %v3141 = vadd.f32 0.0, %v3140
    %3142 = vmatprep.mubr.bf16.mxu0 0
    %3143 = vmatmul.mubr.bf16.gmra.mrb[0].mxu0 %v204
    %v3144 = vpop.f32.mrb[0].mxu0
    %v3145 = vadd.f32 0.0, %v3144
    %v3146 = vpop.f32.mrb[0].mxu0
    %v3147 = vadd.f32 0.0, %v3146
    %v3148 = vpop.f32.mrb[0].mxu0
    %v3149 = vadd.f32 0.0, %v3148
    %v3150 = vpop.f32.mrb[0].mxu0
    %v3151 = vadd.f32 0.0, %v3150
    %3152 = vmatprep.mubr.bf16.mxu0 0
    %3153 = vmatmul.mubr.bf16.gmra.mrb[0].mxu0 %v207
    %v3154 = vpop.f32.mrb[0].mxu0
    %v3155 = vadd.f32 0.0, %v3154
    %v3156 = vpop.f32.mrb[0].mxu0
    %v3157 = vadd.f32 0.0, %v3156
    %v3158 = vpop.f32.mrb[0].mxu0
    %v3159 = vadd.f32 0.0, %v3158
    %v3160 = vpop.f32.mrb[0].mxu0
    %v3161 = vadd.f32 0.0, %v3160
    %3162 = vmatprep.mubr.bf16.mxu0 0
    %3163 = vmatmul.mubr.bf16.gmra.mrb[0].mxu0 %v210
    %v3164 = vpop.f32.mrb[0].mxu0
    %v3165 = vadd.f32 0.0, %v3164
    %v3166 = vpop.f32.mrb[0].mxu0
    %v3167 = vadd.f32 0.0, %v3166
    %v3168 = vpop.f32.mrb[0].mxu0
    %v3169 = vadd.f32 0.0, %v3168
    %v3170 = vpop.f32.mrb[0].mxu0
    %v3171 = vadd.f32 0.0, %v3170
    %3172 = vmatprep.mubr.bf16.mxu0 0
    %3173 = vmatmul.mubr.bf16.gmra.mrb[0].mxu0 %v213
    %v3174 = vpop.f32.mrb[0].mxu0
    %v3175 = vadd.f32 0.0, %v3174
    %v3176 = vpop.f32.mrb[0].mxu0
    %v3177 = vadd.f32 0.0, %v3176
    %v3178 = vpop.f32.mrb[0].mxu0
    %v3179 = vadd.f32 0.0, %v3178
    %v3180 = vpop.f32.mrb[0].mxu0
    %v3181 = vadd.f32 0.0, %v3180
    %3182 = vdwg.mxu0
    %v3187 = vunpack.c.l.b16 %v2961
    %v3188 = vunpack.c.h.b16 %v2961
    %v3189 = vunpack.c.l.b16 %v2962
    %v3190 = vunpack.c.h.b16 %v2962
    %v3191 = vunpack.c.l.b16 %v2963
    %v3192 = vunpack.c.h.b16 %v2963
    %v3193 = vunpack.c.l.b16 %v2964
    %v3194 = vunpack.c.h.b16 %v2964
    %v3195 = vpack.c.b16 %v3189, %v3187
    %v3196 = vpack.c.b16 %v3190, %v3188
    %v3197 = vpack.c.b16 %v3193, %v3191
    %v3198 = vpack.c.b16 %v3194, %v3192
    %3203 = vmatprep.subr.bf16.mxu0 %v3196
    %3204 = vmatpush1.bf16.msra.mxu0 %v3195
    %3205 = vmatprep.subr.bf16.mxu0 %v3198
    %3206 = vmatpush1.bf16.msra.mxu0 %v3197
    %3207 = vmatprep.subr.bf16.mxu0 0
    %3208 = vmatpush1.bf16.msra.mxu0 0
    %3209 = vmatprep.subr.bf16.mxu0 0
    %3210 = vmatpush1.bf16.msra.mxu0 0
    %3211 = vmatprep.subr.bf16.mxu0 0
    %3212 = vmatpush1.bf16.msra.mxu0 0
    %3213 = vmatprep.subr.bf16.mxu0 0
    %3214 = vmatpush1.bf16.msra.mxu0 0
    %3215 = vmatprep.subr.bf16.mxu0 0
    %3216 = vmatpush1.bf16.msra.mxu0 0
    %3217 = vmatprep.subr.bf16.mxu0 0
    %3218 = vmatpush1.bf16.msra.mxu0 0
    %3219 = vmatprep.subr.bf16.mxu0 0
    %3220 = vmatpush1.bf16.msra.mxu0 0
    %3221 = vmatprep.subr.bf16.mxu0 0
    %3222 = vmatpush1.bf16.msra.mxu0 0
    %3223 = vmatprep.subr.bf16.mxu0 0
    %3224 = vmatpush1.bf16.msra.mxu0 0
    %3225 = vmatprep.subr.bf16.mxu0 0
    %3226 = vmatpush1.bf16.msra.mxu0 0
    %3227 = vmatprep.subr.bf16.mxu0 0
    %3228 = vmatpush1.bf16.msra.mxu0 0
    %3229 = vmatprep.subr.bf16.mxu0 0
    %3230 = vmatpush1.bf16.msra.mxu0 0
    %3231 = vmatprep.subr.bf16.mxu0 0
    %3232 = vmatpush1.bf16.msra.mxu0 0
    %3233 = vmatprep.subr.bf16.mxu0 0
    %3234 = vmatpush1.bf16.msra.mxu0 0
    %3235 = vmatprep.mubr.bf16.mxu0 0
    %3236 = vmatmul.mubr.bf16.gmra.mrb[0].mxu0 %v429
    %v3237 = vpop.f32.mrb[0].mxu0
    %v3238 = vadd.f32 %v3025, %v3237
    %v3239 = vpop.f32.mrb[0].mxu0
    %v3240 = vadd.f32 %v3027, %v3239
    %v3241 = vpop.f32.mrb[0].mxu0
    %v3242 = vadd.f32 %v3029, %v3241
    %v3243 = vpop.f32.mrb[0].mxu0
    %v3244 = vadd.f32 %v3031, %v3243
    %3245 = vmatprep.mubr.bf16.mxu0 0
    %3246 = vmatmul.mubr.bf16.gmra.mrb[0].mxu0 %v432
    %v3247 = vpop.f32.mrb[0].mxu0
    %v3248 = vadd.f32 %v3035, %v3247
    %v3249 = vpop.f32.mrb[0].mxu0
    %v3250 = vadd.f32 %v3037, %v3249
    %v3251 = vpop.f32.mrb[0].mxu0
    %v3252 = vadd.f32 %v3039, %v3251
    %v3253 = vpop.f32.mrb[0].mxu0
    %v3254 = vadd.f32 %v3041, %v3253
    %3255 = vmatprep.mubr.bf16.mxu0 0
    %3256 = vmatmul.mubr.bf16.gmra.mrb[0].mxu0 %v435
    %v3257 = vpop.f32.mrb[0].mxu0
    %v3258 = vadd.f32 %v3045, %v3257
    %v3259 = vpop.f32.mrb[0].mxu0
    %v3260 = vadd.f32 %v3047, %v3259
    %v3261 = vpop.f32.mrb[0].mxu0
    %v3262 = vadd.f32 %v3049, %v3261
    %v3263 = vpop.f32.mrb[0].mxu0
    %v3264 = vadd.f32 %v3051, %v3263
    %3265 = vmatprep.mubr.bf16.mxu0 0
    %3266 = vmatmul.mubr.bf16.gmra.mrb[0].mxu0 %v438
    %v3267 = vpop.f32.mrb[0].mxu0
    %v3268 = vadd.f32 %v3055, %v3267
    %v3269 = vpop.f32.mrb[0].mxu0
    %v3270 = vadd.f32 %v3057, %v3269
    %v3271 = vpop.f32.mrb[0].mxu0
    %v3272 = vadd.f32 %v3059, %v3271
    %v3273 = vpop.f32.mrb[0].mxu0
    %v3274 = vadd.f32 %v3061, %v3273
    %3275 = vmatprep.mubr.bf16.mxu0 0
    %3276 = vmatmul.mubr.bf16.gmra.mrb[0].mxu0 %v441
    %v3277 = vpop.f32.mrb[0].mxu0
    %v3278 = vadd.f32 %v3065, %v3277
    %v3279 = vpop.f32.mrb[0].mxu0
    %v3280 = vadd.f32 %v3067, %v3279
    %v3281 = vpop.f32.mrb[0].mxu0
    %v3282 = vadd.f32 %v3069, %v3281
    %v3283 = vpop.f32.mrb[0].mxu0
    %v3284 = vadd.f32 %v3071, %v3283
    %3285 = vmatprep.mubr.bf16.mxu0 0
    %3286 = vmatmul.mubr.bf16.gmra.mrb[0].mxu0 %v444
    %v3287 = vpop.f32.mrb[0].mxu0
    %v3288 = vadd.f32 %v3075, %v3287
    %v3289 = vpop.f32.mrb[0].mxu0
    %v3290 = vadd.f32 %v3077, %v3289
    %v3291 = vpop.f32.mrb[0].mxu0
    %v3292 = vadd.f32 %v3079, %v3291
    %v3293 = vpop.f32.mrb[0].mxu0
    %v3294 = vadd.f32 %v3081, %v3293
    %3295 = vmatprep.mubr.bf16.mxu0 0
    %3296 = vmatmul.mubr.bf16.gmra.mrb[0].mxu0 %v447
    %v3297 = vpop.f32.mrb[0].mxu0
    %v3298 = vadd.f32 %v3085, %v3297
    %v3299 = vpop.f32.mrb[0].mxu0
    %v3300 = vadd.f32 %v3087, %v3299
    %v3301 = vpop.f32.mrb[0].mxu0
    %v3302 = vadd.f32 %v3089, %v3301
    %v3303 = vpop.f32.mrb[0].mxu0
    %v3304 = vadd.f32 %v3091, %v3303
    %3305 = vmatprep.mubr.bf16.mxu0 0
    %3306 = vmatmul.mubr.bf16.gmra.mrb[0].mxu0 %v450
    %v3307 = vpop.f32.mrb[0].mxu0
    %v3308 = vadd.f32 %v3095, %v3307
    %v3309 = vpop.f32.mrb[0].mxu0
    %v3310 = vadd.f32 %v3097, %v3309
    %v3311 = vpop.f32.mrb[0].mxu0
    %v3312 = vadd.f32 %v3099, %v3311
    %v3313 = vpop.f32.mrb[0].mxu0
    %v3314 = vadd.f32 %v3101, %v3313
    %3315 = vmatprep.mubr.bf16.mxu0 0
    %3316 = vmatmul.mubr.bf16.gmra.mrb[0].mxu0 %v453
    %v3317 = vpop.f32.mrb[0].mxu0
    %v3318 = vadd.f32 %v3105, %v3317
    %v3319 = vpop.f32.mrb[0].mxu0
    %v3320 = vadd.f32 %v3107, %v3319
    %v3321 = vpop.f32.mrb[0].mxu0
    %v3322 = vadd.f32 %v3109, %v3321
    %v3323 = vpop.f32.mrb[0].mxu0
    %v3324 = vadd.f32 %v3111, %v3323
    %3325 = vmatprep.mubr.bf16.mxu0 0
    %3326 = vmatmul.mubr.bf16.gmra.mrb[0].mxu0 %v456
    %v3327 = vpop.f32.mrb[0].mxu0
    %v3328 = vadd.f32 %v3115, %v3327
    %v3329 = vpop.f32.mrb[0].mxu0
    %v3330 = vadd.f32 %v3117, %v3329
    %v3331 = vpop.f32.mrb[0].mxu0
    %v3332 = vadd.f32 %v3119, %v3331
    %v3333 = vpop.f32.mrb[0].mxu0
    %v3334 = vadd.f32 %v3121, %v3333
    %3335 = vmatprep.mubr.bf16.mxu0 0
    %3336 = vmatmul.mubr.bf16.gmra.mrb[0].mxu0 %v459
    %v3337 = vpop.f32.mrb[0].mxu0
    %v3338 = vadd.f32 %v3125, %v3337
    %v3339 = vpop.f32.mrb[0].mxu0
    %v3340 = vadd.f32 %v3127, %v3339
    %v3341 = vpop.f32.mrb[0].mxu0
    %v3342 = vadd.f32 %v3129, %v3341
    %v3343 = vpop.f32.mrb[0].mxu0
    %v3344 = vadd.f32 %v3131, %v3343
    %3345 = vmatprep.mubr.bf16.mxu0 0
    %3346 = vmatmul.mubr.bf16.gmra.mrb[0].mxu0 %v462
    %v3347 = vpop.f32.mrb[0].mxu0
    %v3348 = vadd.f32 %v3135, %v3347
    %v3349 = vpop.f32.mrb[0].mxu0
    %v3350 = vadd.f32 %v3137, %v3349
    %v3351 = vpop.f32.mrb[0].mxu0
    %v3352 = vadd.f32 %v3139, %v3351
    %v3353 = vpop.f32.mrb[0].mxu0
    %v3354 = vadd.f32 %v3141, %v3353
    %3355 = vmatprep.mubr.bf16.mxu0 0
    %3356 = vmatmul.mubr.bf16.gmra.mrb[0].mxu0 %v465
    %v3357 = vpop.f32.mrb[0].mxu0
    %v3358 = vadd.f32 %v3145, %v3357
    %v3359 = vpop.f32.mrb[0].mxu0
    %v3360 = vadd.f32 %v3147, %v3359
    %v3361 = vpop.f32.mrb[0].mxu0
    %v3362 = vadd.f32 %v3149, %v3361
    %v3363 = vpop.f32.mrb[0].mxu0
    %v3364 = vadd.f32 %v3151, %v3363
    %3365 = vmatprep.mubr.bf16.mxu0 0
    %3366 = vmatmul.mubr.bf16.gmra.mrb[0].mxu0 %v468
    %v3367 = vpop.f32.mrb[0].mxu0
    %v3368 = vadd.f32 %v3155, %v3367
    %v3369 = vpop.f32.mrb[0].mxu0
    %v3370 = vadd.f32 %v3157, %v3369
    %v3371 = vpop.f32.mrb[0].mxu0
    %v3372 = vadd.f32 %v3159, %v3371
    %v3373 = vpop.f32.mrb[0].mxu0
    %v3374 = vadd.f32 %v3161, %v3373
    %3375 = vmatprep.mubr.bf16.mxu0 0
    %3376 = vmatmul.mubr.bf16.gmra.mrb[0].mxu0 %v471
    %v3377 = vpop.f32.mrb[0].mxu0
    %v3378 = vadd.f32 %v3165, %v3377
    %v3379 = vpop.f32.mrb[0].mxu0
    %v3380 = vadd.f32 %v3167, %v3379
    %v3381 = vpop.f32.mrb[0].mxu0
    %v3382 = vadd.f32 %v3169, %v3381
    %v3383 = vpop.f32.mrb[0].mxu0
    %v3384 = vadd.f32 %v3171, %v3383
    %3385 = vmatprep.mubr.bf16.mxu0 0
    %3386 = vmatmul.mubr.bf16.gmra.mrb[0].mxu0 %v474
    %v3387 = vpop.f32.mrb[0].mxu0
    %v3388 = vadd.f32 %v3175, %v3387
    %v3389 = vpop.f32.mrb[0].mxu0
    %v3390 = vadd.f32 %v3177, %v3389
    %v3391 = vpop.f32.mrb[0].mxu0
    %v3392 = vadd.f32 %v3179, %v3391
    %v3393 = vpop.f32.mrb[0].mxu0
    %v3394 = vadd.f32 %v3181, %v3393
    %3395 = vdwg.mxu0
    %s3396 = scalar_lea.vmem %s4, 6
    %v3397 = vld [vmem:[%s3396] sm:$0x3]
    %v3399 = vlaneseq
    %v3400 = vshrl.u32 %v3399, 7
    %v3401 = vsub.s32 0, %v3400
    %v3402 = vrot.slane %v3397, %v3401
    %v3403 = vlaneseq
    %v3404 = vshrl.u32 %v3403, 7
    %v3405 = vsub.s32 1, %v3404
    %v3406 = vrot.slane %v3397, %v3405
    %v3409 = vadd.f32 %v3238, %v3402
    %v3410 = vadd.f32 %v3240, %v3406
    %v3411 = vadd.f32 %v3242, %v3402
    %v3412 = vadd.f32 %v3244, %v3406
    %v3413 = vadd.f32 %v3248, %v3402
    %v3414 = vadd.f32 %v3250, %v3406
    %v3415 = vadd.f32 %v3252, %v3402
    %v3416 = vadd.f32 %v3254, %v3406
    %v3417 = vadd.f32 %v3258, %v3402
    %v3418 = vadd.f32 %v3260, %v3406
    %v3419 = vadd.f32 %v3262, %v3402
    %v3420 = vadd.f32 %v3264, %v3406
    %v3421 = vadd.f32 %v3268, %v3402
    %v3422 = vadd.f32 %v3270, %v3406
    %v3423 = vadd.f32 %v3272, %v3402
    %v3424 = vadd.f32 %v3274, %v3406
    %v3425 = vadd.f32 %v3278, %v3402
    %v3426 = vadd.f32 %v3280, %v3406
    %v3427 = vadd.f32 %v3282, %v3402
    %v3428 = vadd.f32 %v3284, %v3406
    %v3429 = vadd.f32 %v3288, %v3402
    %v3430 = vadd.f32 %v3290, %v3406
    %v3431 = vadd.f32 %v3292, %v3402
    %v3432 = vadd.f32 %v3294, %v3406
    %v3433 = vadd.f32 %v3298, %v3402
    %v3434 = vadd.f32 %v3300, %v3406
    %v3435 = vadd.f32 %v3302, %v3402
    %v3436 = vadd.f32 %v3304, %v3406
    %v3437 = vadd.f32 %v3308, %v3402
    %v3438 = vadd.f32 %v3310, %v3406
    %v3439 = vadd.f32 %v3312, %v3402
    %v3440 = vadd.f32 %v3314, %v3406
    %v3441 = vadd.f32 %v3318, %v3402
    %v3442 = vadd.f32 %v3320, %v3406
    %v3443 = vadd.f32 %v3322, %v3402
    %v3444 = vadd.f32 %v3324, %v3406
    %v3445 = vadd.f32 %v3328, %v3402
    %v3446 = vadd.f32 %v3330, %v3406
    %v3447 = vadd.f32 %v3332, %v3402
    %v3448 = vadd.f32 %v3334, %v3406
    %v3449 = vadd.f32 %v3338, %v3402
    %v3450 = vadd.f32 %v3340, %v3406
    %v3451 = vadd.f32 %v3342, %v3402
    %v3452 = vadd.f32 %v3344, %v3406
    %v3453 = vadd.f32 %v3348, %v3402
    %v3454 = vadd.f32 %v3350, %v3406
    %v3455 = vadd.f32 %v3352, %v3402
    %v3456 = vadd.f32 %v3354, %v3406
    %v3457 = vadd.f32 %v3358, %v3402
    %v3458 = vadd.f32 %v3360, %v3406
    %v3459 = vadd.f32 %v3362, %v3402
    %v3460 = vadd.f32 %v3364, %v3406
    %v3461 = vadd.f32 %v3368, %v3402
    %v3462 = vadd.f32 %v3370, %v3406
    %v3463 = vadd.f32 %v3372, %v3402
    %v3464 = vadd.f32 %v3374, %v3406
    %v3465 = vadd.f32 %v3378, %v3402
    %v3466 = vadd.f32 %v3380, %v3406
    %v3467 = vadd.f32 %v3382, %v3402
    %v3468 = vadd.f32 %v3384, %v3406
    %v3469 = vadd.f32 %v3388, %v3402
    %v3470 = vadd.f32 %v3390, %v3406
    %v3471 = vadd.f32 %v3392, %v3402
    %v3472 = vadd.f32 %v3394, %v3406
    %v3473 = vmax.f32 %v3409, 0.0
    %v3474 = vmax.f32 %v3410, 0.0
    %v3475 = vmax.f32 %v3411, 0.0
    %v3476 = vmax.f32 %v3412, 0.0
    %v3477 = vmax.f32 %v3413, 0.0
    %v3478 = vmax.f32 %v3414, 0.0
    %v3479 = vmax.f32 %v3415, 0.0
    %v3480 = vmax.f32 %v3416, 0.0
    %v3481 = vmax.f32 %v3417, 0.0
    %v3482 = vmax.f32 %v3418, 0.0
    %v3483 = vmax.f32 %v3419, 0.0
    %v3484 = vmax.f32 %v3420, 0.0
    %v3485 = vmax.f32 %v3421, 0.0
    %v3486 = vmax.f32 %v3422, 0.0
    %v3487 = vmax.f32 %v3423, 0.0
    %v3488 = vmax.f32 %v3424, 0.0
    %v3489 = vmax.f32 %v3425, 0.0
    %v3490 = vmax.f32 %v3426, 0.0
    %v3491 = vmax.f32 %v3427, 0.0
    %v3492 = vmax.f32 %v3428, 0.0
    %v3493 = vmax.f32 %v3429, 0.0
    %v3494 = vmax.f32 %v3430, 0.0
    %v3495 = vmax.f32 %v3431, 0.0
    %v3496 = vmax.f32 %v3432, 0.0
    %v3497 = vmax.f32 %v3433, 0.0
    %v3498 = vmax.f32 %v3434, 0.0
    %v3499 = vmax.f32 %v3435, 0.0
    %v3500 = vmax.f32 %v3436, 0.0
    %v3501 = vmax.f32 %v3437, 0.0
    %v3502 = vmax.f32 %v3438, 0.0
    %v3503 = vmax.f32 %v3439, 0.0
    %v3504 = vmax.f32 %v3440, 0.0
    %v3505 = vmax.f32 %v3441, 0.0
    %v3506 = vmax.f32 %v3442, 0.0
    %v3507 = vmax.f32 %v3443, 0.0
    %v3508 = vmax.f32 %v3444, 0.0
    %v3509 = vmax.f32 %v3445, 0.0
    %v3510 = vmax.f32 %v3446, 0.0
    %v3511 = vmax.f32 %v3447, 0.0
    %v3512 = vmax.f32 %v3448, 0.0
    %v3513 = vmax.f32 %v3449, 0.0
    %v3514 = vmax.f32 %v3450, 0.0
    %v3515 = vmax.f32 %v3451, 0.0
    %v3516 = vmax.f32 %v3452, 0.0
    %v3517 = vmax.f32 %v3453, 0.0
    %v3518 = vmax.f32 %v3454, 0.0
    %v3519 = vmax.f32 %v3455, 0.0
    %v3520 = vmax.f32 %v3456, 0.0
    %v3521 = vmax.f32 %v3457, 0.0
    %v3522 = vmax.f32 %v3458, 0.0
    %v3523 = vmax.f32 %v3459, 0.0
    %v3524 = vmax.f32 %v3460, 0.0
    %v3525 = vmax.f32 %v3461, 0.0
    %v3526 = vmax.f32 %v3462, 0.0
    %v3527 = vmax.f32 %v3463, 0.0
    %v3528 = vmax.f32 %v3464, 0.0
    %v3529 = vmax.f32 %v3465, 0.0
    %v3530 = vmax.f32 %v3466, 0.0
    %v3531 = vmax.f32 %v3467, 0.0
    %v3532 = vmax.f32 %v3468, 0.0
    %v3533 = vmax.f32 %v3469, 0.0
    %v3534 = vmax.f32 %v3470, 0.0
    %v3535 = vmax.f32 %v3471, 0.0
    %v3536 = vmax.f32 %v3472, 0.0
    %v3537 = vpack.c.bf16 %v3475, %v3473
    %v3538 = vpack.c.bf16 %v3476, %v3474
    %v3539 = vpack.c.bf16 %v3479, %v3477
    %v3540 = vpack.c.bf16 %v3480, %v3478
    %v3541 = vpack.c.bf16 %v3483, %v3481
    %v3542 = vpack.c.bf16 %v3484, %v3482
    %v3543 = vpack.c.bf16 %v3487, %v3485
    %v3544 = vpack.c.bf16 %v3488, %v3486
    %v3545 = vpack.c.bf16 %v3491, %v3489
    %v3546 = vpack.c.bf16 %v3492, %v3490
    %v3547 = vpack.c.bf16 %v3495, %v3493
    %v3548 = vpack.c.bf16 %v3496, %v3494
    %v3549 = vpack.c.bf16 %v3499, %v3497
    %v3550 = vpack.c.bf16 %v3500, %v3498
    %v3551 = vpack.c.bf16 %v3503, %v3501
    %v3552 = vpack.c.bf16 %v3504, %v3502
    %v3553 = vpack.c.bf16 %v3507, %v3505
    %v3554 = vpack.c.bf16 %v3508, %v3506
    %v3555 = vpack.c.bf16 %v3511, %v3509
    %v3556 = vpack.c.bf16 %v3512, %v3510
    %v3557 = vpack.c.bf16 %v3515, %v3513
    %v3558 = vpack.c.bf16 %v3516, %v3514
    %v3559 = vpack.c.bf16 %v3519, %v3517
    %v3560 = vpack.c.bf16 %v3520, %v3518
    %v3561 = vpack.c.bf16 %v3523, %v3521
    %v3562 = vpack.c.bf16 %v3524, %v3522
    %v3563 = vpack.c.bf16 %v3527, %v3525
    %v3564 = vpack.c.bf16 %v3528, %v3526
    %v3565 = vpack.c.bf16 %v3531, %v3529
    %v3566 = vpack.c.bf16 %v3532, %v3530
    %v3567 = vpack.c.bf16 %v3535, %v3533
    %v3568 = vpack.c.bf16 %v3536, %v3534
    %s3569 = scalar_lea.vmem %s5, 384
    %v3570 = vld [vmem:[%s3569] sm:$0xf]
    %v3571 = vld [vmem:[%s3569 + $0x4] sm:$0xf]
    %v3572 = vld [vmem:[%s3569 + $0x8] sm:$0xf]
    %v3573 = vld [vmem:[%s3569 + $0xc] sm:$0xf]
    %v3574 = vld [vmem:[%s3569 + $0x10] sm:$0xf]
    %v3575 = vld [vmem:[%s3569 + $0x14] sm:$0xf]
    %v3576 = vld [vmem:[%s3569 + $0x18] sm:$0xf]
    %v3577 = vld [vmem:[%s3569 + $0x1c] sm:$0xf]
    %v3578 = vld [vmem:[%s3569 + $0x20] sm:$0xf]
    %v3579 = vld [vmem:[%s3569 + $0x24] sm:$0xf]
    %v3580 = vld [vmem:[%s3569 + $0x28] sm:$0xf]
    %v3581 = vld [vmem:[%s3569 + $0x2c] sm:$0xf]
    %v3582 = vld [vmem:[%s3569 + $0x30] sm:$0xf]
    %v3583 = vld [vmem:[%s3569 + $0x34] sm:$0xf]
    %v3584 = vld [vmem:[%s3569 + $0x38] sm:$0xf]
    %v3585 = vld [vmem:[%s3569 + $0x3c] sm:$0xf]
    %v3586 = vld [vmem:[%s3569 + $0x40] sm:$0xf]
    %v3587 = vld [vmem:[%s3569 + $0x44] sm:$0xf]
    %v3588 = vld [vmem:[%s3569 + $0x48] sm:$0xf]
    %v3589 = vld [vmem:[%s3569 + $0x4c] sm:$0xf]
    %v3590 = vld [vmem:[%s3569 + $0x50] sm:$0xf]
    %v3591 = vld [vmem:[%s3569 + $0x54] sm:$0xf]
    %v3592 = vld [vmem:[%s3569 + $0x58] sm:$0xf]
    %v3593 = vld [vmem:[%s3569 + $0x5c] sm:$0xf]
    %v3594 = vld [vmem:[%s3569 + $0x60] sm:$0xf]
    %v3595 = vld [vmem:[%s3569 + $0x64] sm:$0xf]
    %v3596 = vld [vmem:[%s3569 + $0x68] sm:$0xf]
    %v3597 = vld [vmem:[%s3569 + $0x6c] sm:$0xf]
    %v3598 = vld [vmem:[%s3569 + $0x70] sm:$0xf]
    %v3599 = vld [vmem:[%s3569 + $0x74] sm:$0xf]
    %v3600 = vld [vmem:[%s3569 + $0x78] sm:$0xf]
    %v3601 = vld [vmem:[%s3569 + $0x7c] sm:$0xf]
    %v3634 = vunpack.c.l.b16 %v3570
    %v3635 = vunpack.c.l.b16 %v3571
    %v3636 = vunpack.c.l.b16 %v3572
    %v3637 = vunpack.c.l.b16 %v3573
    %v3638 = vunpack.c.l.b16 %v3574
    %v3639 = vunpack.c.l.b16 %v3575
    %v3640 = vunpack.c.l.b16 %v3576
    %v3641 = vunpack.c.l.b16 %v3577
    %v3642 = vunpack.c.l.b16 %v3578
    %v3643 = vunpack.c.l.b16 %v3579
    %v3644 = vunpack.c.l.b16 %v3580
    %v3645 = vunpack.c.l.b16 %v3581
    %v3646 = vunpack.c.l.b16 %v3582
    %v3647 = vunpack.c.l.b16 %v3583
    %v3648 = vunpack.c.l.b16 %v3584
    %v3649 = vunpack.c.l.b16 %v3585
    %v3650 = vunpack.c.l.b16 %v3586
    %v3651 = vunpack.c.l.b16 %v3587
    %v3652 = vunpack.c.l.b16 %v3588
    %v3653 = vunpack.c.l.b16 %v3589
    %v3654 = vunpack.c.l.b16 %v3590
    %v3655 = vunpack.c.l.b16 %v3591
    %v3656 = vunpack.c.l.b16 %v3592
    %v3657 = vunpack.c.l.b16 %v3593
    %v3658 = vunpack.c.l.b16 %v3594
    %v3659 = vunpack.c.l.b16 %v3595
    %v3660 = vunpack.c.l.b16 %v3596
    %v3661 = vunpack.c.l.b16 %v3597
    %v3662 = vunpack.c.l.b16 %v3598
    %v3663 = vunpack.c.l.b16 %v3599
    %v3664 = vunpack.c.l.b16 %v3600
    %v3665 = vunpack.c.l.b16 %v3601
    %v3666 = vpack.c.b16 %v3635, %v3634
    %v3667 = vpack.c.b16 %v3637, %v3636
    %v3668 = vpack.c.b16 %v3639, %v3638
    %v3669 = vpack.c.b16 %v3641, %v3640
    %v3670 = vpack.c.b16 %v3643, %v3642
    %v3671 = vpack.c.b16 %v3645, %v3644
    %v3672 = vpack.c.b16 %v3647, %v3646
    %v3673 = vpack.c.b16 %v3649, %v3648
    %v3674 = vpack.c.b16 %v3651, %v3650
    %v3675 = vpack.c.b16 %v3653, %v3652
    %v3676 = vpack.c.b16 %v3655, %v3654
    %v3677 = vpack.c.b16 %v3657, %v3656
    %v3678 = vpack.c.b16 %v3659, %v3658
    %v3679 = vpack.c.b16 %v3661, %v3660
    %v3680 = vpack.c.b16 %v3663, %v3662
    %v3681 = vpack.c.b16 %v3665, %v3664
    %3698 = vmatprep.subr.bf16.mxu0 0
    %3699 = vmatpush1.bf16.msra.mxu0 %v3666
    %3700 = vmatprep.subr.bf16.mxu0 0
    %3701 = vmatpush1.bf16.msra.mxu0 %v3667
    %3702 = vmatprep.subr.bf16.mxu0 0
    %3703 = vmatpush1.bf16.msra.mxu0 %v3668
    %3704 = vmatprep.subr.bf16.mxu0 0
    %3705 = vmatpush1.bf16.msra.mxu0 %v3669
    %3706 = vmatprep.subr.bf16.mxu0 0
    %3707 = vmatpush1.bf16.msra.mxu0 %v3670
    %3708 = vmatprep.subr.bf16.mxu0 0
    %3709 = vmatpush1.bf16.msra.mxu0 %v3671
    %3710 = vmatprep.subr.bf16.mxu0 0
    %3711 = vmatpush1.bf16.msra.mxu0 %v3672
    %3712 = vmatprep.subr.bf16.mxu0 0
    %3713 = vmatpush1.bf16.msra.mxu0 %v3673
    %3714 = vmatprep.subr.bf16.mxu0 0
    %3715 = vmatpush1.bf16.msra.mxu0 %v3674
    %3716 = vmatprep.subr.bf16.mxu0 0
    %3717 = vmatpush1.bf16.msra.mxu0 %v3675
    %3718 = vmatprep.subr.bf16.mxu0 0
    %3719 = vmatpush1.bf16.msra.mxu0 %v3676
    %3720 = vmatprep.subr.bf16.mxu0 0
    %3721 = vmatpush1.bf16.msra.mxu0 %v3677
    %3722 = vmatprep.subr.bf16.mxu0 0
    %3723 = vmatpush1.bf16.msra.mxu0 %v3678
    %3724 = vmatprep.subr.bf16.mxu0 0
    %3725 = vmatpush1.bf16.msra.mxu0 %v3679
    %3726 = vmatprep.subr.bf16.mxu0 0
    %3727 = vmatpush1.bf16.msra.mxu0 %v3680
    %3728 = vmatprep.subr.bf16.mxu0 0
    %3729 = vmatpush1.bf16.msra.mxu0 %v3681
    %3730 = vmatprep.mubr.bf16.mxu0 %v3538
    %3731 = vmatmul.mubr.bf16.gmra.mrb[0].mxu0 %v3537
    %v3732 = vpop.f32.mrb[0].mxu0
    %v3733 = vadd.f32 0.0, %v3732
    %v3734 = vpop.f32.mrb[0].mxu0
    %v3735 = vpop.f32.mrb[0].mxu0
    %v3736 = vadd.f32 0.0, %v3735
    %v3737 = vpop.f32.mrb[0].mxu0
    %3738 = vmatprep.mubr.bf16.mxu0 %v3540
    %3739 = vmatmul.mubr.bf16.gmra.mrb[0].mxu0 %v3539
    %v3740 = vpop.f32.mrb[0].mxu0
    %v3741 = vadd.f32 0.0, %v3740
    %v3742 = vpop.f32.mrb[0].mxu0
    %v3743 = vpop.f32.mrb[0].mxu0
    %v3744 = vadd.f32 0.0, %v3743
    %v3745 = vpop.f32.mrb[0].mxu0
    %3746 = vmatprep.mubr.bf16.mxu0 %v3542
    %3747 = vmatmul.mubr.bf16.gmra.mrb[0].mxu0 %v3541
    %v3748 = vpop.f32.mrb[0].mxu0
    %v3749 = vadd.f32 0.0, %v3748
    %v3750 = vpop.f32.mrb[0].mxu0
    %v3751 = vpop.f32.mrb[0].mxu0
    %v3752 = vadd.f32 0.0, %v3751
    %v3753 = vpop.f32.mrb[0].mxu0
    %3754 = vmatprep.mubr.bf16.mxu0 %v3544
    %3755 = vmatmul.mubr.bf16.gmra.mrb[0].mxu0 %v3543
    %v3756 = vpop.f32.mrb[0].mxu0
    %v3757 = vadd.f32 0.0, %v3756
    %v3758 = vpop.f32.mrb[0].mxu0
    %v3759 = vpop.f32.mrb[0].mxu0
    %v3760 = vadd.f32 0.0, %v3759
    %v3761 = vpop.f32.mrb[0].mxu0
    %3762 = vmatprep.mubr.bf16.mxu0 %v3546
    %3763 = vmatmul.mubr.bf16.gmra.mrb[0].mxu0 %v3545
    %v3764 = vpop.f32.mrb[0].mxu0
    %v3765 = vadd.f32 0.0, %v3764
    %v3766 = vpop.f32.mrb[0].mxu0
    %v3767 = vpop.f32.mrb[0].mxu0
    %v3768 = vadd.f32 0.0, %v3767
    %v3769 = vpop.f32.mrb[0].mxu0
    %3770 = vmatprep.mubr.bf16.mxu0 %v3548
    %3771 = vmatmul.mubr.bf16.gmra.mrb[0].mxu0 %v3547
    %v3772 = vpop.f32.mrb[0].mxu0
    %v3773 = vadd.f32 0.0, %v3772
    %v3774 = vpop.f32.mrb[0].mxu0
    %v3775 = vpop.f32.mrb[0].mxu0
    %v3776 = vadd.f32 0.0, %v3775
    %v3777 = vpop.f32.mrb[0].mxu0
    %3778 = vmatprep.mubr.bf16.mxu0 %v3550
    %3779 = vmatmul.mubr.bf16.gmra.mrb[0].mxu0 %v3549
    %v3780 = vpop.f32.mrb[0].mxu0
    %v3781 = vadd.f32 0.0, %v3780
    %v3782 = vpop.f32.mrb[0].mxu0
    %v3783 = vpop.f32.mrb[0].mxu0
    %v3784 = vadd.f32 0.0, %v3783
    %v3785 = vpop.f32.mrb[0].mxu0
    %3786 = vmatprep.mubr.bf16.mxu0 %v3552
    %3787 = vmatmul.mubr.bf16.gmra.mrb[0].mxu0 %v3551
    %v3788 = vpop.f32.mrb[0].mxu0
    %v3789 = vadd.f32 0.0, %v3788
    %v3790 = vpop.f32.mrb[0].mxu0
    %v3791 = vpop.f32.mrb[0].mxu0
    %v3792 = vadd.f32 0.0, %v3791
    %v3793 = vpop.f32.mrb[0].mxu0
    %3794 = vmatprep.mubr.bf16.mxu0 %v3554
    %3795 = vmatmul.mubr.bf16.gmra.mrb[0].mxu0 %v3553
    %v3796 = vpop.f32.mrb[0].mxu0
    %v3797 = vadd.f32 0.0, %v3796
    %v3798 = vpop.f32.mrb[0].mxu0
    %v3799 = vpop.f32.mrb[0].mxu0
    %v3800 = vadd.f32 0.0, %v3799
    %v3801 = vpop.f32.mrb[0].mxu0
    %3802 = vmatprep.mubr.bf16.mxu0 %v3556
    %3803 = vmatmul.mubr.bf16.gmra.mrb[0].mxu0 %v3555
    %v3804 = vpop.f32.mrb[0].mxu0
    %v3805 = vadd.f32 0.0, %v3804
    %v3806 = vpop.f32.mrb[0].mxu0
    %v3807 = vpop.f32.mrb[0].mxu0
    %v3808 = vadd.f32 0.0, %v3807
    %v3809 = vpop.f32.mrb[0].mxu0
    %3810 = vmatprep.mubr.bf16.mxu0 %v3558
    %3811 = vmatmul.mubr.bf16.gmra.mrb[0].mxu0 %v3557
    %v3812 = vpop.f32.mrb[0].mxu0
    %v3813 = vadd.f32 0.0, %v3812
    %v3814 = vpop.f32.mrb[0].mxu0
    %v3815 = vpop.f32.mrb[0].mxu0
    %v3816 = vadd.f32 0.0, %v3815
    %v3817 = vpop.f32.mrb[0].mxu0
    %3818 = vmatprep.mubr.bf16.mxu0 %v3560
    %3819 = vmatmul.mubr.bf16.gmra.mrb[0].mxu0 %v3559
    %v3820 = vpop.f32.mrb[0].mxu0
    %v3821 = vadd.f32 0.0, %v3820
    %v3822 = vpop.f32.mrb[0].mxu0
    %v3823 = vpop.f32.mrb[0].mxu0
    %v3824 = vadd.f32 0.0, %v3823
    %v3825 = vpop.f32.mrb[0].mxu0
    %3826 = vmatprep.mubr.bf16.mxu0 %v3562
    %3827 = vmatmul.mubr.bf16.gmra.mrb[0].mxu0 %v3561
    %v3828 = vpop.f32.mrb[0].mxu0
    %v3829 = vadd.f32 0.0, %v3828
    %v3830 = vpop.f32.mrb[0].mxu0
    %v3831 = vpop.f32.mrb[0].mxu0
    %v3832 = vadd.f32 0.0, %v3831
    %v3833 = vpop.f32.mrb[0].mxu0
    %3834 = vmatprep.mubr.bf16.mxu0 %v3564
    %3835 = vmatmul.mubr.bf16.gmra.mrb[0].mxu0 %v3563
    %v3836 = vpop.f32.mrb[0].mxu0
    %v3837 = vadd.f32 0.0, %v3836
    %v3838 = vpop.f32.mrb[0].mxu0
    %v3839 = vpop.f32.mrb[0].mxu0
    %v3840 = vadd.f32 0.0, %v3839
    %v3841 = vpop.f32.mrb[0].mxu0
    %3842 = vmatprep.mubr.bf16.mxu0 %v3566
    %3843 = vmatmul.mubr.bf16.gmra.mrb[0].mxu0 %v3565
    %v3844 = vpop.f32.mrb[0].mxu0
    %v3845 = vadd.f32 0.0, %v3844
    %v3846 = vpop.f32.mrb[0].mxu0
    %v3847 = vpop.f32.mrb[0].mxu0
    %v3848 = vadd.f32 0.0, %v3847
    %v3849 = vpop.f32.mrb[0].mxu0
    %3850 = vmatprep.mubr.bf16.mxu0 %v3568
    %3851 = vmatmul.mubr.bf16.gmra.mrb[0].mxu0 %v3567
    %v3852 = vpop.f32.mrb[0].mxu0
    %v3853 = vadd.f32 0.0, %v3852
    %v3854 = vpop.f32.mrb[0].mxu0
    %v3855 = vpop.f32.mrb[0].mxu0
    %v3856 = vadd.f32 0.0, %v3855
    %v3857 = vpop.f32.mrb[0].mxu0
    %3858 = vdwg.mxu0
    %v3859 = vadd.f32 %v2928, %v3733
    %v3860 = vadd.f32 %v2929, %v3736
    %v3861 = vadd.f32 %v2930, %v3741
    %v3862 = vadd.f32 %v2931, %v3744
    %v3863 = vadd.f32 %v2932, %v3749
    %v3864 = vadd.f32 %v2933, %v3752
    %v3865 = vadd.f32 %v2934, %v3757
    %v3866 = vadd.f32 %v2935, %v3760
    %v3867 = vadd.f32 %v2936, %v3765
    %v3868 = vadd.f32 %v2937, %v3768
    %v3869 = vadd.f32 %v2938, %v3773
    %v3870 = vadd.f32 %v2939, %v3776
    %v3871 = vadd.f32 %v2940, %v3781
    %v3872 = vadd.f32 %v2941, %v3784
    %v3873 = vadd.f32 %v2942, %v3789
    %v3874 = vadd.f32 %v2943, %v3792
    %v3875 = vadd.f32 %v2944, %v3797
    %v3876 = vadd.f32 %v2945, %v3800
    %v3877 = vadd.f32 %v2946, %v3805
    %v3878 = vadd.f32 %v2947, %v3808
    %v3879 = vadd.f32 %v2948, %v3813
    %v3880 = vadd.f32 %v2949, %v3816
    %v3881 = vadd.f32 %v2950, %v3821
    %v3882 = vadd.f32 %v2951, %v3824
    %v3883 = vadd.f32 %v2952, %v3829
    %v3884 = vadd.f32 %v2953, %v3832
    %v3885 = vadd.f32 %v2954, %v3837
    %v3886 = vadd.f32 %v2955, %v3840
    %v3887 = vadd.f32 %v2956, %v3845
    %v3888 = vadd.f32 %v2957, %v3848
    %v3889 = vadd.f32 %v2958, %v3853
    %v3890 = vadd.f32 %v2959, %v3856
    %v3891 = vld [vmem:[%s6] sm:$0x1]
    %v3893 = vlaneseq
    %v3894 = vshrl.u32 %v3893, 7
    %v3895 = vsub.s32 0, %v3894
    %v3896 = vrot.slane %v3891, %v3895
    %v3898 = vadd.f32 %v3859, %v3896
    %v3899 = vadd.f32 %v3860, %v3896
    %v3900 = vadd.f32 %v3861, %v3896
    %v3901 = vadd.f32 %v3862, %v3896
    %v3902 = vadd.f32 %v3863, %v3896
    %v3903 = vadd.f32 %v3864, %v3896
    %v3904 = vadd.f32 %v3865, %v3896
    %v3905 = vadd.f32 %v3866, %v3896
    %v3906 = vadd.f32 %v3867, %v3896
    %v3907 = vadd.f32 %v3868, %v3896
    %v3908 = vadd.f32 %v3869, %v3896
    %v3909 = vadd.f32 %v3870, %v3896
    %v3910 = vadd.f32 %v3871, %v3896
    %v3911 = vadd.f32 %v3872, %v3896
    %v3912 = vadd.f32 %v3873, %v3896
    %v3913 = vadd.f32 %v3874, %v3896
    %v3914 = vadd.f32 %v3875, %v3896
    %v3915 = vadd.f32 %v3876, %v3896
    %v3916 = vadd.f32 %v3877, %v3896
    %v3917 = vadd.f32 %v3878, %v3896
    %v3918 = vadd.f32 %v3879, %v3896
    %v3919 = vadd.f32 %v3880, %v3896
    %v3920 = vadd.f32 %v3881, %v3896
    %v3921 = vadd.f32 %v3882, %v3896
    %v3922 = vadd.f32 %v3883, %v3896
    %v3923 = vadd.f32 %v3884, %v3896
    %v3924 = vadd.f32 %v3885, %v3896
    %v3925 = vadd.f32 %v3886, %v3896
    %v3926 = vadd.f32 %v3887, %v3896
    %v3927 = vadd.f32 %v3888, %v3896
    %v3928 = vadd.f32 %v3889, %v3896
    %v3929 = vadd.f32 %v3890, %v3896
    %3930 = vst [vmem:[#allocation5] sm:$0xff] %v3898
    %3931 = vst [vmem:[#allocation5 + $0x8] sm:$0xff] %v3899
    %3932 = vst [vmem:[#allocation5 + $0x10] sm:$0xff] %v3900
    %3933 = vst [vmem:[#allocation5 + $0x18] sm:$0xff] %v3901
    %3934 = vst [vmem:[#allocation5 + $0x20] sm:$0xff] %v3902
    %3935 = vst [vmem:[#allocation5 + $0x28] sm:$0xff] %v3903
    %3936 = vst [vmem:[#allocation5 + $0x30] sm:$0xff] %v3904
    %3937 = vst [vmem:[#allocation5 + $0x38] sm:$0xff] %v3905
    %3938 = vst [vmem:[#allocation5 + $0x40] sm:$0xff] %v3906
    %3939 = vst [vmem:[#allocation5 + $0x48] sm:$0xff] %v3907
    %3940 = vst [vmem:[#allocation5 + $0x50] sm:$0xff] %v3908
    %3941 = vst [vmem:[#allocation5 + $0x58] sm:$0xff] %v3909
    %3942 = vst [vmem:[#allocation5 + $0x60] sm:$0xff] %v3910
    %3943 = vst [vmem:[#allocation5 + $0x68] sm:$0xff] %v3911
    %3944 = vst [vmem:[#allocation5 + $0x70] sm:$0xff] %v3912
    %3945 = vst [vmem:[#allocation5 + $0x78] sm:$0xff] %v3913
    %3946 = vst [vmem:[#allocation5 + $0x80] sm:$0xff] %v3914
    %3947 = vst [vmem:[#allocation5 + $0x88] sm:$0xff] %v3915
    %3948 = vst [vmem:[#allocation5 + $0x90] sm:$0xff] %v3916
    %3949 = vst [vmem:[#allocation5 + $0x98] sm:$0xff] %v3917
    %3950 = vst [vmem:[#allocation5 + $0xa0] sm:$0xff] %v3918
    %3951 = vst [vmem:[#allocation5 + $0xa8] sm:$0xff] %v3919
    %3952 = vst [vmem:[#allocation5 + $0xb0] sm:$0xff] %v3920
    %3953 = vst [vmem:[#allocation5 + $0xb8] sm:$0xff] %v3921
    %3954 = vst [vmem:[#allocation5 + $0xc0] sm:$0xff] %v3922
    %3955 = vst [vmem:[#allocation5 + $0xc8] sm:$0xff] %v3923
    %3956 = vst [vmem:[#allocation5 + $0xd0] sm:$0xff] %v3924
    %3957 = vst [vmem:[#allocation5 + $0xd8] sm:$0xff] %v3925
    %3958 = vst [vmem:[#allocation5 + $0xe0] sm:$0xff] %v3926
    %3959 = vst [vmem:[#allocation5 + $0xe8] sm:$0xff] %v3927
    %3960 = vst [vmem:[#allocation5 + $0xf0] sm:$0xff] %v3928
    %3961 = vst [vmem:[#allocation5 + $0xf8] sm:$0xff] %v3929
    // Predicated region
    $region34: #{tpu_custom_call.1} parent=1 // pred_check
      _
    $region35: #{tpu_custom_call.1} parent=1 // pred_check_branch
      %3963 = sbr.rel (0) target = $region37
    $region36: #{tpu_custom_call.1} parent=1 // pred_region
      %s3965 = ssub.s32 4096, 4096
      %3966 = vsyncadd [#allocation4], %s3965
      %s3967 = sshll.u32 [#allocation5], 4
      %s3968 = int_to_ptr.vmem [resolvable:$true] %s3967
      %3973 = dma.vmem_to_hbm [thread:$0]  %s3968, 4096, %s7, [#allocation4], 128, 128, 8
    $region37: #{tpu_custom_call.1} parent=1 // pred_fallthru
      _
    // Predicated region
    $region38: #{tpu_custom_call.1} parent=1 // pred_check
      _
    $region39: #{tpu_custom_call.1} parent=1 // pred_check_branch
      %3975 = sbr.rel (0) target = $region41
    $region40: #{tpu_custom_call.1} parent=1 // pred_region
      %3976 = dma.done [#allocation4], 4096
    $region41: #{tpu_custom_call.1} parent=1 // pred_fallthru
      _
    %3977 = vsyncpa [#allocation3], 1
    %3978 = vsyncpa [#allocation4], 1

</llo_original>
